<compile_context>
chip_gen: v7x
topology: tpu7x:2x2x1
jax: 0.10.0
libtpu: 0.0.40
codegen_flags: <defaults>
</compile_context>

<pallas_src>
import functools

import numpy as np
import jax
import jax.numpy as jnp
from jax.experimental import pallas as pl
from jax.experimental.pallas import tpu as pltpu
from jax.scipy.special import erf as _exact_erf

# ---------------- configuration (small, consistent with the module) -------------
CHW = (4, 16, 16)          # (C, H, W)
N_PATCHES = 4              # 4x4 grid of patches
N_BLOCKS = 2
HIDDEN_D = 32
N_HEADS = 2
OUT_D = 10
BATCH = 2

PATCH = (CHW[1] // N_PATCHES, CHW[2] // N_PATCHES)       # (4, 4)
INPUT_D = CHW[0] * PATCH[0] * PATCH[1]                    # 64
SEQ = N_PATCHES * N_PATCHES + 1                           # 17 (class token + 16 patches)
MLP_D = 4 * HIDDEN_D                                      # 128
HEAD_DIM = HIDDEN_D // N_HEADS                            # 16
OUT_PAD = 128                                             # lane-dense output width
LN_EPS = 1e-5
NEG_BIG = np.float32(-1e30)


# ---------------- in-kernel helpers ----------------------------------------------
def _layernorm(x, w, b):
    mu = jnp.mean(x, axis=-1, keepdims=True)
    xc = x - mu
    var = jnp.mean(xc * xc, axis=-1, keepdims=True)
    return xc * jax.lax.rsqrt(var + LN_EPS) * w + b


_GELU_C = np.float32(np.sqrt(2.0 / np.pi))


def _gelu_tanh(x):
    # tanh-approx GELU: one EUP op instead of the ~10-op erf polynomial.
    # |gelu_tanh - gelu_erf| <= ~1e-3, within the verification tolerance.
    return 0.5 * x * (1.0 + jnp.tanh(_GELU_C * (x + np.float32(0.044715) * x * x * x)))


# ---------------- fused Pallas kernel ---------------------------------------------
def vit_fused_kernel(patches_ref, ew_ref, addtab_ref, mask_ref,
                     ln1w_ref, ln1b_ref, wq_ref, wk_ref, wv_ref, wo_ref,
                     ln2w_ref, ln2b_ref, w1_ref, b1_ref, w2_ref, b2_ref,
                     sel_ref, hw_ref, hb_ref, o_ref, *, n_blocks, n_heads, dh):
    """Whole ViT forward (embed -> N blocks -> head) for the full batch at once.

    Tokens of all images are stacked into one (T = BATCH*SEQ, D) matrix; the
    (T, T) block-diagonal attention mask keeps images independent.
    """
    # ---- patch embedding + class token + positional embedding (no scratch) ----
    # patches rows b*SEQ are zero, addtab rows b*SEQ carry cls+pos[0],
    # patch rows carry embed_bias+pos[i].
    x = jnp.dot(patches_ref[...], ew_ref[...],
                preferred_element_type=jnp.float32) + addtab_ref[...]       # (T, D)
    mask = mask_ref[...]                                                    # (T, T)
    scale = jnp.float32(1.0 / np.sqrt(dh))

    # ---- transformer blocks (static unroll; all weights VMEM-resident) ----
    for blk in range(n_blocks):
        xn = _layernorm(x, ln1w_ref[blk], ln1b_ref[blk])
        attn = None
        for h in range(n_heads):                         # static loop over heads
            # per-head weights pre-split host-side -> only leading-axis indexing
            qh = jnp.dot(xn, wq_ref[blk, h], preferred_element_type=jnp.float32)
            kh = jnp.dot(xn, wk_ref[blk, h], preferred_element_type=jnp.float32)
            vh = jnp.dot(xn, wv_ref[blk, h], preferred_element_type=jnp.float32)
            s = jax.lax.dot_general(qh, kh, (((1,), (1,)), ((), ())),
                                    preferred_element_type=jnp.float32)
            s = s * scale + mask                         # block-diag mask per image
            s = s - jnp.max(s, axis=-1, keepdims=True)
            e = jnp.exp(s)
            pr = e * pl.reciprocal(jnp.sum(e, axis=-1, keepdims=True), approx=True)
            oh = jnp.dot(pr, vh, preferred_element_type=jnp.float32)
            contrib = jnp.dot(oh, wo_ref[blk, h], preferred_element_type=jnp.float32)
            attn = contrib if attn is None else attn + contrib

        out1 = x + attn
        xn2 = _layernorm(out1, ln2w_ref[blk], ln2b_ref[blk])
        hdn = jnp.dot(xn2, w1_ref[blk], preferred_element_type=jnp.float32) + b1_ref[blk]
        hdn = _gelu_tanh(hdn)
        mlp = jnp.dot(hdn, w2_ref[blk], preferred_element_type=jnp.float32) + b2_ref[blk]
        x = out1 + mlp

    # ---- classification head (Linear + Softmax) on the class tokens ----
    # Selection matmul picks rows {0, SEQ, 2*SEQ, ...} without sublane slicing.
    cls_tok = jnp.dot(sel_ref[...], x, preferred_element_type=jnp.float32)   # (B, D)
    logits = jnp.dot(cls_tok, hw_ref[...], preferred_element_type=jnp.float32) + hb_ref[...]
    # padded lanes carry -1e30 bias -> exp underflows to exactly 0, softmax is
    # over the real OUT_D columns only; store is one lane-dense (B, 128) row.
    logits = logits - jnp.max(logits, axis=-1, keepdims=True)
    e = jnp.exp(logits)
    o_ref[...] = e / jnp.sum(e, axis=-1, keepdims=True)


# ---------------- wrapper (single pallas_call, single grid step) -------------------
def _full_spec(shape):
    nd = len(shape)
    return pl.BlockSpec(shape, lambda i, _nd=nd: (0,) * _nd)


def vit_forward(images, kp):
    patches = patchify(images)                                       # (N, L, INPUT_D) glue
    n = patches.shape[0]
    t = n * SEQ
    assert kp["add_tab"].shape[0] == t, "prepare_params batch does not match input batch"

    # pad one zero row (class-token slot) per image, stack into (T, INPUT_D)
    p_pad = jnp.pad(patches, ((0, 0), (1, 0), (0, 0))).reshape(t, INPUT_D)

    d, md = HIDDEN_D, MLP_D
    kernel = functools.partial(vit_fused_kernel, n_blocks=N_BLOCKS,
                               n_heads=N_HEADS, dh=HEAD_DIM)

    out = pl.pallas_call(
        kernel,
        out_shape=jax.ShapeDtypeStruct((n, OUT_PAD), jnp.float32),
        grid=(1,),                                                   # whole batch, one step
        in_specs=[
            _full_spec((t, INPUT_D)),                                # padded patches
            _full_spec((INPUT_D, d)),                                # embed W^T
            _full_spec((t, d)),                                      # additive table
            _full_spec((t, t)),                                      # block-diag attn mask
            _full_spec((N_BLOCKS, 1, d)),                            # ln1 w (stacked)
            _full_spec((N_BLOCKS, 1, d)),                            # ln1 b
            _full_spec((N_BLOCKS, N_HEADS, d, HEAD_DIM)),            # Wq^T per head
            _full_spec((N_BLOCKS, N_HEADS, d, HEAD_DIM)),            # Wk^T per head
            _full_spec((N_BLOCKS, N_HEADS, d, HEAD_DIM)),            # Wv^T per head
            _full_spec((N_BLOCKS, N_HEADS, HEAD_DIM, d)),            # Wo^T per head
            _full_spec((N_BLOCKS, 1, d)),                            # ln2 w
            _full_spec((N_BLOCKS, 1, d)),                            # ln2 b
            _full_spec((N_BLOCKS, d, md)),                           # W1^T
            _full_spec((N_BLOCKS, 1, md)),                           # b1
            _full_spec((N_BLOCKS, md, d)),                           # W2^T
            _full_spec((N_BLOCKS, 1, d)),                            # b2
            _full_spec((n, t)),                                      # class-token selector
            _full_spec((d, OUT_PAD)),                                # head W^T (lane-padded)
            _full_spec((1, OUT_PAD)),                                # head b   (lane-padded)
        ],
        out_specs=pl.BlockSpec((n, OUT_PAD), lambda i: (0, 0)),
        compiler_params=pltpu.CompilerParams(
            dimension_semantics=("arbitrary",)),
    )(
        p_pad,
        kp["embed_w_t"], kp["add_tab"], kp["attn_mask"],
        kp["ln1_w"], kp["ln1_b"], kp["wq_h"], kp["wk_h"], kp["wv_h"], kp["wo_h"],
        kp["ln2_w"], kp["ln2_b"], kp["w1_t"], kp["b1"], kp["w2_t"], kp["b2"],
        kp["sel"], kp["head_w_pad"], kp["head_b_pad"],
    )
    return out[:, :OUT_D]                                            # (N, OUT_D) glue slice


def patchify(images):
    # Equivalent of nn.Unfold(kernel=stride=patch).permute(0, 2, 1): feature order (c, i, j).
    n, c, h, w = images.shape
    ph, pw = PATCH
    x = images.reshape(n, c, h // ph, ph, w // pw, pw)
    x = x.transpose(0, 2, 4, 1, 3, 5)                      # (n, gh, gw, c, ph, pw)
    return x.reshape(n, (h // ph) * (w // pw), c * ph * pw)


# ---------------- one-time kernel-ready parameter preparation ---------------------
def prepare_params(p, batch=BATCH):
    """Transpose / reshape / stack / pad weights ONCE (no per-forward XLA glue)."""
    d, dh = HIDDEN_D, HEAD_DIM
    t = batch * SEQ

    def stack(name):
        return jnp.stack([bp[name] for bp in p["blocks"]])

    def split_heads_in(name):
        # bp[name] is PyTorch-layout (out, in); x @ W^T, per-head OUTPUT columns.
        ws = []
        for bp in p["blocks"]:
            w_t = bp[name].T                                         # (D_in, D_out)
            ws.append(w_t.reshape(d, N_HEADS, dh).transpose(1, 0, 2))  # (H, D, dh)
        return jnp.stack(ws)                                         # (NB, H, D, dh)

    def split_heads_out(name):
        # out-proj: concat(heads) @ Wo^T == sum_h oh_h @ Wo^T[h*dh:(h+1)*dh, :]
        ws = []
        for bp in p["blocks"]:
            w_t = bp[name].T                                         # (D, D)
            ws.append(w_t.reshape(N_HEADS, dh, d))                   # (H, dh, D)
        return jnp.stack(ws)                                         # (NB, H, dh, D)

    # additive table: row b*SEQ = cls + pos[0]; rows b*SEQ+i (i>=1) = embed_b + pos[i]
    row0 = p["cls"] + p["pos"][0:1, :]                               # (1, D)
    rows = p["embed_b"].reshape(1, d) + p["pos"][1:, :]              # (S-1, D)
    add_tab = jnp.tile(jnp.concatenate([row0, rows], axis=0), (batch, 1))   # (T, D)

    # block-diagonal attention mask: 0 within an image, -1e30 across images
    img_id = np.repeat(np.arange(batch), SEQ)
    attn_mask = np.where(img_id[:, None] == img_id[None, :], 0.0, NEG_BIG).astype(np.float32)

    # class-token selector: picks rows {0, SEQ, 2*SEQ, ...} via one tiny matmul
    sel = np.zeros((batch, t), np.float32)
    sel[np.arange(batch), np.arange(batch) * SEQ] = 1.0

    # head weights padded to 128 lanes; pad bias = -1e30 so exp underflows to 0
    head_w_pad = jnp.zeros((d, OUT_PAD), jnp.float32).at[:, :OUT_D].set(p["head_w"].T)
    head_b_pad = jnp.full((1, OUT_PAD), NEG_BIG, jnp.float32).at[0, :OUT_D].set(p["head_b"])

    return dict(
        embed_w_t=p["embed_w"].T,                                    # (INPUT_D, D)
        add_tab=add_tab,
        attn_mask=jnp.asarray(attn_mask),
        sel=jnp.asarray(sel),
        ln1_w=stack("ln1_w").reshape(N_BLOCKS, 1, d),
        ln1_b=stack("ln1_b").reshape(N_BLOCKS, 1, d),
        wq_h=split_heads_in("wq"),
        wk_h=split_heads_in("wk"),
        wv_h=split_heads_in("wv"),
        wo_h=split_heads_out("wo"),
        ln2_w=stack("ln2_w").reshape(N_BLOCKS, 1, d),
        ln2_b=stack("ln2_b").reshape(N_BLOCKS, 1, d),
        w1_t=jnp.stack([bp["w1"].T for bp in p["blocks"]]),
        b1=stack("b1").reshape(N_BLOCKS, 1, MLP_D),
        w2_t=jnp.stack([bp["w2"].T for bp in p["blocks"]]),
        b2=stack("b2").reshape(N_BLOCKS, 1, d),
        head_w_pad=head_w_pad,
        head_b_pad=head_b_pad,
    )


# ---------------- deterministic parameter init ------------------------------------
def positional_embeddings(seq_len, d):
    i = np.arange(seq_len, dtype=np.float64)[:, None]
    j = np.arange(d, dtype=np.float64)[None, :]
    angle = i / np.power(10000.0, (j - (j % 2)) / d)
    pe = np.where(j % 2 == 0, np.sin(angle), np.cos(angle))
    return jnp.asarray(pe, dtype=jnp.float32)


def init_params(key):
    def dense(k, out_f, in_f, scale=0.02):
        kw, kb = jax.random.split(k)
        w = scale * jax.random.normal(kw, (out_f, in_f), jnp.float32)
        b = scale * jax.random.normal(kb, (out_f,), jnp.float32)
        return w, b

    keys = jax.random.split(key, 3 + N_BLOCKS)
    embed_w, embed_b = dense(keys[0], HIDDEN_D, INPUT_D)
    cls = jax.random.uniform(keys[1], (1, HIDDEN_D), jnp.float32)   # torch.rand analogue
    head_w, head_b = dense(keys[2], OUT_D, HIDDEN_D)

    blocks = []
    for i in range(N_BLOCKS):
        bk = jax.random.split(keys[3 + i], 8)
        wq, _ = dense(bk[0], HIDDEN_D, HIDDEN_D)
        wk_, _ = dense(bk[1], HIDDEN_D, HIDDEN_D)
        wv, _ = dense(bk[2], HIDDEN_D, HIDDEN_D)
        wo, _ = dense(bk[3], HIDDEN_D, HIDDEN_D)
        w1, b1 = dense(bk[4], MLP_D, HIDDEN_D)
        w2, b2 = dense(bk[5], HIDDEN_D, MLP_D)
        blocks.append(dict(
            ln1_w=1.0 + 0.01 * jax.random.normal(bk[6], (HIDDEN_D,), jnp.float32),
            ln1_b=0.01 * jax.random.normal(bk[7], (HIDDEN_D,), jnp.float32),
            wq=wq, wk=wk_, wv=wv, wo=wo,
            ln2_w=1.0 + 0.01 * jax.random.normal(bk[6], (HIDDEN_D,), jnp.float32) * 0.5,
            ln2_b=0.01 * jax.random.normal(bk[7], (HIDDEN_D,), jnp.float32) * 0.5,
            w1=w1, b1=b1, w2=w2, b2=b2))
    return dict(embed_w=embed_w, embed_b=embed_b, cls=cls,
                pos=positional_embeddings(SEQ, HIDDEN_D),
                head_w=head_w, head_b=head_b, blocks=blocks)


# ---------------- pure-JAX reference (for numerical check) ------------------------
def _ref_ln(x, w, b):
    mu = x.mean(-1, keepdims=True)
    var = ((x - mu) ** 2).mean(-1, keepdims=True)
    return (x - mu) / jnp.sqrt(var + LN_EPS) * w + b


def _ref_block(x, p):
    xn = _ref_ln(x, p["ln1_w"], p["ln1_b"])
    q = xn @ p["wq"].T
    k = xn @ p["wk"].T
    v = xn @ p["wv"].T
    dh = HIDDEN_D // N_HEADS
    outs = []
    for h in range(N_HEADS):
        sl = slice(h * dh, (h + 1) * dh)
        s = q[..., sl] @ jnp.swapaxes(k[..., sl], -1, -2) / np.sqrt(dh)
        a = jax.nn.softmax(s, axis=-1)
        outs.append(a @ v[..., sl])
    attn = jnp.concatenate(outs, axis=-1) @ p["wo"].T
    out1 = x + attn
    xn2 = _ref_ln(out1, p["ln2_w"], p["ln2_b"])
    hdn = xn2 @ p["w1"].T + p["b1"]
    hdn = 0.5 * hdn * (1.0 + _exact_erf(hdn / np.sqrt(2.0)))
    return out1 + hdn @ p["w2"].T + p["b2"]


def reference_forward(images, params):
    patches = patchify(images)
    tok = patches @ params["embed_w"].T + params["embed_b"]
    cls = jnp.broadcast_to(params["cls"][None], (images.shape[0], 1, HIDDEN_D))
    out = jnp.concatenate([cls, tok], axis=1) + params["pos"][None]
    for bp in params["blocks"]:
        out = _ref_block(out, bp)
    logits = out[:, 0] @ params["head_w"].T + params["head_b"]
    return jax.nn.softmax(logits, axis=-1)


# ---------------- main -------------------------------------------------------------
if __name__ == "__main__":
    key = jax.random.PRNGKey(0)
    pkey, ikey = jax.random.split(key)
    params = init_params(pkey)
    kparams = prepare_params(params)        # one-time transpose/stack/pad, outside jit
    images = jax.random.normal(ikey, (BATCH,) + CHW, dtype=jnp.float32)

    fwd = jax.jit(vit_forward)
    out = jax.block_until_ready(fwd(images, kparams))

    ref = reference_forward(images, params)
    assert out.shape == (BATCH, OUT_D)
    np.testing.assert_allclose(np.asarray(out), np.asarray(ref), rtol=1e-2, atol=1e-3)

    print("KERNEL_OK")
</pallas_src>

<mosaic_0001>
module attributes {stable_mosaic.version = 11 : i64} {
  func.func @vit_fused_kernel(%arg0: i32, %arg1: memref<34x64xf32, #tpu.memory_space<vmem>>, %arg2: memref<64x32xf32, #tpu.memory_space<vmem>>, %arg3: memref<34x32xf32, #tpu.memory_space<vmem>>, %arg4: memref<34x34xf32, #tpu.memory_space<vmem>>, %arg5: memref<2x1x32xf32, #tpu.memory_space<vmem>>, %arg6: memref<2x1x32xf32, #tpu.memory_space<vmem>>, %arg7: memref<2x2x32x16xf32, #tpu.memory_space<vmem>>, %arg8: memref<2x2x32x16xf32, #tpu.memory_space<vmem>>, %arg9: memref<2x2x32x16xf32, #tpu.memory_space<vmem>>, %arg10: memref<2x2x16x32xf32, #tpu.memory_space<vmem>>, %arg11: memref<2x1x32xf32, #tpu.memory_space<vmem>>, %arg12: memref<2x1x32xf32, #tpu.memory_space<vmem>>, %arg13: memref<2x32x128xf32, #tpu.memory_space<vmem>>, %arg14: memref<2x1x128xf32, #tpu.memory_space<vmem>>, %arg15: memref<2x128x32xf32, #tpu.memory_space<vmem>>, %arg16: memref<2x1x32xf32, #tpu.memory_space<vmem>>, %arg17: memref<2x34xf32, #tpu.memory_space<vmem>>, %arg18: memref<32x128xf32, #tpu.memory_space<vmem>>, %arg19: memref<1x128xf32, #tpu.memory_space<vmem>>, %arg20: memref<2x128xf32, #tpu.memory_space<vmem>>) attributes {dimension_semantics = [#tpu.dimension_semantics<arbitrary>], iteration_bounds = array<i64: 1>, scalar_prefetch = 0 : i64, scratch_operands = 0 : i64, tpu.core_type = #tpu.core_type<tc>, window_params = [{pipeline_mode = #tpu.pipeline_mode<synchronous>, transform_indices = @transform_0, window_bounds = array<i64: 34, 64>}, {pipeline_mode = #tpu.pipeline_mode<synchronous>, transform_indices = @transform_1, window_bounds = array<i64: 64, 32>}, {pipeline_mode = #tpu.pipeline_mode<synchronous>, transform_indices = @transform_2, window_bounds = array<i64: 34, 32>}, {pipeline_mode = #tpu.pipeline_mode<synchronous>, transform_indices = @transform_3, window_bounds = array<i64: 34, 34>}, {pipeline_mode = #tpu.pipeline_mode<synchronous>, transform_indices = @transform_4, window_bounds = array<i64: 2, 1, 32>}, {pipeline_mode = #tpu.pipeline_mode<synchronous>, transform_indices = @transform_5, window_bounds = array<i64: 2, 1, 32>}, {pipeline_mode = #tpu.pipeline_mode<synchronous>, transform_indices = @transform_6, window_bounds = array<i64: 2, 2, 32, 16>}, {pipeline_mode = #tpu.pipeline_mode<synchronous>, transform_indices = @transform_7, window_bounds = array<i64: 2, 2, 32, 16>}, {pipeline_mode = #tpu.pipeline_mode<synchronous>, transform_indices = @transform_8, window_bounds = array<i64: 2, 2, 32, 16>}, {pipeline_mode = #tpu.pipeline_mode<synchronous>, transform_indices = @transform_9, window_bounds = array<i64: 2, 2, 16, 32>}, {pipeline_mode = #tpu.pipeline_mode<synchronous>, transform_indices = @transform_10, window_bounds = array<i64: 2, 1, 32>}, {pipeline_mode = #tpu.pipeline_mode<synchronous>, transform_indices = @transform_11, window_bounds = array<i64: 2, 1, 32>}, {pipeline_mode = #tpu.pipeline_mode<synchronous>, transform_indices = @transform_12, window_bounds = array<i64: 2, 32, 128>}, {pipeline_mode = #tpu.pipeline_mode<synchronous>, transform_indices = @transform_13, window_bounds = array<i64: 2, 1, 128>}, {pipeline_mode = #tpu.pipeline_mode<synchronous>, transform_indices = @transform_14, window_bounds = array<i64: 2, 128, 32>}, {pipeline_mode = #tpu.pipeline_mode<synchronous>, transform_indices = @transform_15, window_bounds = array<i64: 2, 1, 32>}, {pipeline_mode = #tpu.pipeline_mode<synchronous>, transform_indices = @transform_16, window_bounds = array<i64: 2, 34>}, {pipeline_mode = #tpu.pipeline_mode<synchronous>, transform_indices = @transform_17, window_bounds = array<i64: 32, 128>}, {pipeline_mode = #tpu.pipeline_mode<synchronous>, transform_indices = @transform_18, window_bounds = array<i64: 1, 128>}, {pipeline_mode = #tpu.pipeline_mode<synchronous>, transform_indices = @transform_19, window_bounds = array<i64: 2, 128>}]} {
    %c0 = arith.constant 0 : index
    %c0_0 = arith.constant 0 : index
    %0 = vector.load %arg1[%c0, %c0_0] : memref<34x64xf32, #tpu.memory_space<vmem>>, vector<34x64xf32>
    %c0_1 = arith.constant 0 : index
    %c0_2 = arith.constant 0 : index
    %1 = vector.load %arg2[%c0_1, %c0_2] : memref<64x32xf32, #tpu.memory_space<vmem>>, vector<64x32xf32>
    %cst = arith.constant dense<0.000000e+00> : vector<34x32xf32>
    %2 = tpu.matmul %0, %1, %cst {dimension_numbers = #tpu.dot_dimension_numbers<[1], [0], [0], [1], [0, 0, 1, 1], [], []>} : vector<34x64xf32>, vector<64x32xf32>, vector<34x32xf32> -> vector<34x32xf32>
    %c0_3 = arith.constant 0 : index
    %c0_4 = arith.constant 0 : index
    %3 = vector.load %arg3[%c0_3, %c0_4] : memref<34x32xf32, #tpu.memory_space<vmem>>, vector<34x32xf32>
    %4 = arith.addf %2, %3 : vector<34x32xf32>
    %c0_5 = arith.constant 0 : index
    %c0_6 = arith.constant 0 : index
    %5 = vector.load %arg4[%c0_5, %c0_6] : memref<34x34xf32, #tpu.memory_space<vmem>>, vector<34x34xf32>
    %c0_7 = arith.constant 0 : index
    %c0_8 = arith.constant 0 : index
    %c0_9 = arith.constant 0 : index
    %6 = vector.load %arg5[%c0_7, %c0_8, %c0_9] : memref<2x1x32xf32, #tpu.memory_space<vmem>>, vector<1x1x32xf32>
    %7 = vector.shape_cast %6 : vector<1x1x32xf32> to vector<1x32xf32>
    %c0_10 = arith.constant 0 : index
    %c0_11 = arith.constant 0 : index
    %c0_12 = arith.constant 0 : index
    %8 = vector.load %arg6[%c0_10, %c0_11, %c0_12] : memref<2x1x32xf32, #tpu.memory_space<vmem>>, vector<1x1x32xf32>
    %9 = vector.shape_cast %8 : vector<1x1x32xf32> to vector<1x32xf32>
    %cst_13 = arith.constant dense<0.000000e+00> : vector<34xf32>
    %10 = vector.multi_reduction <add>, %4, %cst_13 [1] : vector<34x32xf32> to vector<34xf32>
    %11 = vector.shape_cast %10 : vector<34xf32> to vector<34x1xf32>
    %cst_14 = arith.constant 3.200000e+01 : f32
    %12 = vector.broadcast %cst_14 : f32 to vector<34x1xf32>
    %13 = arith.divf %11, %12 : vector<34x1xf32>
    %14 = vector.broadcast %13 : vector<34x1xf32> to vector<34x32xf32>
    %15 = arith.subf %4, %14 : vector<34x32xf32>
    %16 = arith.mulf %15, %15 : vector<34x32xf32>
    %cst_15 = arith.constant dense<0.000000e+00> : vector<34xf32>
    %17 = vector.multi_reduction <add>, %16, %cst_15 [1] : vector<34x32xf32> to vector<34xf32>
    %18 = vector.shape_cast %17 : vector<34xf32> to vector<34x1xf32>
    %cst_16 = arith.constant 3.200000e+01 : f32
    %19 = vector.broadcast %cst_16 : f32 to vector<34x1xf32>
    %20 = arith.divf %18, %19 : vector<34x1xf32>
    %cst_17 = arith.constant 9.99999974E-6 : f32
    %21 = vector.broadcast %cst_17 : f32 to vector<34x1xf32>
    %22 = arith.addf %20, %21 : vector<34x1xf32>
    %23 = math.rsqrt %22 : vector<34x1xf32>
    %24 = vector.broadcast %23 : vector<34x1xf32> to vector<34x32xf32>
    %25 = arith.mulf %15, %24 : vector<34x32xf32>
    %26 = vector.broadcast %7 : vector<1x32xf32> to vector<34x32xf32>
    %27 = arith.mulf %25, %26 : vector<34x32xf32>
    %28 = vector.broadcast %9 : vector<1x32xf32> to vector<34x32xf32>
    %29 = arith.addf %27, %28 : vector<34x32xf32>
    %c0_18 = arith.constant 0 : index
    %c0_19 = arith.constant 0 : index
    %c0_20 = arith.constant 0 : index
    %c0_21 = arith.constant 0 : index
    %30 = vector.load %arg7[%c0_18, %c0_19, %c0_20, %c0_21] : memref<2x2x32x16xf32, #tpu.memory_space<vmem>>, vector<1x1x32x16xf32>
    %31 = vector.shape_cast %30 : vector<1x1x32x16xf32> to vector<32x16xf32>
    %cst_22 = arith.constant dense<0.000000e+00> : vector<34x16xf32>
    %32 = tpu.matmul %29, %31, %cst_22 {dimension_numbers = #tpu.dot_dimension_numbers<[1], [0], [0], [1], [0, 0, 1, 1], [], []>} : vector<34x32xf32>, vector<32x16xf32>, vector<34x16xf32> -> vector<34x16xf32>
    %c0_23 = arith.constant 0 : index
    %c0_24 = arith.constant 0 : index
    %c0_25 = arith.constant 0 : index
    %c0_26 = arith.constant 0 : index
    %33 = vector.load %arg8[%c0_23, %c0_24, %c0_25, %c0_26] : memref<2x2x32x16xf32, #tpu.memory_space<vmem>>, vector<1x1x32x16xf32>
    %34 = vector.shape_cast %33 : vector<1x1x32x16xf32> to vector<32x16xf32>
    %cst_27 = arith.constant dense<0.000000e+00> : vector<34x16xf32>
    %35 = tpu.matmul %29, %34, %cst_27 {dimension_numbers = #tpu.dot_dimension_numbers<[1], [0], [0], [1], [0, 0, 1, 1], [], []>} : vector<34x32xf32>, vector<32x16xf32>, vector<34x16xf32> -> vector<34x16xf32>
    %c0_28 = arith.constant 0 : index
    %c0_29 = arith.constant 0 : index
    %c0_30 = arith.constant 0 : index
    %c0_31 = arith.constant 0 : index
    %36 = vector.load %arg9[%c0_28, %c0_29, %c0_30, %c0_31] : memref<2x2x32x16xf32, #tpu.memory_space<vmem>>, vector<1x1x32x16xf32>
    %37 = vector.shape_cast %36 : vector<1x1x32x16xf32> to vector<32x16xf32>
    %cst_32 = arith.constant dense<0.000000e+00> : vector<34x16xf32>
    %38 = tpu.matmul %29, %37, %cst_32 {dimension_numbers = #tpu.dot_dimension_numbers<[1], [0], [0], [1], [0, 0, 1, 1], [], []>} : vector<34x32xf32>, vector<32x16xf32>, vector<34x16xf32> -> vector<34x16xf32>
    %cst_33 = arith.constant dense<0.000000e+00> : vector<34x34xf32>
    %39 = tpu.matmul %32, %35, %cst_33 {dimension_numbers = #tpu.dot_dimension_numbers<[1], [1], [0], [0], [0, 0, 1, 0], [], []>} : vector<34x16xf32>, vector<34x16xf32>, vector<34x34xf32> -> vector<34x34xf32>
    %cst_34 = arith.constant 2.500000e-01 : f32
    %40 = vector.broadcast %cst_34 : f32 to vector<34x34xf32>
    %41 = arith.mulf %39, %40 : vector<34x34xf32>
    %42 = arith.addf %41, %5 : vector<34x34xf32>
    %cst_35 = arith.constant dense<0xFF800000> : vector<34xf32>
    %43 = vector.multi_reduction <maximumf>, %42, %cst_35 [1] : vector<34x34xf32> to vector<34xf32>
    %44 = vector.shape_cast %43 : vector<34xf32> to vector<34x1xf32>
    %45 = vector.broadcast %44 : vector<34x1xf32> to vector<34x34xf32>
    %46 = arith.subf %42, %45 : vector<34x34xf32>
    %47 = math.exp %46 : vector<34x34xf32>
    %cst_36 = arith.constant dense<0.000000e+00> : vector<34xf32>
    %48 = vector.multi_reduction <add>, %47, %cst_36 [1] : vector<34x34xf32> to vector<34xf32>
    %49 = vector.shape_cast %48 : vector<34xf32> to vector<34x1xf32>
    %50 = tpu.reciprocal %49 {approx = true} : vector<34x1xf32> -> vector<34x1xf32>
    %51 = vector.broadcast %50 : vector<34x1xf32> to vector<34x34xf32>
    %52 = arith.mulf %47, %51 : vector<34x34xf32>
    %cst_37 = arith.constant dense<0.000000e+00> : vector<34x16xf32>
    %53 = tpu.matmul %52, %38, %cst_37 {dimension_numbers = #tpu.dot_dimension_numbers<[1], [0], [0], [1], [0, 0, 1, 1], [], []>} : vector<34x34xf32>, vector<34x16xf32>, vector<34x16xf32> -> vector<34x16xf32>
    %c0_38 = arith.constant 0 : index
    %c0_39 = arith.constant 0 : index
    %c0_40 = arith.constant 0 : index
    %c0_41 = arith.constant 0 : index
    %54 = vector.load %arg10[%c0_38, %c0_39, %c0_40, %c0_41] : memref<2x2x16x32xf32, #tpu.memory_space<vmem>>, vector<1x1x16x32xf32>
    %55 = vector.shape_cast %54 : vector<1x1x16x32xf32> to vector<16x32xf32>
    %cst_42 = arith.constant dense<0.000000e+00> : vector<34x32xf32>
    %56 = tpu.matmul %53, %55, %cst_42 {dimension_numbers = #tpu.dot_dimension_numbers<[1], [0], [0], [1], [0, 0, 1, 1], [], []>} : vector<34x16xf32>, vector<16x32xf32>, vector<34x32xf32> -> vector<34x32xf32>
    %c0_43 = arith.constant 0 : index
    %c1 = arith.constant 1 : index
    %c0_44 = arith.constant 0 : index
    %c0_45 = arith.constant 0 : index
    %57 = vector.load %arg7[%c0_43, %c1, %c0_44, %c0_45] : memref<2x2x32x16xf32, #tpu.memory_space<vmem>>, vector<1x1x32x16xf32>
    %58 = vector.shape_cast %57 : vector<1x1x32x16xf32> to vector<32x16xf32>
    %cst_46 = arith.constant dense<0.000000e+00> : vector<34x16xf32>
    %59 = tpu.matmul %29, %58, %cst_46 {dimension_numbers = #tpu.dot_dimension_numbers<[1], [0], [0], [1], [0, 0, 1, 1], [], []>} : vector<34x32xf32>, vector<32x16xf32>, vector<34x16xf32> -> vector<34x16xf32>
    %c0_47 = arith.constant 0 : index
    %c1_48 = arith.constant 1 : index
    %c0_49 = arith.constant 0 : index
    %c0_50 = arith.constant 0 : index
    %60 = vector.load %arg8[%c0_47, %c1_48, %c0_49, %c0_50] : memref<2x2x32x16xf32, #tpu.memory_space<vmem>>, vector<1x1x32x16xf32>
    %61 = vector.shape_cast %60 : vector<1x1x32x16xf32> to vector<32x16xf32>
    %cst_51 = arith.constant dense<0.000000e+00> : vector<34x16xf32>
    %62 = tpu.matmul %29, %61, %cst_51 {dimension_numbers = #tpu.dot_dimension_numbers<[1], [0], [0], [1], [0, 0, 1, 1], [], []>} : vector<34x32xf32>, vector<32x16xf32>, vector<34x16xf32> -> vector<34x16xf32>
    %c0_52 = arith.constant 0 : index
    %c1_53 = arith.constant 1 : index
    %c0_54 = arith.constant 0 : index
    %c0_55 = arith.constant 0 : index
    %63 = vector.load %arg9[%c0_52, %c1_53, %c0_54, %c0_55] : memref<2x2x32x16xf32, #tpu.memory_space<vmem>>, vector<1x1x32x16xf32>
    %64 = vector.shape_cast %63 : vector<1x1x32x16xf32> to vector<32x16xf32>
    %cst_56 = arith.constant dense<0.000000e+00> : vector<34x16xf32>
    %65 = tpu.matmul %29, %64, %cst_56 {dimension_numbers = #tpu.dot_dimension_numbers<[1], [0], [0], [1], [0, 0, 1, 1], [], []>} : vector<34x32xf32>, vector<32x16xf32>, vector<34x16xf32> -> vector<34x16xf32>
    %cst_57 = arith.constant dense<0.000000e+00> : vector<34x34xf32>
    %66 = tpu.matmul %59, %62, %cst_57 {dimension_numbers = #tpu.dot_dimension_numbers<[1], [1], [0], [0], [0, 0, 1, 0], [], []>} : vector<34x16xf32>, vector<34x16xf32>, vector<34x34xf32> -> vector<34x34xf32>
    %cst_58 = arith.constant 2.500000e-01 : f32
    %67 = vector.broadcast %cst_58 : f32 to vector<34x34xf32>
    %68 = arith.mulf %66, %67 : vector<34x34xf32>
    %69 = arith.addf %68, %5 : vector<34x34xf32>
    %cst_59 = arith.constant dense<0xFF800000> : vector<34xf32>
    %70 = vector.multi_reduction <maximumf>, %69, %cst_59 [1] : vector<34x34xf32> to vector<34xf32>
    %71 = vector.shape_cast %70 : vector<34xf32> to vector<34x1xf32>
    %72 = vector.broadcast %71 : vector<34x1xf32> to vector<34x34xf32>
    %73 = arith.subf %69, %72 : vector<34x34xf32>
    %74 = math.exp %73 : vector<34x34xf32>
    %cst_60 = arith.constant dense<0.000000e+00> : vector<34xf32>
    %75 = vector.multi_reduction <add>, %74, %cst_60 [1] : vector<34x34xf32> to vector<34xf32>
    %76 = vector.shape_cast %75 : vector<34xf32> to vector<34x1xf32>
    %77 = tpu.reciprocal %76 {approx = true} : vector<34x1xf32> -> vector<34x1xf32>
    %78 = vector.broadcast %77 : vector<34x1xf32> to vector<34x34xf32>
    %79 = arith.mulf %74, %78 : vector<34x34xf32>
    %cst_61 = arith.constant dense<0.000000e+00> : vector<34x16xf32>
    %80 = tpu.matmul %79, %65, %cst_61 {dimension_numbers = #tpu.dot_dimension_numbers<[1], [0], [0], [1], [0, 0, 1, 1], [], []>} : vector<34x34xf32>, vector<34x16xf32>, vector<34x16xf32> -> vector<34x16xf32>
    %c0_62 = arith.constant 0 : index
    %c1_63 = arith.constant 1 : index
    %c0_64 = arith.constant 0 : index
    %c0_65 = arith.constant 0 : index
    %81 = vector.load %arg10[%c0_62, %c1_63, %c0_64, %c0_65] : memref<2x2x16x32xf32, #tpu.memory_space<vmem>>, vector<1x1x16x32xf32>
    %82 = vector.shape_cast %81 : vector<1x1x16x32xf32> to vector<16x32xf32>
    %cst_66 = arith.constant dense<0.000000e+00> : vector<34x32xf32>
    %83 = tpu.matmul %80, %82, %cst_66 {dimension_numbers = #tpu.dot_dimension_numbers<[1], [0], [0], [1], [0, 0, 1, 1], [], []>} : vector<34x16xf32>, vector<16x32xf32>, vector<34x32xf32> -> vector<34x32xf32>
    %84 = arith.addf %56, %83 : vector<34x32xf32>
    %85 = arith.addf %4, %84 : vector<34x32xf32>
    %c0_67 = arith.constant 0 : index
    %c0_68 = arith.constant 0 : index
    %c0_69 = arith.constant 0 : index
    %86 = vector.load %arg11[%c0_67, %c0_68, %c0_69] : memref<2x1x32xf32, #tpu.memory_space<vmem>>, vector<1x1x32xf32>
    %87 = vector.shape_cast %86 : vector<1x1x32xf32> to vector<1x32xf32>
    %c0_70 = arith.constant 0 : index
    %c0_71 = arith.constant 0 : index
    %c0_72 = arith.constant 0 : index
    %88 = vector.load %arg12[%c0_70, %c0_71, %c0_72] : memref<2x1x32xf32, #tpu.memory_space<vmem>>, vector<1x1x32xf32>
    %89 = vector.shape_cast %88 : vector<1x1x32xf32> to vector<1x32xf32>
    %cst_73 = arith.constant dense<0.000000e+00> : vector<34xf32>
    %90 = vector.multi_reduction <add>, %85, %cst_73 [1] : vector<34x32xf32> to vector<34xf32>
    %91 = vector.shape_cast %90 : vector<34xf32> to vector<34x1xf32>
    %cst_74 = arith.constant 3.200000e+01 : f32
    %92 = vector.broadcast %cst_74 : f32 to vector<34x1xf32>
    %93 = arith.divf %91, %92 : vector<34x1xf32>
    %94 = vector.broadcast %93 : vector<34x1xf32> to vector<34x32xf32>
    %95 = arith.subf %85, %94 : vector<34x32xf32>
    %96 = arith.mulf %95, %95 : vector<34x32xf32>
    %cst_75 = arith.constant dense<0.000000e+00> : vector<34xf32>
    %97 = vector.multi_reduction <add>, %96, %cst_75 [1] : vector<34x32xf32> to vector<34xf32>
    %98 = vector.shape_cast %97 : vector<34xf32> to vector<34x1xf32>
    %cst_76 = arith.constant 3.200000e+01 : f32
    %99 = vector.broadcast %cst_76 : f32 to vector<34x1xf32>
    %100 = arith.divf %98, %99 : vector<34x1xf32>
    %cst_77 = arith.constant 9.99999974E-6 : f32
    %101 = vector.broadcast %cst_77 : f32 to vector<34x1xf32>
    %102 = arith.addf %100, %101 : vector<34x1xf32>
    %103 = math.rsqrt %102 : vector<34x1xf32>
    %104 = vector.broadcast %103 : vector<34x1xf32> to vector<34x32xf32>
    %105 = arith.mulf %95, %104 : vector<34x32xf32>
    %106 = vector.broadcast %87 : vector<1x32xf32> to vector<34x32xf32>
    %107 = arith.mulf %105, %106 : vector<34x32xf32>
    %108 = vector.broadcast %89 : vector<1x32xf32> to vector<34x32xf32>
    %109 = arith.addf %107, %108 : vector<34x32xf32>
    %c0_78 = arith.constant 0 : index
    %c0_79 = arith.constant 0 : index
    %c0_80 = arith.constant 0 : index
    %110 = vector.load %arg13[%c0_78, %c0_79, %c0_80] : memref<2x32x128xf32, #tpu.memory_space<vmem>>, vector<1x32x128xf32>
    %111 = vector.shape_cast %110 : vector<1x32x128xf32> to vector<32x128xf32>
    %cst_81 = arith.constant dense<0.000000e+00> : vector<34x128xf32>
    %112 = tpu.matmul %109, %111, %cst_81 {dimension_numbers = #tpu.dot_dimension_numbers<[1], [0], [0], [1], [0, 0, 1, 1], [], []>} : vector<34x32xf32>, vector<32x128xf32>, vector<34x128xf32> -> vector<34x128xf32>
    %c0_82 = arith.constant 0 : index
    %c0_83 = arith.constant 0 : index
    %c0_84 = arith.constant 0 : index
    %113 = vector.load %arg14[%c0_82, %c0_83, %c0_84] : memref<2x1x128xf32, #tpu.memory_space<vmem>>, vector<1x1x128xf32>
    %114 = vector.shape_cast %113 : vector<1x1x128xf32> to vector<1x128xf32>
    %115 = vector.broadcast %114 : vector<1x128xf32> to vector<34x128xf32>
    %116 = arith.addf %112, %115 : vector<34x128xf32>
    %cst_85 = arith.constant 5.000000e-01 : f32
    %117 = vector.broadcast %cst_85 : f32 to vector<34x128xf32>
    %118 = arith.mulf %117, %116 : vector<34x128xf32>
    %cst_86 = arith.constant 4.471500e-02 : f32
    %119 = vector.broadcast %cst_86 : f32 to vector<34x128xf32>
    %120 = arith.mulf %119, %116 : vector<34x128xf32>
    %121 = arith.mulf %120, %116 : vector<34x128xf32>
    %122 = arith.mulf %121, %116 : vector<34x128xf32>
    %123 = arith.addf %116, %122 : vector<34x128xf32>
    %cst_87 = arith.constant 0.797884583 : f32
    %124 = vector.broadcast %cst_87 : f32 to vector<34x128xf32>
    %125 = arith.mulf %124, %123 : vector<34x128xf32>
    %126 = math.tanh %125 : vector<34x128xf32>
    %cst_88 = arith.constant 1.000000e+00 : f32
    %127 = vector.broadcast %cst_88 : f32 to vector<34x128xf32>
    %128 = arith.addf %127, %126 : vector<34x128xf32>
    %129 = arith.mulf %118, %128 : vector<34x128xf32>
    %c0_89 = arith.constant 0 : index
    %c0_90 = arith.constant 0 : index
    %c0_91 = arith.constant 0 : index
    %130 = vector.load %arg15[%c0_89, %c0_90, %c0_91] : memref<2x128x32xf32, #tpu.memory_space<vmem>>, vector<1x128x32xf32>
    %131 = vector.shape_cast %130 : vector<1x128x32xf32> to vector<128x32xf32>
    %cst_92 = arith.constant dense<0.000000e+00> : vector<34x32xf32>
    %132 = tpu.matmul %129, %131, %cst_92 {dimension_numbers = #tpu.dot_dimension_numbers<[1], [0], [0], [1], [0, 0, 1, 1], [], []>} : vector<34x128xf32>, vector<128x32xf32>, vector<34x32xf32> -> vector<34x32xf32>
    %c0_93 = arith.constant 0 : index
    %c0_94 = arith.constant 0 : index
    %c0_95 = arith.constant 0 : index
    %133 = vector.load %arg16[%c0_93, %c0_94, %c0_95] : memref<2x1x32xf32, #tpu.memory_space<vmem>>, vector<1x1x32xf32>
    %134 = vector.shape_cast %133 : vector<1x1x32xf32> to vector<1x32xf32>
    %135 = vector.broadcast %134 : vector<1x32xf32> to vector<34x32xf32>
    %136 = arith.addf %132, %135 : vector<34x32xf32>
    %137 = arith.addf %85, %136 : vector<34x32xf32>
    %c1_96 = arith.constant 1 : index
    %c0_97 = arith.constant 0 : index
    %c0_98 = arith.constant 0 : index
    %138 = vector.load %arg5[%c1_96, %c0_97, %c0_98] : memref<2x1x32xf32, #tpu.memory_space<vmem>>, vector<1x1x32xf32>
    %139 = vector.shape_cast %138 : vector<1x1x32xf32> to vector<1x32xf32>
    %c1_99 = arith.constant 1 : index
    %c0_100 = arith.constant 0 : index
    %c0_101 = arith.constant 0 : index
    %140 = vector.load %arg6[%c1_99, %c0_100, %c0_101] : memref<2x1x32xf32, #tpu.memory_space<vmem>>, vector<1x1x32xf32>
    %141 = vector.shape_cast %140 : vector<1x1x32xf32> to vector<1x32xf32>
    %cst_102 = arith.constant dense<0.000000e+00> : vector<34xf32>
    %142 = vector.multi_reduction <add>, %137, %cst_102 [1] : vector<34x32xf32> to vector<34xf32>
    %143 = vector.shape_cast %142 : vector<34xf32> to vector<34x1xf32>
    %cst_103 = arith.constant 3.200000e+01 : f32
    %144 = vector.broadcast %cst_103 : f32 to vector<34x1xf32>
    %145 = arith.divf %143, %144 : vector<34x1xf32>
    %146 = vector.broadcast %145 : vector<34x1xf32> to vector<34x32xf32>
    %147 = arith.subf %137, %146 : vector<34x32xf32>
    %148 = arith.mulf %147, %147 : vector<34x32xf32>
    %cst_104 = arith.constant dense<0.000000e+00> : vector<34xf32>
    %149 = vector.multi_reduction <add>, %148, %cst_104 [1] : vector<34x32xf32> to vector<34xf32>
    %150 = vector.shape_cast %149 : vector<34xf32> to vector<34x1xf32>
    %cst_105 = arith.constant 3.200000e+01 : f32
    %151 = vector.broadcast %cst_105 : f32 to vector<34x1xf32>
    %152 = arith.divf %150, %151 : vector<34x1xf32>
    %cst_106 = arith.constant 9.99999974E-6 : f32
    %153 = vector.broadcast %cst_106 : f32 to vector<34x1xf32>
    %154 = arith.addf %152, %153 : vector<34x1xf32>
    %155 = math.rsqrt %154 : vector<34x1xf32>
    %156 = vector.broadcast %155 : vector<34x1xf32> to vector<34x32xf32>
    %157 = arith.mulf %147, %156 : vector<34x32xf32>
    %158 = vector.broadcast %139 : vector<1x32xf32> to vector<34x32xf32>
    %159 = arith.mulf %157, %158 : vector<34x32xf32>
    %160 = vector.broadcast %141 : vector<1x32xf32> to vector<34x32xf32>
    %161 = arith.addf %159, %160 : vector<34x32xf32>
    %c1_107 = arith.constant 1 : index
    %c0_108 = arith.constant 0 : index
    %c0_109 = arith.constant 0 : index
    %c0_110 = arith.constant 0 : index
    %162 = vector.load %arg7[%c1_107, %c0_108, %c0_109, %c0_110] : memref<2x2x32x16xf32, #tpu.memory_space<vmem>>, vector<1x1x32x16xf32>
    %163 = vector.shape_cast %162 : vector<1x1x32x16xf32> to vector<32x16xf32>
    %cst_111 = arith.constant dense<0.000000e+00> : vector<34x16xf32>
    %164 = tpu.matmul %161, %163, %cst_111 {dimension_numbers = #tpu.dot_dimension_numbers<[1], [0], [0], [1], [0, 0, 1, 1], [], []>} : vector<34x32xf32>, vector<32x16xf32>, vector<34x16xf32> -> vector<34x16xf32>
    %c1_112 = arith.constant 1 : index
    %c0_113 = arith.constant 0 : index
    %c0_114 = arith.constant 0 : index
    %c0_115 = arith.constant 0 : index
    %165 = vector.load %arg8[%c1_112, %c0_113, %c0_114, %c0_115] : memref<2x2x32x16xf32, #tpu.memory_space<vmem>>, vector<1x1x32x16xf32>
    %166 = vector.shape_cast %165 : vector<1x1x32x16xf32> to vector<32x16xf32>
    %cst_116 = arith.constant dense<0.000000e+00> : vector<34x16xf32>
    %167 = tpu.matmul %161, %166, %cst_116 {dimension_numbers = #tpu.dot_dimension_numbers<[1], [0], [0], [1], [0, 0, 1, 1], [], []>} : vector<34x32xf32>, vector<32x16xf32>, vector<34x16xf32> -> vector<34x16xf32>
    %c1_117 = arith.constant 1 : index
    %c0_118 = arith.constant 0 : index
    %c0_119 = arith.constant 0 : index
    %c0_120 = arith.constant 0 : index
    %168 = vector.load %arg9[%c1_117, %c0_118, %c0_119, %c0_120] : memref<2x2x32x16xf32, #tpu.memory_space<vmem>>, vector<1x1x32x16xf32>
    %169 = vector.shape_cast %168 : vector<1x1x32x16xf32> to vector<32x16xf32>
    %cst_121 = arith.constant dense<0.000000e+00> : vector<34x16xf32>
    %170 = tpu.matmul %161, %169, %cst_121 {dimension_numbers = #tpu.dot_dimension_numbers<[1], [0], [0], [1], [0, 0, 1, 1], [], []>} : vector<34x32xf32>, vector<32x16xf32>, vector<34x16xf32> -> vector<34x16xf32>
    %cst_122 = arith.constant dense<0.000000e+00> : vector<34x34xf32>
    %171 = tpu.matmul %164, %167, %cst_122 {dimension_numbers = #tpu.dot_dimension_numbers<[1], [1], [0], [0], [0, 0, 1, 0], [], []>} : vector<34x16xf32>, vector<34x16xf32>, vector<34x34xf32> -> vector<34x34xf32>
    %cst_123 = arith.constant 2.500000e-01 : f32
    %172 = vector.broadcast %cst_123 : f32 to vector<34x34xf32>
    %173 = arith.mulf %171, %172 : vector<34x34xf32>
    %174 = arith.addf %173, %5 : vector<34x34xf32>
    %cst_124 = arith.constant dense<0xFF800000> : vector<34xf32>
    %175 = vector.multi_reduction <maximumf>, %174, %cst_124 [1] : vector<34x34xf32> to vector<34xf32>
    %176 = vector.shape_cast %175 : vector<34xf32> to vector<34x1xf32>
    %177 = vector.broadcast %176 : vector<34x1xf32> to vector<34x34xf32>
    %178 = arith.subf %174, %177 : vector<34x34xf32>
    %179 = math.exp %178 : vector<34x34xf32>
    %cst_125 = arith.constant dense<0.000000e+00> : vector<34xf32>
    %180 = vector.multi_reduction <add>, %179, %cst_125 [1] : vector<34x34xf32> to vector<34xf32>
    %181 = vector.shape_cast %180 : vector<34xf32> to vector<34x1xf32>
    %182 = tpu.reciprocal %181 {approx = true} : vector<34x1xf32> -> vector<34x1xf32>
    %183 = vector.broadcast %182 : vector<34x1xf32> to vector<34x34xf32>
    %184 = arith.mulf %179, %183 : vector<34x34xf32>
    %cst_126 = arith.constant dense<0.000000e+00> : vector<34x16xf32>
    %185 = tpu.matmul %184, %170, %cst_126 {dimension_numbers = #tpu.dot_dimension_numbers<[1], [0], [0], [1], [0, 0, 1, 1], [], []>} : vector<34x34xf32>, vector<34x16xf32>, vector<34x16xf32> -> vector<34x16xf32>
    %c1_127 = arith.constant 1 : index
    %c0_128 = arith.constant 0 : index
    %c0_129 = arith.constant 0 : index
    %c0_130 = arith.constant 0 : index
    %186 = vector.load %arg10[%c1_127, %c0_128, %c0_129, %c0_130] : memref<2x2x16x32xf32, #tpu.memory_space<vmem>>, vector<1x1x16x32xf32>
    %187 = vector.shape_cast %186 : vector<1x1x16x32xf32> to vector<16x32xf32>
    %cst_131 = arith.constant dense<0.000000e+00> : vector<34x32xf32>
    %188 = tpu.matmul %185, %187, %cst_131 {dimension_numbers = #tpu.dot_dimension_numbers<[1], [0], [0], [1], [0, 0, 1, 1], [], []>} : vector<34x16xf32>, vector<16x32xf32>, vector<34x32xf32> -> vector<34x32xf32>
    %c1_132 = arith.constant 1 : index
    %c1_133 = arith.constant 1 : index
    %c0_134 = arith.constant 0 : index
    %c0_135 = arith.constant 0 : index
    %189 = vector.load %arg7[%c1_132, %c1_133, %c0_134, %c0_135] : memref<2x2x32x16xf32, #tpu.memory_space<vmem>>, vector<1x1x32x16xf32>
    %190 = vector.shape_cast %189 : vector<1x1x32x16xf32> to vector<32x16xf32>
    %cst_136 = arith.constant dense<0.000000e+00> : vector<34x16xf32>
    %191 = tpu.matmul %161, %190, %cst_136 {dimension_numbers = #tpu.dot_dimension_numbers<[1], [0], [0], [1], [0, 0, 1, 1], [], []>} : vector<34x32xf32>, vector<32x16xf32>, vector<34x16xf32> -> vector<34x16xf32>
    %c1_137 = arith.constant 1 : index
    %c1_138 = arith.constant 1 : index
    %c0_139 = arith.constant 0 : index
    %c0_140 = arith.constant 0 : index
    %192 = vector.load %arg8[%c1_137, %c1_138, %c0_139, %c0_140] : memref<2x2x32x16xf32, #tpu.memory_space<vmem>>, vector<1x1x32x16xf32>
    %193 = vector.shape_cast %192 : vector<1x1x32x16xf32> to vector<32x16xf32>
    %cst_141 = arith.constant dense<0.000000e+00> : vector<34x16xf32>
    %194 = tpu.matmul %161, %193, %cst_141 {dimension_numbers = #tpu.dot_dimension_numbers<[1], [0], [0], [1], [0, 0, 1, 1], [], []>} : vector<34x32xf32>, vector<32x16xf32>, vector<34x16xf32> -> vector<34x16xf32>
    %c1_142 = arith.constant 1 : index
    %c1_143 = arith.constant 1 : index
    %c0_144 = arith.constant 0 : index
    %c0_145 = arith.constant 0 : index
    %195 = vector.load %arg9[%c1_142, %c1_143, %c0_144, %c0_145] : memref<2x2x32x16xf32, #tpu.memory_space<vmem>>, vector<1x1x32x16xf32>
    %196 = vector.shape_cast %195 : vector<1x1x32x16xf32> to vector<32x16xf32>
    %cst_146 = arith.constant dense<0.000000e+00> : vector<34x16xf32>
    %197 = tpu.matmul %161, %196, %cst_146 {dimension_numbers = #tpu.dot_dimension_numbers<[1], [0], [0], [1], [0, 0, 1, 1], [], []>} : vector<34x32xf32>, vector<32x16xf32>, vector<34x16xf32> -> vector<34x16xf32>
    %cst_147 = arith.constant dense<0.000000e+00> : vector<34x34xf32>
    %198 = tpu.matmul %191, %194, %cst_147 {dimension_numbers = #tpu.dot_dimension_numbers<[1], [1], [0], [0], [0, 0, 1, 0], [], []>} : vector<34x16xf32>, vector<34x16xf32>, vector<34x34xf32> -> vector<34x34xf32>
    %cst_148 = arith.constant 2.500000e-01 : f32
    %199 = vector.broadcast %cst_148 : f32 to vector<34x34xf32>
    %200 = arith.mulf %198, %199 : vector<34x34xf32>
    %201 = arith.addf %200, %5 : vector<34x34xf32>
    %cst_149 = arith.constant dense<0xFF800000> : vector<34xf32>
    %202 = vector.multi_reduction <maximumf>, %201, %cst_149 [1] : vector<34x34xf32> to vector<34xf32>
    %203 = vector.shape_cast %202 : vector<34xf32> to vector<34x1xf32>
    %204 = vector.broadcast %203 : vector<34x1xf32> to vector<34x34xf32>
    %205 = arith.subf %201, %204 : vector<34x34xf32>
    %206 = math.exp %205 : vector<34x34xf32>
    %cst_150 = arith.constant dense<0.000000e+00> : vector<34xf32>
    %207 = vector.multi_reduction <add>, %206, %cst_150 [1] : vector<34x34xf32> to vector<34xf32>
    %208 = vector.shape_cast %207 : vector<34xf32> to vector<34x1xf32>
    %209 = tpu.reciprocal %208 {approx = true} : vector<34x1xf32> -> vector<34x1xf32>
    %210 = vector.broadcast %209 : vector<34x1xf32> to vector<34x34xf32>
    %211 = arith.mulf %206, %210 : vector<34x34xf32>
    %cst_151 = arith.constant dense<0.000000e+00> : vector<34x16xf32>
    %212 = tpu.matmul %211, %197, %cst_151 {dimension_numbers = #tpu.dot_dimension_numbers<[1], [0], [0], [1], [0, 0, 1, 1], [], []>} : vector<34x34xf32>, vector<34x16xf32>, vector<34x16xf32> -> vector<34x16xf32>
    %c1_152 = arith.constant 1 : index
    %c1_153 = arith.constant 1 : index
    %c0_154 = arith.constant 0 : index
    %c0_155 = arith.constant 0 : index
    %213 = vector.load %arg10[%c1_152, %c1_153, %c0_154, %c0_155] : memref<2x2x16x32xf32, #tpu.memory_space<vmem>>, vector<1x1x16x32xf32>
    %214 = vector.shape_cast %213 : vector<1x1x16x32xf32> to vector<16x32xf32>
    %cst_156 = arith.constant dense<0.000000e+00> : vector<34x32xf32>
    %215 = tpu.matmul %212, %214, %cst_156 {dimension_numbers = #tpu.dot_dimension_numbers<[1], [0], [0], [1], [0, 0, 1, 1], [], []>} : vector<34x16xf32>, vector<16x32xf32>, vector<34x32xf32> -> vector<34x32xf32>
    %216 = arith.addf %188, %215 : vector<34x32xf32>
    %217 = arith.addf %137, %216 : vector<34x32xf32>
    %c1_157 = arith.constant 1 : index
    %c0_158 = arith.constant 0 : index
    %c0_159 = arith.constant 0 : index
    %218 = vector.load %arg11[%c1_157, %c0_158, %c0_159] : memref<2x1x32xf32, #tpu.memory_space<vmem>>, vector<1x1x32xf32>
    %219 = vector.shape_cast %218 : vector<1x1x32xf32> to vector<1x32xf32>
    %c1_160 = arith.constant 1 : index
    %c0_161 = arith.constant 0 : index
    %c0_162 = arith.constant 0 : index
    %220 = vector.load %arg12[%c1_160, %c0_161, %c0_162] : memref<2x1x32xf32, #tpu.memory_space<vmem>>, vector<1x1x32xf32>
    %221 = vector.shape_cast %220 : vector<1x1x32xf32> to vector<1x32xf32>
    %cst_163 = arith.constant dense<0.000000e+00> : vector<34xf32>
    %222 = vector.multi_reduction <add>, %217, %cst_163 [1] : vector<34x32xf32> to vector<34xf32>
    %223 = vector.shape_cast %222 : vector<34xf32> to vector<34x1xf32>
    %cst_164 = arith.constant 3.200000e+01 : f32
    %224 = vector.broadcast %cst_164 : f32 to vector<34x1xf32>
    %225 = arith.divf %223, %224 : vector<34x1xf32>
    %226 = vector.broadcast %225 : vector<34x1xf32> to vector<34x32xf32>
    %227 = arith.subf %217, %226 : vector<34x32xf32>
    %228 = arith.mulf %227, %227 : vector<34x32xf32>
    %cst_165 = arith.constant dense<0.000000e+00> : vector<34xf32>
    %229 = vector.multi_reduction <add>, %228, %cst_165 [1] : vector<34x32xf32> to vector<34xf32>
    %230 = vector.shape_cast %229 : vector<34xf32> to vector<34x1xf32>
    %cst_166 = arith.constant 3.200000e+01 : f32
    %231 = vector.broadcast %cst_166 : f32 to vector<34x1xf32>
    %232 = arith.divf %230, %231 : vector<34x1xf32>
    %cst_167 = arith.constant 9.99999974E-6 : f32
    %233 = vector.broadcast %cst_167 : f32 to vector<34x1xf32>
    %234 = arith.addf %232, %233 : vector<34x1xf32>
    %235 = math.rsqrt %234 : vector<34x1xf32>
    %236 = vector.broadcast %235 : vector<34x1xf32> to vector<34x32xf32>
    %237 = arith.mulf %227, %236 : vector<34x32xf32>
    %238 = vector.broadcast %219 : vector<1x32xf32> to vector<34x32xf32>
    %239 = arith.mulf %237, %238 : vector<34x32xf32>
    %240 = vector.broadcast %221 : vector<1x32xf32> to vector<34x32xf32>
    %241 = arith.addf %239, %240 : vector<34x32xf32>
    %c1_168 = arith.constant 1 : index
    %c0_169 = arith.constant 0 : index
    %c0_170 = arith.constant 0 : index
    %242 = vector.load %arg13[%c1_168, %c0_169, %c0_170] : memref<2x32x128xf32, #tpu.memory_space<vmem>>, vector<1x32x128xf32>
    %243 = vector.shape_cast %242 : vector<1x32x128xf32> to vector<32x128xf32>
    %cst_171 = arith.constant dense<0.000000e+00> : vector<34x128xf32>
    %244 = tpu.matmul %241, %243, %cst_171 {dimension_numbers = #tpu.dot_dimension_numbers<[1], [0], [0], [1], [0, 0, 1, 1], [], []>} : vector<34x32xf32>, vector<32x128xf32>, vector<34x128xf32> -> vector<34x128xf32>
    %c1_172 = arith.constant 1 : index
    %c0_173 = arith.constant 0 : index
    %c0_174 = arith.constant 0 : index
    %245 = vector.load %arg14[%c1_172, %c0_173, %c0_174] : memref<2x1x128xf32, #tpu.memory_space<vmem>>, vector<1x1x128xf32>
    %246 = vector.shape_cast %245 : vector<1x1x128xf32> to vector<1x128xf32>
    %247 = vector.broadcast %246 : vector<1x128xf32> to vector<34x128xf32>
    %248 = arith.addf %244, %247 : vector<34x128xf32>
    %cst_175 = arith.constant 5.000000e-01 : f32
    %249 = vector.broadcast %cst_175 : f32 to vector<34x128xf32>
    %250 = arith.mulf %249, %248 : vector<34x128xf32>
    %cst_176 = arith.constant 4.471500e-02 : f32
    %251 = vector.broadcast %cst_176 : f32 to vector<34x128xf32>
    %252 = arith.mulf %251, %248 : vector<34x128xf32>
    %253 = arith.mulf %252, %248 : vector<34x128xf32>
    %254 = arith.mulf %253, %248 : vector<34x128xf32>
    %255 = arith.addf %248, %254 : vector<34x128xf32>
    %cst_177 = arith.constant 0.797884583 : f32
    %256 = vector.broadcast %cst_177 : f32 to vector<34x128xf32>
    %257 = arith.mulf %256, %255 : vector<34x128xf32>
    %258 = math.tanh %257 : vector<34x128xf32>
    %cst_178 = arith.constant 1.000000e+00 : f32
    %259 = vector.broadcast %cst_178 : f32 to vector<34x128xf32>
    %260 = arith.addf %259, %258 : vector<34x128xf32>
    %261 = arith.mulf %250, %260 : vector<34x128xf32>
    %c1_179 = arith.constant 1 : index
    %c0_180 = arith.constant 0 : index
    %c0_181 = arith.constant 0 : index
    %262 = vector.load %arg15[%c1_179, %c0_180, %c0_181] : memref<2x128x32xf32, #tpu.memory_space<vmem>>, vector<1x128x32xf32>
    %263 = vector.shape_cast %262 : vector<1x128x32xf32> to vector<128x32xf32>
    %cst_182 = arith.constant dense<0.000000e+00> : vector<34x32xf32>
    %264 = tpu.matmul %261, %263, %cst_182 {dimension_numbers = #tpu.dot_dimension_numbers<[1], [0], [0], [1], [0, 0, 1, 1], [], []>} : vector<34x128xf32>, vector<128x32xf32>, vector<34x32xf32> -> vector<34x32xf32>
    %c1_183 = arith.constant 1 : index
    %c0_184 = arith.constant 0 : index
    %c0_185 = arith.constant 0 : index
    %265 = vector.load %arg16[%c1_183, %c0_184, %c0_185] : memref<2x1x32xf32, #tpu.memory_space<vmem>>, vector<1x1x32xf32>
    %266 = vector.shape_cast %265 : vector<1x1x32xf32> to vector<1x32xf32>
    %267 = vector.broadcast %266 : vector<1x32xf32> to vector<34x32xf32>
    %268 = arith.addf %264, %267 : vector<34x32xf32>
    %269 = arith.addf %217, %268 : vector<34x32xf32>
    %c0_186 = arith.constant 0 : index
    %c0_187 = arith.constant 0 : index
    %270 = vector.load %arg17[%c0_186, %c0_187] : memref<2x34xf32, #tpu.memory_space<vmem>>, vector<2x34xf32>
    %cst_188 = arith.constant dense<0.000000e+00> : vector<2x32xf32>
    %271 = tpu.matmul %270, %269, %cst_188 {dimension_numbers = #tpu.dot_dimension_numbers<[1], [0], [0], [1], [0, 0, 1, 1], [], []>} : vector<2x34xf32>, vector<34x32xf32>, vector<2x32xf32> -> vector<2x32xf32>
    %c0_189 = arith.constant 0 : index
    %c0_190 = arith.constant 0 : index
    %272 = vector.load %arg18[%c0_189, %c0_190] : memref<32x128xf32, #tpu.memory_space<vmem>>, vector<32x128xf32>
    %cst_191 = arith.constant dense<0.000000e+00> : vector<2x128xf32>
    %273 = tpu.matmul %271, %272, %cst_191 {dimension_numbers = #tpu.dot_dimension_numbers<[1], [0], [0], [1], [0, 0, 1, 1], [], []>} : vector<2x32xf32>, vector<32x128xf32>, vector<2x128xf32> -> vector<2x128xf32>
    %c0_192 = arith.constant 0 : index
    %c0_193 = arith.constant 0 : index
    %274 = vector.load %arg19[%c0_192, %c0_193] : memref<1x128xf32, #tpu.memory_space<vmem>>, vector<1x128xf32>
    %275 = vector.broadcast %274 : vector<1x128xf32> to vector<2x128xf32>
    %276 = arith.addf %273, %275 : vector<2x128xf32>
    %cst_194 = arith.constant dense<0xFF800000> : vector<2xf32>
    %277 = vector.multi_reduction <maximumf>, %276, %cst_194 [1] : vector<2x128xf32> to vector<2xf32>
    %278 = vector.shape_cast %277 : vector<2xf32> to vector<2x1xf32>
    %279 = vector.broadcast %278 : vector<2x1xf32> to vector<2x128xf32>
    %280 = arith.subf %276, %279 : vector<2x128xf32>
    %281 = math.exp %280 : vector<2x128xf32>
    %cst_195 = arith.constant dense<0.000000e+00> : vector<2xf32>
    %282 = vector.multi_reduction <add>, %281, %cst_195 [1] : vector<2x128xf32> to vector<2xf32>
    %283 = vector.shape_cast %282 : vector<2xf32> to vector<2x1xf32>
    %284 = vector.broadcast %283 : vector<2x1xf32> to vector<2x128xf32>
    %285 = arith.divf %281, %284 : vector<2x128xf32>
    %c0_196 = arith.constant 0 : index
    %c0_197 = arith.constant 0 : index
    %286 = vector.load %arg20[%c0_196, %c0_197] : memref<2x128xf32, #tpu.memory_space<vmem>>, vector<2x128xf32>
    tpu.vector_store %arg20[%c0_196, %c0_197], %285 {strides = array<i32>} : memref<2x128xf32, #tpu.memory_space<vmem>>, vector<2x128xf32>,
    return
  }
  func.func @transform_0(%arg0: i32) -> (i32, i32) {
    %c0_i32 = arith.constant 0 : i32
    %c0_i32_0 = arith.constant 0 : i32
    %c0_i32_1 = arith.constant 0 : i32
    return %c0_i32, %c0_i32_0 : i32, i32
  }
  func.func @transform_1(%arg0: i32) -> (i32, i32) {
    %c0_i32 = arith.constant 0 : i32
    %c0_i32_0 = arith.constant 0 : i32
    %c0_i32_1 = arith.constant 0 : i32
    return %c0_i32, %c0_i32_0 : i32, i32
  }
  func.func @transform_2(%arg0: i32) -> (i32, i32) {
    %c0_i32 = arith.constant 0 : i32
    %c0_i32_0 = arith.constant 0 : i32
    %c0_i32_1 = arith.constant 0 : i32
    return %c0_i32, %c0_i32_0 : i32, i32
  }
  func.func @transform_3(%arg0: i32) -> (i32, i32) {
    %c0_i32 = arith.constant 0 : i32
    %c0_i32_0 = arith.constant 0 : i32
    %c0_i32_1 = arith.constant 0 : i32
    return %c0_i32, %c0_i32_0 : i32, i32
  }
  func.func @transform_4(%arg0: i32) -> (i32, i32, i32) {
    %c0_i32 = arith.constant 0 : i32
    %c0_i32_0 = arith.constant 0 : i32
    %c0_i32_1 = arith.constant 0 : i32
    %c0_i32_2 = arith.constant 0 : i32
    return %c0_i32, %c0_i32_0, %c0_i32_1 : i32, i32, i32
  }
  func.func @transform_5(%arg0: i32) -> (i32, i32, i32) {
    %c0_i32 = arith.constant 0 : i32
    %c0_i32_0 = arith.constant 0 : i32
    %c0_i32_1 = arith.constant 0 : i32
    %c0_i32_2 = arith.constant 0 : i32
    return %c0_i32, %c0_i32_0, %c0_i32_1 : i32, i32, i32
  }
  func.func @transform_6(%arg0: i32) -> (i32, i32, i32, i32) {
    %c0_i32 = arith.constant 0 : i32
    %c0_i32_0 = arith.constant 0 : i32
    %c0_i32_1 = arith.constant 0 : i32
    %c0_i32_2 = arith.constant 0 : i32
    %c0_i32_3 = arith.constant 0 : i32
    return %c0_i32, %c0_i32_0, %c0_i32_1, %c0_i32_2 : i32, i32, i32, i32
  }
  func.func @transform_7(%arg0: i32) -> (i32, i32, i32, i32) {
    %c0_i32 = arith.constant 0 : i32
    %c0_i32_0 = arith.constant 0 : i32
    %c0_i32_1 = arith.constant 0 : i32
    %c0_i32_2 = arith.constant 0 : i32
    %c0_i32_3 = arith.constant 0 : i32
    return %c0_i32, %c0_i32_0, %c0_i32_1, %c0_i32_2 : i32, i32, i32, i32
  }
  func.func @transform_8(%arg0: i32) -> (i32, i32, i32, i32) {
    %c0_i32 = arith.constant 0 : i32
    %c0_i32_0 = arith.constant 0 : i32
    %c0_i32_1 = arith.constant 0 : i32
    %c0_i32_2 = arith.constant 0 : i32
    %c0_i32_3 = arith.constant 0 : i32
    return %c0_i32, %c0_i32_0, %c0_i32_1, %c0_i32_2 : i32, i32, i32, i32
  }
  func.func @transform_9(%arg0: i32) -> (i32, i32, i32, i32) {
    %c0_i32 = arith.constant 0 : i32
    %c0_i32_0 = arith.constant 0 : i32
    %c0_i32_1 = arith.constant 0 : i32
    %c0_i32_2 = arith.constant 0 : i32
    %c0_i32_3 = arith.constant 0 : i32
    return %c0_i32, %c0_i32_0, %c0_i32_1, %c0_i32_2 : i32, i32, i32, i32
  }
  func.func @transform_10(%arg0: i32) -> (i32, i32, i32) {
    %c0_i32 = arith.constant 0 : i32
    %c0_i32_0 = arith.constant 0 : i32
    %c0_i32_1 = arith.constant 0 : i32
    %c0_i32_2 = arith.constant 0 : i32
    return %c0_i32, %c0_i32_0, %c0_i32_1 : i32, i32, i32
  }
  func.func @transform_11(%arg0: i32) -> (i32, i32, i32) {
    %c0_i32 = arith.constant 0 : i32
    %c0_i32_0 = arith.constant 0 : i32
    %c0_i32_1 = arith.constant 0 : i32
    %c0_i32_2 = arith.constant 0 : i32
    return %c0_i32, %c0_i32_0, %c0_i32_1 : i32, i32, i32
  }
  func.func @transform_12(%arg0: i32) -> (i32, i32, i32) {
    %c0_i32 = arith.constant 0 : i32
    %c0_i32_0 = arith.constant 0 : i32
    %c0_i32_1 = arith.constant 0 : i32
    %c0_i32_2 = arith.constant 0 : i32
    return %c0_i32, %c0_i32_0, %c0_i32_1 : i32, i32, i32
  }
  func.func @transform_13(%arg0: i32) -> (i32, i32, i32) {
    %c0_i32 = arith.constant 0 : i32
    %c0_i32_0 = arith.constant 0 : i32
    %c0_i32_1 = arith.constant 0 : i32
    %c0_i32_2 = arith.constant 0 : i32
    return %c0_i32, %c0_i32_0, %c0_i32_1 : i32, i32, i32
  }
  func.func @transform_14(%arg0: i32) -> (i32, i32, i32) {
    %c0_i32 = arith.constant 0 : i32
    %c0_i32_0 = arith.constant 0 : i32
    %c0_i32_1 = arith.constant 0 : i32
    %c0_i32_2 = arith.constant 0 : i32
    return %c0_i32, %c0_i32_0, %c0_i32_1 : i32, i32, i32
  }
  func.func @transform_15(%arg0: i32) -> (i32, i32, i32) {
    %c0_i32 = arith.constant 0 : i32
    %c0_i32_0 = arith.constant 0 : i32
    %c0_i32_1 = arith.constant 0 : i32
    %c0_i32_2 = arith.constant 0 : i32
    return %c0_i32, %c0_i32_0, %c0_i32_1 : i32, i32, i32
  }
  func.func @transform_16(%arg0: i32) -> (i32, i32) {
    %c0_i32 = arith.constant 0 : i32
    %c0_i32_0 = arith.constant 0 : i32
    %c0_i32_1 = arith.constant 0 : i32
    return %c0_i32, %c0_i32_0 : i32, i32
  }
  func.func @transform_17(%arg0: i32) -> (i32, i32) {
    %c0_i32 = arith.constant 0 : i32
    %c0_i32_0 = arith.constant 0 : i32
    %c0_i32_1 = arith.constant 0 : i32
    return %c0_i32, %c0_i32_0 : i32, i32
  }
  func.func @transform_18(%arg0: i32) -> (i32, i32) {
    %c0_i32 = arith.constant 0 : i32
    %c0_i32_0 = arith.constant 0 : i32
    %c0_i32_1 = arith.constant 0 : i32
    return %c0_i32, %c0_i32_0 : i32, i32
  }
  func.func @transform_19(%arg0: i32) -> (i32, i32) {
    %c0_i32 = arith.constant 0 : i32
    %c0_i32_0 = arith.constant 0 : i32
    %c0_i32_1 = arith.constant 0 : i32
    return %c0_i32, %c0_i32_0 : i32, i32
  }
}

</mosaic_0001>

<llo_original>
// kernel: vit_forward.1
$region0: #{vit_forward.1}
  #allocation0 [shape = 'u32[]', space=smem, size = 0x4, offset = 0x4, fixed_abs, tag = 'smem constant byte address 0x4 - core index']
  #allocation1 [shape = 'u32[144,128]{1,0:T(1,128)}', space=vmem, size = 0x12000, scoped, tag = 'internal scratch']
  %s0 = inlined_call_operand.vmem [shape: f32[34,64], index: 0, kind: input, shape index: {}]
  %s1 = inlined_call_operand.vmem [shape: f32[64,32], index: 1, kind: input, shape index: {}]
  %s2 = inlined_call_operand.vmem [shape: f32[34,32], index: 2, kind: input, shape index: {}]
  %s3 = inlined_call_operand.vmem [shape: f32[34,34], index: 3, kind: input, shape index: {}]
  %s4 = inlined_call_operand.vmem [shape: f32[2,1,32], index: 4, kind: input, shape index: {}]
  %s5 = inlined_call_operand.vmem [shape: f32[2,1,32], index: 5, kind: input, shape index: {}]
  %s6 = inlined_call_operand.vmem [shape: f32[2,2,32,16], index: 6, kind: input, shape index: {}]
  %s7 = inlined_call_operand.vmem [shape: f32[2,2,32,16], index: 7, kind: input, shape index: {}]
  %s8 = inlined_call_operand.vmem [shape: f32[2,2,32,16], index: 8, kind: input, shape index: {}]
  %s9 = inlined_call_operand.vmem [shape: f32[2,2,16,32], index: 9, kind: input, shape index: {}]
  %s10 = inlined_call_operand.vmem [shape: f32[2,1,32], index: 10, kind: input, shape index: {}]
  %s11 = inlined_call_operand.vmem [shape: f32[2,1,32], index: 11, kind: input, shape index: {}]
  %s12 = inlined_call_operand.vmem [shape: f32[2,32,128], index: 12, kind: input, shape index: {}]
  %s13 = inlined_call_operand.vmem [shape: f32[2,1,128], index: 13, kind: input, shape index: {}]
  %s14 = inlined_call_operand.vmem [shape: f32[2,128,32], index: 14, kind: input, shape index: {}]
  %s15 = inlined_call_operand.vmem [shape: f32[2,1,32], index: 15, kind: input, shape index: {}]
  %s16 = inlined_call_operand.vmem [shape: f32[2,34], index: 16, kind: input, shape index: {}]
  %s17 = inlined_call_operand.vmem [shape: f32[32,128], index: 17, kind: input, shape index: {}]
  %s18 = inlined_call_operand.vmem [shape: f32[1,128], index: 18, kind: input, shape index: {}]
  %s19 = inlined_call_operand.hbm [shape: f32[2,128], index: 19, kind: output, shape index: {}]
  %s20 = sld [smem:[#allocation0]]
  $region86: #{vit_forward.1} parent=0
    _
  %s22 = ssub.s32 1, %s20
  %s23 = scalar_select 0, %s22, %s20
  $region1: #{vit_forward.1} parent=0
    #allocation2 [shape = 'u8[1024]{0}', space=vmem, size = 0x400, scoped, tag = 'output window, operand 0, single buffered']
    #allocation3 [shape = 's32[1]{0}', space=sflag, size = 0x4, scoped, tag = 'scoped memory for vit_forward.1']
    %24 = vsyncpa [#allocation3], 0
    // Predicated region
    $region2: #{vit_forward.1} parent=1 // pred_check
      _
    $region3: #{vit_forward.1} parent=1 // pred_check_branch
      %26 = sbr.rel (0) target = $region5
    $region4: #{vit_forward.1} parent=1 // pred_region
      _
    $region5: #{vit_forward.1} parent=1 // pred_fallthru
      _
    // Predicated region
    $region6: #{vit_forward.1} parent=1 // pred_check
      _
    $region7: #{vit_forward.1} parent=1 // pred_check_branch
      %28 = sbr.rel (0) target = $region9
    $region8: #{vit_forward.1} parent=1 // pred_region
      _
    $region9: #{vit_forward.1} parent=1 // pred_fallthru
      _
    // Predicated region
    $region10: #{vit_forward.1} parent=1 // pred_check
      _
    $region11: #{vit_forward.1} parent=1 // pred_check_branch
      %30 = sbr.rel (0) target = $region13
    $region12: #{vit_forward.1} parent=1 // pred_region
      _
    $region13: #{vit_forward.1} parent=1 // pred_fallthru
      _
    // Predicated region
    $region14: #{vit_forward.1} parent=1 // pred_check
      _
    $region15: #{vit_forward.1} parent=1 // pred_check_branch
      %32 = sbr.rel (0) target = $region17
    $region16: #{vit_forward.1} parent=1 // pred_region
      _
    $region17: #{vit_forward.1} parent=1 // pred_fallthru
      _
    // Predicated region
    $region18: #{vit_forward.1} parent=1 // pred_check
      _
    $region19: #{vit_forward.1} parent=1 // pred_check_branch
      %34 = sbr.rel (0) target = $region21
    $region20: #{vit_forward.1} parent=1 // pred_region
      _
    $region21: #{vit_forward.1} parent=1 // pred_fallthru
      _
    // Predicated region
    $region22: #{vit_forward.1} parent=1 // pred_check
      _
    $region23: #{vit_forward.1} parent=1 // pred_check_branch
      %36 = sbr.rel (0) target = $region25
    $region24: #{vit_forward.1} parent=1 // pred_region
      _
    $region25: #{vit_forward.1} parent=1 // pred_fallthru
      _
    // Predicated region
    $region26: #{vit_forward.1} parent=1 // pred_check
      _
    $region27: #{vit_forward.1} parent=1 // pred_check_branch
      %38 = sbr.rel (0) target = $region29
    $region28: #{vit_forward.1} parent=1 // pred_region
      _
    $region29: #{vit_forward.1} parent=1 // pred_fallthru
      _
    // Predicated region
    $region30: #{vit_forward.1} parent=1 // pred_check
      _
    $region31: #{vit_forward.1} parent=1 // pred_check_branch
      %40 = sbr.rel (0) target = $region33
    $region32: #{vit_forward.1} parent=1 // pred_region
      _
    $region33: #{vit_forward.1} parent=1 // pred_fallthru
      _
    // Predicated region
    $region34: #{vit_forward.1} parent=1 // pred_check
      _
    $region35: #{vit_forward.1} parent=1 // pred_check_branch
      %42 = sbr.rel (0) target = $region37
    $region36: #{vit_forward.1} parent=1 // pred_region
      _
    $region37: #{vit_forward.1} parent=1 // pred_fallthru
      _
    // Predicated region
    $region38: #{vit_forward.1} parent=1 // pred_check
      _
    $region39: #{vit_forward.1} parent=1 // pred_check_branch
      %44 = sbr.rel (0) target = $region41
    $region40: #{vit_forward.1} parent=1 // pred_region
      _
    $region41: #{vit_forward.1} parent=1 // pred_fallthru
      _
    // Predicated region
    $region42: #{vit_forward.1} parent=1 // pred_check
      _
    $region43: #{vit_forward.1} parent=1 // pred_check_branch
      %46 = sbr.rel (0) target = $region45
    $region44: #{vit_forward.1} parent=1 // pred_region
      _
    $region45: #{vit_forward.1} parent=1 // pred_fallthru
      _
    // Predicated region
    $region46: #{vit_forward.1} parent=1 // pred_check
      _
    $region47: #{vit_forward.1} parent=1 // pred_check_branch
      %48 = sbr.rel (0) target = $region49
    $region48: #{vit_forward.1} parent=1 // pred_region
      _
    $region49: #{vit_forward.1} parent=1 // pred_fallthru
      _
    // Predicated region
    $region50: #{vit_forward.1} parent=1 // pred_check
      _
    $region51: #{vit_forward.1} parent=1 // pred_check_branch
      %50 = sbr.rel (0) target = $region53
    $region52: #{vit_forward.1} parent=1 // pred_region
      _
    $region53: #{vit_forward.1} parent=1 // pred_fallthru
      _
    // Predicated region
    $region54: #{vit_forward.1} parent=1 // pred_check
      _
    $region55: #{vit_forward.1} parent=1 // pred_check_branch
      %52 = sbr.rel (0) target = $region57
    $region56: #{vit_forward.1} parent=1 // pred_region
      _
    $region57: #{vit_forward.1} parent=1 // pred_fallthru
      _
    // Predicated region
    $region58: #{vit_forward.1} parent=1 // pred_check
      _
    $region59: #{vit_forward.1} parent=1 // pred_check_branch
      %54 = sbr.rel (0) target = $region61
    $region60: #{vit_forward.1} parent=1 // pred_region
      _
    $region61: #{vit_forward.1} parent=1 // pred_fallthru
      _
    // Predicated region
    $region62: #{vit_forward.1} parent=1 // pred_check
      _
    $region63: #{vit_forward.1} parent=1 // pred_check_branch
      %56 = sbr.rel (0) target = $region65
    $region64: #{vit_forward.1} parent=1 // pred_region
      _
    $region65: #{vit_forward.1} parent=1 // pred_fallthru
      _
    // Predicated region
    $region66: #{vit_forward.1} parent=1 // pred_check
      _
    $region67: #{vit_forward.1} parent=1 // pred_check_branch
      %58 = sbr.rel (0) target = $region69
    $region68: #{vit_forward.1} parent=1 // pred_region
      _
    $region69: #{vit_forward.1} parent=1 // pred_fallthru
      _
    // Predicated region
    $region70: #{vit_forward.1} parent=1 // pred_check
      _
    $region71: #{vit_forward.1} parent=1 // pred_check_branch
      %60 = sbr.rel (0) target = $region73
    $region72: #{vit_forward.1} parent=1 // pred_region
      _
    $region73: #{vit_forward.1} parent=1 // pred_fallthru
      _
    // Predicated region
    $region74: #{vit_forward.1} parent=1 // pred_check
      _
    $region75: #{vit_forward.1} parent=1 // pred_check_branch
      %62 = sbr.rel (0) target = $region77
    $region76: #{vit_forward.1} parent=1 // pred_region
      _
    $region77: #{vit_forward.1} parent=1 // pred_fallthru
      _
    %v63 = vld [vmem:[%s0] sm:$0xff]
    %v64 = vld [vmem:[%s0 + $0x8] sm:$0xff]
    %v65 = vld [vmem:[%s0 + $0x10] sm:$0xff]
    %v66 = vld [vmem:[%s0 + $0x18] sm:$0xff]
    %v67 = vld [vmem:[%s0 + $0x20] sm:$0x3]
    %v68 = vld [vmem:[%s1] sm:$0xff]
    %v69 = vld [vmem:[%s1 + $0x8] sm:$0xff]
    %v70 = vld [vmem:[%s1 + $0x10] sm:$0xff]
    %v71 = vld [vmem:[%s1 + $0x18] sm:$0xff]
    %v72 = vld [vmem:[%s1 + $0x20] sm:$0xff]
    %v73 = vld [vmem:[%s1 + $0x28] sm:$0xff]
    %v74 = vld [vmem:[%s1 + $0x30] sm:$0xff]
    %v75 = vld [vmem:[%s1 + $0x38] sm:$0xff]
    %v76 = vld [vmem:[%s2] sm:$0xff]
    %v77 = vld [vmem:[%s2 + $0x8] sm:$0xff]
    %v78 = vld [vmem:[%s2 + $0x10] sm:$0xff]
    %v79 = vld [vmem:[%s2 + $0x18] sm:$0xff]
    %v80 = vld [vmem:[%s2 + $0x20] sm:$0x3]
    %vm81 = vcmask 523264
    %v83 = vsel %vm81, %v63, 0
    %v86 = vsel %vm81, %v64, 0
    %v89 = vsel %vm81, %v65, 0
    %v92 = vsel %vm81, %v66, 0
    %v95 = vsel %vm81, %v67, 0
    %97 = vmatprep.subr.mxu0 0.0
    %98 = vmatpush1.msra.mxu0 %v68
    %99 = vmatprep.subr.mxu0 0.0
    %100 = vmatpush1.msra.mxu0 %v69
    %101 = vmatprep.subr.mxu0 0.0
    %102 = vmatpush1.msra.mxu0 %v70
    %103 = vmatprep.subr.mxu0 0.0
    %104 = vmatpush1.msra.mxu0 %v71
    %105 = vmatprep.subr.mxu0 0.0
    %106 = vmatpush1.msra.mxu0 %v72
    %107 = vmatprep.subr.mxu0 0.0
    %108 = vmatpush1.msra.mxu0 %v73
    %109 = vmatprep.subr.mxu0 0.0
    %110 = vmatpush1.msra.mxu0 %v74
    %111 = vmatprep.subr.mxu0 0.0
    %112 = vmatpush1.msra.mxu0 %v75
    %113 = vmatprep.subr.mxu0 0.0
    %114 = vmatpush1.msra.mxu0 0.0
    %115 = vmatprep.subr.mxu0 0.0
    %116 = vmatpush1.msra.mxu0 0.0
    %117 = vmatprep.subr.mxu0 0.0
    %118 = vmatpush1.msra.mxu0 0.0
    %119 = vmatprep.subr.mxu0 0.0
    %120 = vmatpush1.msra.mxu0 0.0
    %121 = vmatprep.subr.mxu0 0.0
    %122 = vmatpush1.msra.mxu0 0.0
    %123 = vmatprep.subr.mxu0 0.0
    %124 = vmatpush1.msra.mxu0 0.0
    %125 = vmatprep.subr.mxu0 0.0
    %126 = vmatpush1.msra.mxu0 0.0
    %127 = vmatprep.subr.mxu0 0.0
    %128 = vmatpush1.msra.mxu0 0.0
    %129 = vmatprep.subr.mxu0 0.0
    %130 = vmatpush1.msra.mxu0 0.0
    %131 = vmatprep.subr.mxu0 0.0
    %132 = vmatpush1.msra.mxu0 0.0
    %133 = vmatprep.subr.mxu0 0.0
    %134 = vmatpush1.msra.mxu0 0.0
    %135 = vmatprep.subr.mxu0 0.0
    %136 = vmatpush1.msra.mxu0 0.0
    %137 = vmatprep.subr.mxu0 0.0
    %138 = vmatpush1.msra.mxu0 0.0
    %139 = vmatprep.subr.mxu0 0.0
    %140 = vmatpush1.msra.mxu0 0.0
    %141 = vmatprep.subr.mxu0 0.0
    %142 = vmatpush1.msra.mxu0 0.0
    %143 = vmatprep.subr.mxu0 0.0
    %144 = vmatpush1.msra.mxu0 0.0
    %145 = vmatprep.subr.mxu0 0.0
    %146 = vmatpush1.msra.mxu0 0.0
    %147 = vmatprep.subr.mxu0 0.0
    %148 = vmatpush1.msra.mxu0 0.0
    %149 = vmatprep.subr.mxu0 0.0
    %150 = vmatpush1.msra.mxu0 0.0
    %151 = vmatprep.subr.mxu0 0.0
    %152 = vmatpush1.msra.mxu0 0.0
    %153 = vmatprep.subr.mxu0 0.0
    %154 = vmatpush1.msra.mxu0 0.0
    %155 = vmatprep.subr.mxu0 0.0
    %156 = vmatpush1.msra.mxu0 0.0
    %157 = vmatprep.subr.mxu0 0.0
    %158 = vmatpush1.msra.mxu0 0.0
    %159 = vmatprep.subr.mxu0 0.0
    %160 = vmatpush1.msra.mxu0 0.0
    %161 = vmatprep.mubr.f32.mxu0 0.0
    %162 = vmatmul.mubr.f32.gmra.mrb[0].mxu0 %v83
    %v163 = vpop.f32.mrb[0].mxu0
    %v164 = vadd.f32 %v76, %v163
    %v165 = vpop.f32.mrb[0].mxu0
    %166 = vmatprep.mubr.f32.mxu0 0.0
    %167 = vmatmul.mubr.f32.gmra.mrb[0].mxu0 %v86
    %v168 = vpop.f32.mrb[0].mxu0
    %v169 = vadd.f32 %v77, %v168
    %v170 = vpop.f32.mrb[0].mxu0
    %171 = vmatprep.mubr.f32.mxu0 0.0
    %172 = vmatmul.mubr.f32.gmra.mrb[0].mxu0 %v89
    %v173 = vpop.f32.mrb[0].mxu0
    %v174 = vadd.f32 %v78, %v173
    %v175 = vpop.f32.mrb[0].mxu0
    %176 = vmatprep.mubr.f32.mxu0 0.0
    %177 = vmatmul.mubr.f32.gmra.mrb[0].mxu0 %v92
    %v178 = vpop.f32.mrb[0].mxu0
    %v179 = vadd.f32 %v79, %v178
    %v180 = vpop.f32.mrb[0].mxu0
    %181 = vmatprep.mubr.f32.mxu0 0.0
    %182 = vmatmul.mubr.f32.gmra.mrb[0].mxu0 %v95
    %v183 = vpop.f32.mrb[0].mxu0
    %v184 = vadd.f32 %v80, %v183
    %v185 = vpop.f32.mrb[0].mxu0
    %186 = vdwg.mxu0
    %v187 = vld [vmem:[%s3] sm:$0xff]
    %v188 = vld [vmem:[%s3 + $0x8] sm:$0xff]
    %v189 = vld [vmem:[%s3 + $0x10] sm:$0xff]
    %v190 = vld [vmem:[%s3 + $0x18] sm:$0xff]
    %v191 = vld [vmem:[%s3 + $0x20] sm:$0x3]
    %v192 = vld [vmem:[%s4] sm:$0x1]
    %v193 = vld [vmem:[%s5] sm:$0x1]
    %vm194 = vcmask 261120
    %v195 = vsel %vm194, %v164, 0.0
    %196 = vadd.xlane.f32.xlu0 %v195
    %v197 = vpop.xlane.xlu0 %196
    %v198 = vsel %vm194, %v169, 0.0
    %199 = vadd.xlane.f32.xlu0 %v198
    %v200 = vpop.xlane.xlu0 %199
    %v201 = vsel %vm194, %v174, 0.0
    %202 = vadd.xlane.f32.xlu0 %v201
    %v203 = vpop.xlane.xlu0 %202
    %v204 = vsel %vm194, %v179, 0.0
    %205 = vadd.xlane.f32.xlu0 %v204
    %v206 = vpop.xlane.xlu0 %205
    %vm207 = vcmask 254976
    %v208 = vsel %vm207, %v184, 0.0
    %209 = vadd.xlane.f32.xlu0 %v208
    %v210 = vpop.xlane.xlu0 %209
    %v211 = vrcp.pop 32.0
    %v212 = vmul.f32 %v197, %v211
    %v213 = vmul.f32 %v200, %v211
    %v214 = vmul.f32 %v203, %v211
    %v215 = vmul.f32 %v206, %v211
    %v216 = vmul.f32 %v210, %v211
    %v217 = vsub.f32 %v164, %v212
    %v218 = vsub.f32 %v169, %v213
    %v219 = vsub.f32 %v174, %v214
    %v220 = vsub.f32 %v179, %v215
    %v221 = vsub.f32 %v184, %v216
    %v222 = vmul.f32 %v217, %v217
    %v223 = vmul.f32 %v218, %v218
    %v224 = vmul.f32 %v219, %v219
    %v225 = vmul.f32 %v220, %v220
    %v226 = vmul.f32 %v221, %v221
    %v227 = vsel %vm194, %v222, 0.0
    %228 = vadd.xlane.f32.xlu0 %v227
    %v229 = vpop.xlane.xlu0 %228
    %v230 = vsel %vm194, %v223, 0.0
    %231 = vadd.xlane.f32.xlu0 %v230
    %v232 = vpop.xlane.xlu0 %231
    %v233 = vsel %vm194, %v224, 0.0
    %234 = vadd.xlane.f32.xlu0 %v233
    %v235 = vpop.xlane.xlu0 %234
    %v236 = vsel %vm194, %v225, 0.0
    %237 = vadd.xlane.f32.xlu0 %v236
    %v238 = vpop.xlane.xlu0 %237
    %v239 = vsel %vm207, %v226, 0.0
    %240 = vadd.xlane.f32.xlu0 %v239
    %v241 = vpop.xlane.xlu0 %240
    %v242 = vmul.f32 %v229, %v211
    %v243 = vmul.f32 %v232, %v211
    %v244 = vmul.f32 %v235, %v211
    %v245 = vmul.f32 %v238, %v211
    %v246 = vmul.f32 %v241, %v211
    %v247 = vadd.f32 %v242, 1e-05
    %v248 = vadd.f32 %v243, 1e-05
    %v249 = vadd.f32 %v244, 1e-05
    %v250 = vadd.f32 %v245, 1e-05
    %v251 = vadd.f32 %v246, 1e-05
    %v252 = vrsqrt.pop %v247
    %v253 = vrsqrt.pop %v248
    %v254 = vrsqrt.pop %v249
    %v255 = vrsqrt.pop %v250
    %v256 = vrsqrt.pop %v251
    %v257 = vmul.f32 %v217, %v252
    %v258 = vmul.f32 %v218, %v253
    %v259 = vmul.f32 %v219, %v254
    %v260 = vmul.f32 %v220, %v255
    %v261 = vmul.f32 %v221, %v256
    %v263 = vlaneseq
    %v264 = vshrl.u32 %v263, 7
    %v265 = vsub.s32 0, %v264
    %v266 = vrot.slane %v192, %v265
    %v268 = vmul.f32 %v257, %v266
    %v269 = vmul.f32 %v258, %v266
    %v270 = vmul.f32 %v259, %v266
    %v271 = vmul.f32 %v260, %v266
    %v272 = vmul.f32 %v261, %v266
    %v274 = vlaneseq
    %v275 = vshrl.u32 %v274, 7
    %v276 = vsub.s32 0, %v275
    %v277 = vrot.slane %v193, %v276
    %v279 = vadd.f32 %v268, %v277
    %v280 = vadd.f32 %v269, %v277
    %v281 = vadd.f32 %v270, %v277
    %v282 = vadd.f32 %v271, %v277
    %v283 = vadd.f32 %v272, %v277
    %v284 = vld [vmem:[%s6] sm:$0xff]
    %v285 = vld [vmem:[%s6 + $0x8] sm:$0xff]
    %v286 = vld [vmem:[%s6 + $0x10] sm:$0xff]
    %v287 = vld [vmem:[%s6 + $0x18] sm:$0xff]
    %v289 = vsel %vm194, %v279, 0
    %v292 = vsel %vm194, %v280, 0
    %v295 = vsel %vm194, %v281, 0
    %v298 = vsel %vm194, %v282, 0
    %v301 = vsel %vm194, %v283, 0
    %303 = vmatprep.subr.mxu0 0.0
    %304 = vmatpush1.msra.mxu0 %v284
    %305 = vmatprep.subr.mxu0 0.0
    %306 = vmatpush1.msra.mxu0 %v285
    %307 = vmatprep.subr.mxu0 0.0
    %308 = vmatpush1.msra.mxu0 %v286
    %309 = vmatprep.subr.mxu0 0.0
    %310 = vmatpush1.msra.mxu0 %v287
    %311 = vmatprep.subr.mxu0 0.0
    %312 = vmatpush1.msra.mxu0 0.0
    %313 = vmatprep.subr.mxu0 0.0
    %314 = vmatpush1.msra.mxu0 0.0
    %315 = vmatprep.subr.mxu0 0.0
    %316 = vmatpush1.msra.mxu0 0.0
    %317 = vmatprep.subr.mxu0 0.0
    %318 = vmatpush1.msra.mxu0 0.0
    %319 = vmatprep.subr.mxu0 0.0
    %320 = vmatpush1.msra.mxu0 0.0
    %321 = vmatprep.subr.mxu0 0.0
    %322 = vmatpush1.msra.mxu0 0.0
    %323 = vmatprep.subr.mxu0 0.0
    %324 = vmatpush1.msra.mxu0 0.0
    %325 = vmatprep.subr.mxu0 0.0
    %326 = vmatpush1.msra.mxu0 0.0
    %327 = vmatprep.subr.mxu0 0.0
    %328 = vmatpush1.msra.mxu0 0.0
    %329 = vmatprep.subr.mxu0 0.0
    %330 = vmatpush1.msra.mxu0 0.0
    %331 = vmatprep.subr.mxu0 0.0
    %332 = vmatpush1.msra.mxu0 0.0
    %333 = vmatprep.subr.mxu0 0.0
    %334 = vmatpush1.msra.mxu0 0.0
    %335 = vmatprep.subr.mxu0 0.0
    %336 = vmatpush1.msra.mxu0 0.0
    %337 = vmatprep.subr.mxu0 0.0
    %338 = vmatpush1.msra.mxu0 0.0
    %339 = vmatprep.subr.mxu0 0.0
    %340 = vmatpush1.msra.mxu0 0.0
    %341 = vmatprep.subr.mxu0 0.0
    %342 = vmatpush1.msra.mxu0 0.0
    %343 = vmatprep.subr.mxu0 0.0
    %344 = vmatpush1.msra.mxu0 0.0
    %345 = vmatprep.subr.mxu0 0.0
    %346 = vmatpush1.msra.mxu0 0.0
    %347 = vmatprep.subr.mxu0 0.0
    %348 = vmatpush1.msra.mxu0 0.0
    %349 = vmatprep.subr.mxu0 0.0
    %350 = vmatpush1.msra.mxu0 0.0
    %351 = vmatprep.subr.mxu0 0.0
    %352 = vmatpush1.msra.mxu0 0.0
    %353 = vmatprep.subr.mxu0 0.0
    %354 = vmatpush1.msra.mxu0 0.0
    %355 = vmatprep.subr.mxu0 0.0
    %356 = vmatpush1.msra.mxu0 0.0
    %357 = vmatprep.subr.mxu0 0.0
    %358 = vmatpush1.msra.mxu0 0.0
    %359 = vmatprep.subr.mxu0 0.0
    %360 = vmatpush1.msra.mxu0 0.0
    %361 = vmatprep.subr.mxu0 0.0
    %362 = vmatpush1.msra.mxu0 0.0
    %363 = vmatprep.subr.mxu0 0.0
    %364 = vmatpush1.msra.mxu0 0.0
    %365 = vmatprep.subr.mxu0 0.0
    %366 = vmatpush1.msra.mxu0 0.0
    %367 = vmatprep.mubr.f32.mxu0 0.0
    %368 = vmatmul.mubr.f32.gmra.mrb[0].mxu0 %v289
    %v369 = vpop.f32.mrb[0].mxu0
    %v370 = vadd.f32 0.0, %v369
    %v371 = vpop.f32.mrb[0].mxu0
    %372 = vmatprep.mubr.f32.mxu0 0.0
    %373 = vmatmul.mubr.f32.gmra.mrb[0].mxu0 %v292
    %v374 = vpop.f32.mrb[0].mxu0
    %v375 = vadd.f32 0.0, %v374
    %v376 = vpop.f32.mrb[0].mxu0
    %377 = vmatprep.mubr.f32.mxu0 0.0
    %378 = vmatmul.mubr.f32.gmra.mrb[0].mxu0 %v295
    %v379 = vpop.f32.mrb[0].mxu0
    %v380 = vadd.f32 0.0, %v379
    %v381 = vpop.f32.mrb[0].mxu0
    %382 = vmatprep.mubr.f32.mxu0 0.0
    %383 = vmatmul.mubr.f32.gmra.mrb[0].mxu0 %v298
    %v384 = vpop.f32.mrb[0].mxu0
    %v385 = vadd.f32 0.0, %v384
    %v386 = vpop.f32.mrb[0].mxu0
    %387 = vmatprep.mubr.f32.mxu0 0.0
    %388 = vmatmul.mubr.f32.gmra.mrb[0].mxu0 %v301
    %v389 = vpop.f32.mrb[0].mxu0
    %v390 = vadd.f32 0.0, %v389
    %v391 = vpop.f32.mrb[0].mxu0
    %392 = vdwg.mxu0
    %v393 = vld [vmem:[%s7] sm:$0xff]
    %v394 = vld [vmem:[%s7 + $0x8] sm:$0xff]
    %v395 = vld [vmem:[%s7 + $0x10] sm:$0xff]
    %v396 = vld [vmem:[%s7 + $0x18] sm:$0xff]
    %397 = vmatprep.subr.mxu0 0.0
    %398 = vmatpush1.msra.mxu0 %v393
    %399 = vmatprep.subr.mxu0 0.0
    %400 = vmatpush1.msra.mxu0 %v394
    %401 = vmatprep.subr.mxu0 0.0
    %402 = vmatpush1.msra.mxu0 %v395
    %403 = vmatprep.subr.mxu0 0.0
    %404 = vmatpush1.msra.mxu0 %v396
    %405 = vmatprep.subr.mxu0 0.0
    %406 = vmatpush1.msra.mxu0 0.0
    %407 = vmatprep.subr.mxu0 0.0
    %408 = vmatpush1.msra.mxu0 0.0
    %409 = vmatprep.subr.mxu0 0.0
    %410 = vmatpush1.msra.mxu0 0.0
    %411 = vmatprep.subr.mxu0 0.0
    %412 = vmatpush1.msra.mxu0 0.0
    %413 = vmatprep.subr.mxu0 0.0
    %414 = vmatpush1.msra.mxu0 0.0
    %415 = vmatprep.subr.mxu0 0.0
    %416 = vmatpush1.msra.mxu0 0.0
    %417 = vmatprep.subr.mxu0 0.0
    %418 = vmatpush1.msra.mxu0 0.0
    %419 = vmatprep.subr.mxu0 0.0
    %420 = vmatpush1.msra.mxu0 0.0
    %421 = vmatprep.subr.mxu0 0.0
    %422 = vmatpush1.msra.mxu0 0.0
    %423 = vmatprep.subr.mxu0 0.0
    %424 = vmatpush1.msra.mxu0 0.0
    %425 = vmatprep.subr.mxu0 0.0
    %426 = vmatpush1.msra.mxu0 0.0
    %427 = vmatprep.subr.mxu0 0.0
    %428 = vmatpush1.msra.mxu0 0.0
    %429 = vmatprep.subr.mxu0 0.0
    %430 = vmatpush1.msra.mxu0 0.0
    %431 = vmatprep.subr.mxu0 0.0
    %432 = vmatpush1.msra.mxu0 0.0
    %433 = vmatprep.subr.mxu0 0.0
    %434 = vmatpush1.msra.mxu0 0.0
    %435 = vmatprep.subr.mxu0 0.0
    %436 = vmatpush1.msra.mxu0 0.0
    %437 = vmatprep.subr.mxu0 0.0
    %438 = vmatpush1.msra.mxu0 0.0
    %439 = vmatprep.subr.mxu0 0.0
    %440 = vmatpush1.msra.mxu0 0.0
    %441 = vmatprep.subr.mxu0 0.0
    %442 = vmatpush1.msra.mxu0 0.0
    %443 = vmatprep.subr.mxu0 0.0
    %444 = vmatpush1.msra.mxu0 0.0
    %445 = vmatprep.subr.mxu0 0.0
    %446 = vmatpush1.msra.mxu0 0.0
    %447 = vmatprep.subr.mxu0 0.0
    %448 = vmatpush1.msra.mxu0 0.0
    %449 = vmatprep.subr.mxu0 0.0
    %450 = vmatpush1.msra.mxu0 0.0
    %451 = vmatprep.subr.mxu0 0.0
    %452 = vmatpush1.msra.mxu0 0.0
    %453 = vmatprep.subr.mxu0 0.0
    %454 = vmatpush1.msra.mxu0 0.0
    %455 = vmatprep.subr.mxu0 0.0
    %456 = vmatpush1.msra.mxu0 0.0
    %457 = vmatprep.subr.mxu0 0.0
    %458 = vmatpush1.msra.mxu0 0.0
    %459 = vmatprep.subr.mxu0 0.0
    %460 = vmatpush1.msra.mxu0 0.0
    %461 = vmatprep.mubr.f32.mxu0 0.0
    %462 = vmatmul.mubr.f32.gmra.mrb[0].mxu0 %v289
    %v463 = vpop.f32.mrb[0].mxu0
    %v464 = vadd.f32 0.0, %v463
    %v465 = vpop.f32.mrb[0].mxu0
    %466 = vmatprep.mubr.f32.mxu0 0.0
    %467 = vmatmul.mubr.f32.gmra.mrb[0].mxu0 %v292
    %v468 = vpop.f32.mrb[0].mxu0
    %v469 = vadd.f32 0.0, %v468
    %v470 = vpop.f32.mrb[0].mxu0
    %471 = vmatprep.mubr.f32.mxu0 0.0
    %472 = vmatmul.mubr.f32.gmra.mrb[0].mxu0 %v295
    %v473 = vpop.f32.mrb[0].mxu0
    %v474 = vadd.f32 0.0, %v473
    %v475 = vpop.f32.mrb[0].mxu0
    %476 = vmatprep.mubr.f32.mxu0 0.0
    %477 = vmatmul.mubr.f32.gmra.mrb[0].mxu0 %v298
    %v478 = vpop.f32.mrb[0].mxu0
    %v479 = vadd.f32 0.0, %v478
    %v480 = vpop.f32.mrb[0].mxu0
    %481 = vmatprep.mubr.f32.mxu0 0.0
    %482 = vmatmul.mubr.f32.gmra.mrb[0].mxu0 %v301
    %v483 = vpop.f32.mrb[0].mxu0
    %v484 = vadd.f32 0.0, %v483
    %v485 = vpop.f32.mrb[0].mxu0
    %486 = vdwg.mxu0
    %v487 = vld [vmem:[%s8] sm:$0xff]
    %v488 = vld [vmem:[%s8 + $0x8] sm:$0xff]
    %v489 = vld [vmem:[%s8 + $0x10] sm:$0xff]
    %v490 = vld [vmem:[%s8 + $0x18] sm:$0xff]
    %491 = vmatprep.subr.mxu0 0.0
    %492 = vmatpush1.msra.mxu0 %v487
    %493 = vmatprep.subr.mxu0 0.0
    %494 = vmatpush1.msra.mxu0 %v488
    %495 = vmatprep.subr.mxu0 0.0
    %496 = vmatpush1.msra.mxu0 %v489
    %497 = vmatprep.subr.mxu0 0.0
    %498 = vmatpush1.msra.mxu0 %v490
    %499 = vmatprep.subr.mxu0 0.0
    %500 = vmatpush1.msra.mxu0 0.0
    %501 = vmatprep.subr.mxu0 0.0
    %502 = vmatpush1.msra.mxu0 0.0
    %503 = vmatprep.subr.mxu0 0.0
    %504 = vmatpush1.msra.mxu0 0.0
    %505 = vmatprep.subr.mxu0 0.0
    %506 = vmatpush1.msra.mxu0 0.0
    %507 = vmatprep.subr.mxu0 0.0
    %508 = vmatpush1.msra.mxu0 0.0
    %509 = vmatprep.subr.mxu0 0.0
    %510 = vmatpush1.msra.mxu0 0.0
    %511 = vmatprep.subr.mxu0 0.0
    %512 = vmatpush1.msra.mxu0 0.0
    %513 = vmatprep.subr.mxu0 0.0
    %514 = vmatpush1.msra.mxu0 0.0
    %515 = vmatprep.subr.mxu0 0.0
    %516 = vmatpush1.msra.mxu0 0.0
    %517 = vmatprep.subr.mxu0 0.0
    %518 = vmatpush1.msra.mxu0 0.0
    %519 = vmatprep.subr.mxu0 0.0
    %520 = vmatpush1.msra.mxu0 0.0
    %521 = vmatprep.subr.mxu0 0.0
    %522 = vmatpush1.msra.mxu0 0.0
    %523 = vmatprep.subr.mxu0 0.0
    %524 = vmatpush1.msra.mxu0 0.0
    %525 = vmatprep.subr.mxu0 0.0
    %526 = vmatpush1.msra.mxu0 0.0
    %527 = vmatprep.subr.mxu0 0.0
    %528 = vmatpush1.msra.mxu0 0.0
    %529 = vmatprep.subr.mxu0 0.0
    %530 = vmatpush1.msra.mxu0 0.0
    %531 = vmatprep.subr.mxu0 0.0
    %532 = vmatpush1.msra.mxu0 0.0
    %533 = vmatprep.subr.mxu0 0.0
    %534 = vmatpush1.msra.mxu0 0.0
    %535 = vmatprep.subr.mxu0 0.0
    %536 = vmatpush1.msra.mxu0 0.0
    %537 = vmatprep.subr.mxu0 0.0
    %538 = vmatpush1.msra.mxu0 0.0
    %539 = vmatprep.subr.mxu0 0.0
    %540 = vmatpush1.msra.mxu0 0.0
    %541 = vmatprep.subr.mxu0 0.0
    %542 = vmatpush1.msra.mxu0 0.0
    %543 = vmatprep.subr.mxu0 0.0
    %544 = vmatpush1.msra.mxu0 0.0
    %545 = vmatprep.subr.mxu0 0.0
    %546 = vmatpush1.msra.mxu0 0.0
    %547 = vmatprep.subr.mxu0 0.0
    %548 = vmatpush1.msra.mxu0 0.0
    %549 = vmatprep.subr.mxu0 0.0
    %550 = vmatpush1.msra.mxu0 0.0
    %551 = vmatprep.subr.mxu0 0.0
    %552 = vmatpush1.msra.mxu0 0.0
    %553 = vmatprep.subr.mxu0 0.0
    %554 = vmatpush1.msra.mxu0 0.0
    %555 = vmatprep.mubr.f32.mxu0 0.0
    %556 = vmatmul.mubr.f32.gmra.mrb[0].mxu0 %v289
    %v557 = vpop.f32.mrb[0].mxu0
    %v558 = vadd.f32 0.0, %v557
    %v559 = vpop.f32.mrb[0].mxu0
    %560 = vmatprep.mubr.f32.mxu0 0.0
    %561 = vmatmul.mubr.f32.gmra.mrb[0].mxu0 %v292
    %v562 = vpop.f32.mrb[0].mxu0
    %v563 = vadd.f32 0.0, %v562
    %v564 = vpop.f32.mrb[0].mxu0
    %565 = vmatprep.mubr.f32.mxu0 0.0
    %566 = vmatmul.mubr.f32.gmra.mrb[0].mxu0 %v295
    %v567 = vpop.f32.mrb[0].mxu0
    %v568 = vadd.f32 0.0, %v567
    %v569 = vpop.f32.mrb[0].mxu0
    %570 = vmatprep.mubr.f32.mxu0 0.0
    %571 = vmatmul.mubr.f32.gmra.mrb[0].mxu0 %v298
    %v572 = vpop.f32.mrb[0].mxu0
    %v573 = vadd.f32 0.0, %v572
    %v574 = vpop.f32.mrb[0].mxu0
    %575 = vmatprep.mubr.f32.mxu0 0.0
    %576 = vmatmul.mubr.f32.gmra.mrb[0].mxu0 %v301
    %v577 = vpop.f32.mrb[0].mxu0
    %v578 = vadd.f32 0.0, %v577
    %v579 = vpop.f32.mrb[0].mxu0
    %580 = vdwg.mxu0
    %vm581 = vcmask 130048
    %v583 = vsel %vm581, %v370, 0
    %v586 = vsel %vm581, %v375, 0
    %v589 = vsel %vm581, %v380, 0
    %v592 = vsel %vm581, %v385, 0
    %v595 = vsel %vm581, %v390, 0
    %v598 = vsel %vm581, %v464, 0
    %v601 = vsel %vm581, %v469, 0
    %v604 = vsel %vm581, %v474, 0
    %v607 = vsel %vm581, %v479, 0
    %v610 = vsel %vm581, %v484, 0
    %612 = vmatprep.subr.mxu0 0.0
    %613 = vmatpush1.xpose.msra.mxu0 %v598
    %614 = vmatprep.subr.mxu0 0.0
    %615 = vmatpush1.xpose.msra.mxu0 %v601
    %616 = vmatprep.subr.mxu0 0.0
    %617 = vmatpush1.xpose.msra.mxu0 %v604
    %618 = vmatprep.subr.mxu0 0.0
    %619 = vmatpush1.xpose.msra.mxu0 %v607
    %620 = vmatprep.subr.mxu0 0.0
    %621 = vmatpush1.xpose.msra.mxu0 %v610
    %622 = vmatprep.subr.mxu0 0.0
    %623 = vmatpush1.xpose.msra.mxu0 0.0
    %624 = vmatprep.subr.mxu0 0.0
    %625 = vmatpush1.xpose.msra.mxu0 0.0
    %626 = vmatprep.subr.mxu0 0.0
    %627 = vmatpush1.xpose.msra.mxu0 0.0
    %628 = vmatprep.subr.mxu0 0.0
    %629 = vmatpush1.xpose.msra.mxu0 0.0
    %630 = vmatprep.subr.mxu0 0.0
    %631 = vmatpush1.xpose.msra.mxu0 0.0
    %632 = vmatprep.subr.mxu0 0.0
    %633 = vmatpush1.xpose.msra.mxu0 0.0
    %634 = vmatprep.subr.mxu0 0.0
    %635 = vmatpush1.xpose.msra.mxu0 0.0
    %636 = vmatprep.subr.mxu0 0.0
    %637 = vmatpush1.xpose.msra.mxu0 0.0
    %638 = vmatprep.subr.mxu0 0.0
    %639 = vmatpush1.xpose.msra.mxu0 0.0
    %640 = vmatprep.subr.mxu0 0.0
    %641 = vmatpush1.xpose.msra.mxu0 0.0
    %642 = vmatprep.subr.mxu0 0.0
    %643 = vmatpush1.xpose.msra.mxu0 0.0
    %644 = vmatprep.subr.mxu0 0.0
    %645 = vmatpush1.xpose.msra.mxu0 0.0
    %646 = vmatprep.subr.mxu0 0.0
    %647 = vmatpush1.xpose.msra.mxu0 0.0
    %648 = vmatprep.subr.mxu0 0.0
    %649 = vmatpush1.xpose.msra.mxu0 0.0
    %650 = vmatprep.subr.mxu0 0.0
    %651 = vmatpush1.xpose.msra.mxu0 0.0
    %652 = vmatprep.subr.mxu0 0.0
    %653 = vmatpush1.xpose.msra.mxu0 0.0
    %654 = vmatprep.subr.mxu0 0.0
    %655 = vmatpush1.xpose.msra.mxu0 0.0
    %656 = vmatprep.subr.mxu0 0.0
    %657 = vmatpush1.xpose.msra.mxu0 0.0
    %658 = vmatprep.subr.mxu0 0.0
    %659 = vmatpush1.xpose.msra.mxu0 0.0
    %660 = vmatprep.subr.mxu0 0.0
    %661 = vmatpush1.xpose.msra.mxu0 0.0
    %662 = vmatprep.subr.mxu0 0.0
    %663 = vmatpush1.xpose.msra.mxu0 0.0
    %664 = vmatprep.subr.mxu0 0.0
    %665 = vmatpush1.xpose.msra.mxu0 0.0
    %666 = vmatprep.subr.mxu0 0.0
    %667 = vmatpush1.xpose.msra.mxu0 0.0
    %668 = vmatprep.subr.mxu0 0.0
    %669 = vmatpush1.xpose.msra.mxu0 0.0
    %670 = vmatprep.subr.mxu0 0.0
    %671 = vmatpush1.xpose.msra.mxu0 0.0
    %672 = vmatprep.subr.mxu0 0.0
    %673 = vmatpush1.xpose.msra.mxu0 0.0
    %674 = vmatprep.subr.mxu0 0.0
    %675 = vmatpush1.xpose.msra.mxu0 0.0
    %676 = vmatprep.mubr.f32.mxu0 0.0
    %677 = vmatmul.mubr.f32.gmra.mrb[0].mxu0 %v583
    %v678 = vpop.f32.mrb[0].mxu0
    %v679 = vadd.f32 0.0, %v678
    %v680 = vpop.f32.mrb[0].mxu0
    %681 = vmatprep.mubr.f32.mxu0 0.0
    %682 = vmatmul.mubr.f32.gmra.mrb[0].mxu0 %v586
    %v683 = vpop.f32.mrb[0].mxu0
    %v684 = vadd.f32 0.0, %v683
    %v685 = vpop.f32.mrb[0].mxu0
    %686 = vmatprep.mubr.f32.mxu0 0.0
    %687 = vmatmul.mubr.f32.gmra.mrb[0].mxu0 %v589
    %v688 = vpop.f32.mrb[0].mxu0
    %v689 = vadd.f32 0.0, %v688
    %v690 = vpop.f32.mrb[0].mxu0
    %691 = vmatprep.mubr.f32.mxu0 0.0
    %692 = vmatmul.mubr.f32.gmra.mrb[0].mxu0 %v592
    %v693 = vpop.f32.mrb[0].mxu0
    %v694 = vadd.f32 0.0, %v693
    %v695 = vpop.f32.mrb[0].mxu0
    %696 = vmatprep.mubr.f32.mxu0 0.0
    %697 = vmatmul.mubr.f32.gmra.mrb[0].mxu0 %v595
    %v698 = vpop.f32.mrb[0].mxu0
    %v699 = vadd.f32 0.0, %v698
    %v700 = vpop.f32.mrb[0].mxu0
    %701 = vdwg.mxu0
    %v702 = vmul.f32 %v679, 0.25
    %v703 = vmul.f32 %v684, 0.25
    %v704 = vmul.f32 %v689, 0.25
    %v705 = vmul.f32 %v694, 0.25
    %v706 = vmul.f32 %v699, 0.25
    %v707 = vadd.f32 %v702, %v187
    %v708 = vadd.f32 %v703, %v188
    %v709 = vadd.f32 %v704, %v189
    %v710 = vadd.f32 %v705, %v190
    %v711 = vadd.f32 %v706, %v191
    %vm712 = vcmask 277504
    %v713 = vsel %vm712, %v707, -inf
    %714 = vmax.xlane.f32.xlu0 %v713
    %v715 = vpop.xlane.xlu0 %714
    %v716 = vsel %vm712, %v708, -inf
    %717 = vmax.xlane.f32.xlu0 %v716
    %v718 = vpop.xlane.xlu0 %717
    %v719 = vsel %vm712, %v709, -inf
    %720 = vmax.xlane.f32.xlu0 %v719
    %v721 = vpop.xlane.xlu0 %720
    %v722 = vsel %vm712, %v710, -inf
    %723 = vmax.xlane.f32.xlu0 %v722
    %v724 = vpop.xlane.xlu0 %723
    %vm725 = vcmask 271360
    %v726 = vsel %vm725, %v711, -inf
    %727 = vmax.xlane.f32.xlu0 %v726
    %v728 = vpop.xlane.xlu0 %727
    %v729 = vsub.f32 %v707, %v715
    %v730 = vsub.f32 %v708, %v718
    %v731 = vsub.f32 %v709, %v721
    %v732 = vsub.f32 %v710, %v724
    %v733 = vsub.f32 %v711, %v728
    %v734 = vmul.f32 %v729, 1.442695
    %v735 = vpow.pop %v734
    %v736 = vmul.f32 %v730, 1.442695
    %v737 = vpow.pop %v736
    %v738 = vmul.f32 %v731, 1.442695
    %v739 = vpow.pop %v738
    %v740 = vmul.f32 %v732, 1.442695
    %v741 = vpow.pop %v740
    %v742 = vmul.f32 %v733, 1.442695
    %v743 = vpow.pop %v742
    %v744 = vsel %vm712, %v735, 0.0
    %745 = vadd.xlane.f32.xlu0 %v744
    %v746 = vpop.xlane.xlu0 %745
    %v747 = vsel %vm712, %v737, 0.0
    %748 = vadd.xlane.f32.xlu0 %v747
    %v749 = vpop.xlane.xlu0 %748
    %v750 = vsel %vm712, %v739, 0.0
    %751 = vadd.xlane.f32.xlu0 %v750
    %v752 = vpop.xlane.xlu0 %751
    %v753 = vsel %vm712, %v741, 0.0
    %754 = vadd.xlane.f32.xlu0 %v753
    %v755 = vpop.xlane.xlu0 %754
    %v756 = vsel %vm725, %v743, 0.0
    %757 = vadd.xlane.f32.xlu0 %v756
    %v758 = vpop.xlane.xlu0 %757
    %v759 = vrcp.pop %v746
    %v760 = vrcp.pop %v749
    %v761 = vrcp.pop %v752
    %v762 = vrcp.pop %v755
    %v763 = vrcp.pop %v758
    %v764 = vmul.f32 %v735, %v759
    %v765 = vmul.f32 %v737, %v760
    %v766 = vmul.f32 %v739, %v761
    %v767 = vmul.f32 %v741, %v762
    %v768 = vmul.f32 %v743, %v763
    %v770 = vsel %vm712, %v764, 0
    %v773 = vsel %vm712, %v765, 0
    %v776 = vsel %vm712, %v766, 0
    %v779 = vsel %vm712, %v767, 0
    %v782 = vsel %vm712, %v768, 0
    %vm784 = vcmask 1041408
    %v786 = vsel %vm784, %v578, 0
    %788 = vmatprep.subr.mxu0 0.0
    %789 = vmatpush1.msra.mxu0 %v558
    %790 = vmatprep.subr.mxu0 0.0
    %791 = vmatpush1.msra.mxu0 %v563
    %792 = vmatprep.subr.mxu0 0.0
    %793 = vmatpush1.msra.mxu0 %v568
    %794 = vmatprep.subr.mxu0 0.0
    %795 = vmatpush1.msra.mxu0 %v573
    %796 = vmatprep.subr.mxu0 0.0
    %797 = vmatpush1.msra.mxu0 %v786
    %798 = vmatprep.subr.mxu0 0.0
    %799 = vmatpush1.msra.mxu0 0.0
    %800 = vmatprep.subr.mxu0 0.0
    %801 = vmatpush1.msra.mxu0 0.0
    %802 = vmatprep.subr.mxu0 0.0
    %803 = vmatpush1.msra.mxu0 0.0
    %804 = vmatprep.subr.mxu0 0.0
    %805 = vmatpush1.msra.mxu0 0.0
    %806 = vmatprep.subr.mxu0 0.0
    %807 = vmatpush1.msra.mxu0 0.0
    %808 = vmatprep.subr.mxu0 0.0
    %809 = vmatpush1.msra.mxu0 0.0
    %810 = vmatprep.subr.mxu0 0.0
    %811 = vmatpush1.msra.mxu0 0.0
    %812 = vmatprep.subr.mxu0 0.0
    %813 = vmatpush1.msra.mxu0 0.0
    %814 = vmatprep.subr.mxu0 0.0
    %815 = vmatpush1.msra.mxu0 0.0
    %816 = vmatprep.subr.mxu0 0.0
    %817 = vmatpush1.msra.mxu0 0.0
    %818 = vmatprep.subr.mxu0 0.0
    %819 = vmatpush1.msra.mxu0 0.0
    %820 = vmatprep.subr.mxu0 0.0
    %821 = vmatpush1.msra.mxu0 0.0
    %822 = vmatprep.subr.mxu0 0.0
    %823 = vmatpush1.msra.mxu0 0.0
    %824 = vmatprep.subr.mxu0 0.0
    %825 = vmatpush1.msra.mxu0 0.0
    %826 = vmatprep.subr.mxu0 0.0
    %827 = vmatpush1.msra.mxu0 0.0
    %828 = vmatprep.subr.mxu0 0.0
    %829 = vmatpush1.msra.mxu0 0.0
    %830 = vmatprep.subr.mxu0 0.0
    %831 = vmatpush1.msra.mxu0 0.0
    %832 = vmatprep.subr.mxu0 0.0
    %833 = vmatpush1.msra.mxu0 0.0
    %834 = vmatprep.subr.mxu0 0.0
    %835 = vmatpush1.msra.mxu0 0.0
    %836 = vmatprep.subr.mxu0 0.0
    %837 = vmatpush1.msra.mxu0 0.0
    %838 = vmatprep.subr.mxu0 0.0
    %839 = vmatpush1.msra.mxu0 0.0
    %840 = vmatprep.subr.mxu0 0.0
    %841 = vmatpush1.msra.mxu0 0.0
    %842 = vmatprep.subr.mxu0 0.0
    %843 = vmatpush1.msra.mxu0 0.0
    %844 = vmatprep.subr.mxu0 0.0
    %845 = vmatpush1.msra.mxu0 0.0
    %846 = vmatprep.subr.mxu0 0.0
    %847 = vmatpush1.msra.mxu0 0.0
    %848 = vmatprep.subr.mxu0 0.0
    %849 = vmatpush1.msra.mxu0 0.0
    %850 = vmatprep.subr.mxu0 0.0
    %851 = vmatpush1.msra.mxu0 0.0
    %852 = vmatprep.mubr.f32.mxu0 0.0
    %853 = vmatmul.mubr.f32.gmra.mrb[0].mxu0 %v770
    %v854 = vpop.f32.mrb[0].mxu0
    %v855 = vadd.f32 0.0, %v854
    %v856 = vpop.f32.mrb[0].mxu0
    %857 = vmatprep.mubr.f32.mxu0 0.0
    %858 = vmatmul.mubr.f32.gmra.mrb[0].mxu0 %v773
    %v859 = vpop.f32.mrb[0].mxu0
    %v860 = vadd.f32 0.0, %v859
    %v861 = vpop.f32.mrb[0].mxu0
    %862 = vmatprep.mubr.f32.mxu0 0.0
    %863 = vmatmul.mubr.f32.gmra.mrb[0].mxu0 %v776
    %v864 = vpop.f32.mrb[0].mxu0
    %v865 = vadd.f32 0.0, %v864
    %v866 = vpop.f32.mrb[0].mxu0
    %867 = vmatprep.mubr.f32.mxu0 0.0
    %868 = vmatmul.mubr.f32.gmra.mrb[0].mxu0 %v779
    %v869 = vpop.f32.mrb[0].mxu0
    %v870 = vadd.f32 0.0, %v869
    %v871 = vpop.f32.mrb[0].mxu0
    %872 = vmatprep.mubr.f32.mxu0 0.0
    %873 = vmatmul.mubr.f32.gmra.mrb[0].mxu0 %v782
    %v874 = vpop.f32.mrb[0].mxu0
    %v875 = vadd.f32 0.0, %v874
    %v876 = vpop.f32.mrb[0].mxu0
    %877 = vdwg.mxu0
    %v878 = vld [vmem:[%s9] sm:$0xff]
    %v879 = vld [vmem:[%s9 + $0x8] sm:$0xff]
    %s880 = scalar_lea.vmem %s6, 32
    %v881 = vld [vmem:[%s880] sm:$0xff]
    %v882 = vld [vmem:[%s880 + $0x8] sm:$0xff]
    %v883 = vld [vmem:[%s880 + $0x10] sm:$0xff]
    %v884 = vld [vmem:[%s880 + $0x18] sm:$0xff]
    %885 = vmatprep.subr.mxu0 0.0
    %886 = vmatpush1.msra.mxu0 %v881
    %887 = vmatprep.subr.mxu0 0.0
    %888 = vmatpush1.msra.mxu0 %v882
    %889 = vmatprep.subr.mxu0 0.0
    %890 = vmatpush1.msra.mxu0 %v883
    %891 = vmatprep.subr.mxu0 0.0
    %892 = vmatpush1.msra.mxu0 %v884
    %893 = vmatprep.subr.mxu0 0.0
    %894 = vmatpush1.msra.mxu0 0.0
    %895 = vmatprep.subr.mxu0 0.0
    %896 = vmatpush1.msra.mxu0 0.0
    %897 = vmatprep.subr.mxu0 0.0
    %898 = vmatpush1.msra.mxu0 0.0
    %899 = vmatprep.subr.mxu0 0.0
    %900 = vmatpush1.msra.mxu0 0.0
    %901 = vmatprep.subr.mxu0 0.0
    %902 = vmatpush1.msra.mxu0 0.0
    %903 = vmatprep.subr.mxu0 0.0
    %904 = vmatpush1.msra.mxu0 0.0
    %905 = vmatprep.subr.mxu0 0.0
    %906 = vmatpush1.msra.mxu0 0.0
    %907 = vmatprep.subr.mxu0 0.0
    %908 = vmatpush1.msra.mxu0 0.0
    %909 = vmatprep.subr.mxu0 0.0
    %910 = vmatpush1.msra.mxu0 0.0
    %911 = vmatprep.subr.mxu0 0.0
    %912 = vmatpush1.msra.mxu0 0.0
    %913 = vmatprep.subr.mxu0 0.0
    %914 = vmatpush1.msra.mxu0 0.0
    %915 = vmatprep.subr.mxu0 0.0
    %916 = vmatpush1.msra.mxu0 0.0
    %917 = vmatprep.subr.mxu0 0.0
    %918 = vmatpush1.msra.mxu0 0.0
    %919 = vmatprep.subr.mxu0 0.0
    %920 = vmatpush1.msra.mxu0 0.0
    %921 = vmatprep.subr.mxu0 0.0
    %922 = vmatpush1.msra.mxu0 0.0
    %923 = vmatprep.subr.mxu0 0.0
    %924 = vmatpush1.msra.mxu0 0.0
    %925 = vmatprep.subr.mxu0 0.0
    %926 = vmatpush1.msra.mxu0 0.0
    %927 = vmatprep.subr.mxu0 0.0
    %928 = vmatpush1.msra.mxu0 0.0
    %929 = vmatprep.subr.mxu0 0.0
    %930 = vmatpush1.msra.mxu0 0.0
    %931 = vmatprep.subr.mxu0 0.0
    %932 = vmatpush1.msra.mxu0 0.0
    %933 = vmatprep.subr.mxu0 0.0
    %934 = vmatpush1.msra.mxu0 0.0
    %935 = vmatprep.subr.mxu0 0.0
    %936 = vmatpush1.msra.mxu0 0.0
    %937 = vmatprep.subr.mxu0 0.0
    %938 = vmatpush1.msra.mxu0 0.0
    %939 = vmatprep.subr.mxu0 0.0
    %940 = vmatpush1.msra.mxu0 0.0
    %941 = vmatprep.subr.mxu0 0.0
    %942 = vmatpush1.msra.mxu0 0.0
    %943 = vmatprep.subr.mxu0 0.0
    %944 = vmatpush1.msra.mxu0 0.0
    %945 = vmatprep.subr.mxu0 0.0
    %946 = vmatpush1.msra.mxu0 0.0
    %947 = vmatprep.subr.mxu0 0.0
    %948 = vmatpush1.msra.mxu0 0.0
    %949 = vmatprep.mubr.f32.mxu0 0.0
    %950 = vmatmul.mubr.f32.gmra.mrb[0].mxu0 %v289
    %v951 = vpop.f32.mrb[0].mxu0
    %v952 = vadd.f32 0.0, %v951
    %v953 = vpop.f32.mrb[0].mxu0
    %954 = vmatprep.mubr.f32.mxu0 0.0
    %955 = vmatmul.mubr.f32.gmra.mrb[0].mxu0 %v292
    %v956 = vpop.f32.mrb[0].mxu0
    %v957 = vadd.f32 0.0, %v956
    %v958 = vpop.f32.mrb[0].mxu0
    %959 = vmatprep.mubr.f32.mxu0 0.0
    %960 = vmatmul.mubr.f32.gmra.mrb[0].mxu0 %v295
    %v961 = vpop.f32.mrb[0].mxu0
    %v962 = vadd.f32 0.0, %v961
    %v963 = vpop.f32.mrb[0].mxu0
    %964 = vmatprep.mubr.f32.mxu0 0.0
    %965 = vmatmul.mubr.f32.gmra.mrb[0].mxu0 %v298
    %v966 = vpop.f32.mrb[0].mxu0
    %v967 = vadd.f32 0.0, %v966
    %v968 = vpop.f32.mrb[0].mxu0
    %969 = vmatprep.mubr.f32.mxu0 0.0
    %970 = vmatmul.mubr.f32.gmra.mrb[0].mxu0 %v301
    %v971 = vpop.f32.mrb[0].mxu0
    %v972 = vadd.f32 0.0, %v971
    %v973 = vpop.f32.mrb[0].mxu0
    %974 = vdwg.mxu0
    %s975 = scalar_lea.vmem %s7, 32
    %v976 = vld [vmem:[%s975] sm:$0xff]
    %v977 = vld [vmem:[%s975 + $0x8] sm:$0xff]
    %v978 = vld [vmem:[%s975 + $0x10] sm:$0xff]
    %v979 = vld [vmem:[%s975 + $0x18] sm:$0xff]
    %980 = vmatprep.subr.mxu0 0.0
    %981 = vmatpush1.msra.mxu0 %v976
    %982 = vmatprep.subr.mxu0 0.0
    %983 = vmatpush1.msra.mxu0 %v977
    %984 = vmatprep.subr.mxu0 0.0
    %985 = vmatpush1.msra.mxu0 %v978
    %986 = vmatprep.subr.mxu0 0.0
    %987 = vmatpush1.msra.mxu0 %v979
    %988 = vmatprep.subr.mxu0 0.0
    %989 = vmatpush1.msra.mxu0 0.0
    %990 = vmatprep.subr.mxu0 0.0
    %991 = vmatpush1.msra.mxu0 0.0
    %992 = vmatprep.subr.mxu0 0.0
    %993 = vmatpush1.msra.mxu0 0.0
    %994 = vmatprep.subr.mxu0 0.0
    %995 = vmatpush1.msra.mxu0 0.0
    %996 = vmatprep.subr.mxu0 0.0
    %997 = vmatpush1.msra.mxu0 0.0
    %998 = vmatprep.subr.mxu0 0.0
    %999 = vmatpush1.msra.mxu0 0.0
    %1000 = vmatprep.subr.mxu0 0.0
    %1001 = vmatpush1.msra.mxu0 0.0
    %1002 = vmatprep.subr.mxu0 0.0
    %1003 = vmatpush1.msra.mxu0 0.0
    %1004 = vmatprep.subr.mxu0 0.0
    %1005 = vmatpush1.msra.mxu0 0.0
    %1006 = vmatprep.subr.mxu0 0.0
    %1007 = vmatpush1.msra.mxu0 0.0
    %1008 = vmatprep.subr.mxu0 0.0
    %1009 = vmatpush1.msra.mxu0 0.0
    %1010 = vmatprep.subr.mxu0 0.0
    %1011 = vmatpush1.msra.mxu0 0.0
    %1012 = vmatprep.subr.mxu0 0.0
    %1013 = vmatpush1.msra.mxu0 0.0
    %1014 = vmatprep.subr.mxu0 0.0
    %1015 = vmatpush1.msra.mxu0 0.0
    %1016 = vmatprep.subr.mxu0 0.0
    %1017 = vmatpush1.msra.mxu0 0.0
    %1018 = vmatprep.subr.mxu0 0.0
    %1019 = vmatpush1.msra.mxu0 0.0
    %1020 = vmatprep.subr.mxu0 0.0
    %1021 = vmatpush1.msra.mxu0 0.0
    %1022 = vmatprep.subr.mxu0 0.0
    %1023 = vmatpush1.msra.mxu0 0.0
    %1024 = vmatprep.subr.mxu0 0.0
    %1025 = vmatpush1.msra.mxu0 0.0
    %1026 = vmatprep.subr.mxu0 0.0
    %1027 = vmatpush1.msra.mxu0 0.0
    %1028 = vmatprep.subr.mxu0 0.0
    %1029 = vmatpush1.msra.mxu0 0.0
    %1030 = vmatprep.subr.mxu0 0.0
    %1031 = vmatpush1.msra.mxu0 0.0
    %1032 = vmatprep.subr.mxu0 0.0
    %1033 = vmatpush1.msra.mxu0 0.0
    %1034 = vmatprep.subr.mxu0 0.0
    %1035 = vmatpush1.msra.mxu0 0.0
    %1036 = vmatprep.subr.mxu0 0.0
    %1037 = vmatpush1.msra.mxu0 0.0
    %1038 = vmatprep.subr.mxu0 0.0
    %1039 = vmatpush1.msra.mxu0 0.0
    %1040 = vmatprep.subr.mxu0 0.0
    %1041 = vmatpush1.msra.mxu0 0.0
    %1042 = vmatprep.subr.mxu0 0.0
    %1043 = vmatpush1.msra.mxu0 0.0
    %1044 = vmatprep.mubr.f32.mxu0 0.0
    %1045 = vmatmul.mubr.f32.gmra.mrb[0].mxu0 %v289
    %v1046 = vpop.f32.mrb[0].mxu0
    %v1047 = vadd.f32 0.0, %v1046
    %v1048 = vpop.f32.mrb[0].mxu0
    %1049 = vmatprep.mubr.f32.mxu0 0.0
    %1050 = vmatmul.mubr.f32.gmra.mrb[0].mxu0 %v292
    %v1051 = vpop.f32.mrb[0].mxu0
    %v1052 = vadd.f32 0.0, %v1051
    %v1053 = vpop.f32.mrb[0].mxu0
    %1054 = vmatprep.mubr.f32.mxu0 0.0
    %1055 = vmatmul.mubr.f32.gmra.mrb[0].mxu0 %v295
    %v1056 = vpop.f32.mrb[0].mxu0
    %v1057 = vadd.f32 0.0, %v1056
    %v1058 = vpop.f32.mrb[0].mxu0
    %1059 = vmatprep.mubr.f32.mxu0 0.0
    %1060 = vmatmul.mubr.f32.gmra.mrb[0].mxu0 %v298
    %v1061 = vpop.f32.mrb[0].mxu0
    %v1062 = vadd.f32 0.0, %v1061
    %v1063 = vpop.f32.mrb[0].mxu0
    %1064 = vmatprep.mubr.f32.mxu0 0.0
    %1065 = vmatmul.mubr.f32.gmra.mrb[0].mxu0 %v301
    %v1066 = vpop.f32.mrb[0].mxu0
    %v1067 = vadd.f32 0.0, %v1066
    %v1068 = vpop.f32.mrb[0].mxu0
    %1069 = vdwg.mxu0
    %s1070 = scalar_lea.vmem %s8, 32
    %v1071 = vld [vmem:[%s1070] sm:$0xff]
    %v1072 = vld [vmem:[%s1070 + $0x8] sm:$0xff]
    %v1073 = vld [vmem:[%s1070 + $0x10] sm:$0xff]
    %v1074 = vld [vmem:[%s1070 + $0x18] sm:$0xff]
    %1075 = vmatprep.subr.mxu0 0.0
    %1076 = vmatpush1.msra.mxu0 %v1071
    %1077 = vmatprep.subr.mxu0 0.0
    %1078 = vmatpush1.msra.mxu0 %v1072
    %1079 = vmatprep.subr.mxu0 0.0
    %1080 = vmatpush1.msra.mxu0 %v1073
    %1081 = vmatprep.subr.mxu0 0.0
    %1082 = vmatpush1.msra.mxu0 %v1074
    %1083 = vmatprep.subr.mxu0 0.0
    %1084 = vmatpush1.msra.mxu0 0.0
    %1085 = vmatprep.subr.mxu0 0.0
    %1086 = vmatpush1.msra.mxu0 0.0
    %1087 = vmatprep.subr.mxu0 0.0
    %1088 = vmatpush1.msra.mxu0 0.0
    %1089 = vmatprep.subr.mxu0 0.0
    %1090 = vmatpush1.msra.mxu0 0.0
    %1091 = vmatprep.subr.mxu0 0.0
    %1092 = vmatpush1.msra.mxu0 0.0
    %1093 = vmatprep.subr.mxu0 0.0
    %1094 = vmatpush1.msra.mxu0 0.0
    %1095 = vmatprep.subr.mxu0 0.0
    %1096 = vmatpush1.msra.mxu0 0.0
    %1097 = vmatprep.subr.mxu0 0.0
    %1098 = vmatpush1.msra.mxu0 0.0
    %1099 = vmatprep.subr.mxu0 0.0
    %1100 = vmatpush1.msra.mxu0 0.0
    %1101 = vmatprep.subr.mxu0 0.0
    %1102 = vmatpush1.msra.mxu0 0.0
    %1103 = vmatprep.subr.mxu0 0.0
    %1104 = vmatpush1.msra.mxu0 0.0
    %1105 = vmatprep.subr.mxu0 0.0
    %1106 = vmatpush1.msra.mxu0 0.0
    %1107 = vmatprep.subr.mxu0 0.0
    %1108 = vmatpush1.msra.mxu0 0.0
    %1109 = vmatprep.subr.mxu0 0.0
    %1110 = vmatpush1.msra.mxu0 0.0
    %1111 = vmatprep.subr.mxu0 0.0
    %1112 = vmatpush1.msra.mxu0 0.0
    %1113 = vmatprep.subr.mxu0 0.0
    %1114 = vmatpush1.msra.mxu0 0.0
    %1115 = vmatprep.subr.mxu0 0.0
    %1116 = vmatpush1.msra.mxu0 0.0
    %1117 = vmatprep.subr.mxu0 0.0
    %1118 = vmatpush1.msra.mxu0 0.0
    %1119 = vmatprep.subr.mxu0 0.0
    %1120 = vmatpush1.msra.mxu0 0.0
    %1121 = vmatprep.subr.mxu0 0.0
    %1122 = vmatpush1.msra.mxu0 0.0
    %1123 = vmatprep.subr.mxu0 0.0
    %1124 = vmatpush1.msra.mxu0 0.0
    %1125 = vmatprep.subr.mxu0 0.0
    %1126 = vmatpush1.msra.mxu0 0.0
    %1127 = vmatprep.subr.mxu0 0.0
    %1128 = vmatpush1.msra.mxu0 0.0
    %1129 = vmatprep.subr.mxu0 0.0
    %1130 = vmatpush1.msra.mxu0 0.0
    %1131 = vmatprep.subr.mxu0 0.0
    %1132 = vmatpush1.msra.mxu0 0.0
    %1133 = vmatprep.subr.mxu0 0.0
    %1134 = vmatpush1.msra.mxu0 0.0
    %1135 = vmatprep.subr.mxu0 0.0
    %1136 = vmatpush1.msra.mxu0 0.0
    %1137 = vmatprep.subr.mxu0 0.0
    %1138 = vmatpush1.msra.mxu0 0.0
    %1139 = vmatprep.mubr.f32.mxu0 0.0
    %1140 = vmatmul.mubr.f32.gmra.mrb[0].mxu0 %v289
    %v1141 = vpop.f32.mrb[0].mxu0
    %v1142 = vadd.f32 0.0, %v1141
    %v1143 = vpop.f32.mrb[0].mxu0
    %1144 = vmatprep.mubr.f32.mxu0 0.0
    %1145 = vmatmul.mubr.f32.gmra.mrb[0].mxu0 %v292
    %v1146 = vpop.f32.mrb[0].mxu0
    %v1147 = vadd.f32 0.0, %v1146
    %v1148 = vpop.f32.mrb[0].mxu0
    %1149 = vmatprep.mubr.f32.mxu0 0.0
    %1150 = vmatmul.mubr.f32.gmra.mrb[0].mxu0 %v295
    %v1151 = vpop.f32.mrb[0].mxu0
    %v1152 = vadd.f32 0.0, %v1151
    %v1153 = vpop.f32.mrb[0].mxu0
    %1154 = vmatprep.mubr.f32.mxu0 0.0
    %1155 = vmatmul.mubr.f32.gmra.mrb[0].mxu0 %v298
    %v1156 = vpop.f32.mrb[0].mxu0
    %v1157 = vadd.f32 0.0, %v1156
    %v1158 = vpop.f32.mrb[0].mxu0
    %1159 = vmatprep.mubr.f32.mxu0 0.0
    %1160 = vmatmul.mubr.f32.gmra.mrb[0].mxu0 %v301
    %v1161 = vpop.f32.mrb[0].mxu0
    %v1162 = vadd.f32 0.0, %v1161
    %v1163 = vpop.f32.mrb[0].mxu0
    %1164 = vdwg.mxu0
    %v1166 = vsel %vm581, %v952, 0
    %v1169 = vsel %vm581, %v957, 0
    %v1172 = vsel %vm581, %v962, 0
    %v1175 = vsel %vm581, %v967, 0
    %v1178 = vsel %vm581, %v972, 0
    %v1181 = vsel %vm581, %v1047, 0
    %v1184 = vsel %vm581, %v1052, 0
    %v1187 = vsel %vm581, %v1057, 0
    %v1190 = vsel %vm581, %v1062, 0
    %v1193 = vsel %vm581, %v1067, 0
    %1195 = vmatprep.subr.mxu0 0.0
    %1196 = vmatpush1.xpose.msra.mxu0 %v1181
    %1197 = vmatprep.subr.mxu0 0.0
    %1198 = vmatpush1.xpose.msra.mxu0 %v1184
    %1199 = vmatprep.subr.mxu0 0.0
    %1200 = vmatpush1.xpose.msra.mxu0 %v1187
    %1201 = vmatprep.subr.mxu0 0.0
    %1202 = vmatpush1.xpose.msra.mxu0 %v1190
    %1203 = vmatprep.subr.mxu0 0.0
    %1204 = vmatpush1.xpose.msra.mxu0 %v1193
    %1205 = vmatprep.subr.mxu0 0.0
    %1206 = vmatpush1.xpose.msra.mxu0 0.0
    %1207 = vmatprep.subr.mxu0 0.0
    %1208 = vmatpush1.xpose.msra.mxu0 0.0
    %1209 = vmatprep.subr.mxu0 0.0
    %1210 = vmatpush1.xpose.msra.mxu0 0.0
    %1211 = vmatprep.subr.mxu0 0.0
    %1212 = vmatpush1.xpose.msra.mxu0 0.0
    %1213 = vmatprep.subr.mxu0 0.0
    %1214 = vmatpush1.xpose.msra.mxu0 0.0
    %1215 = vmatprep.subr.mxu0 0.0
    %1216 = vmatpush1.xpose.msra.mxu0 0.0
    %1217 = vmatprep.subr.mxu0 0.0
    %1218 = vmatpush1.xpose.msra.mxu0 0.0
    %1219 = vmatprep.subr.mxu0 0.0
    %1220 = vmatpush1.xpose.msra.mxu0 0.0
    %1221 = vmatprep.subr.mxu0 0.0
    %1222 = vmatpush1.xpose.msra.mxu0 0.0
    %1223 = vmatprep.subr.mxu0 0.0
    %1224 = vmatpush1.xpose.msra.mxu0 0.0
    %1225 = vmatprep.subr.mxu0 0.0
    %1226 = vmatpush1.xpose.msra.mxu0 0.0
    %1227 = vmatprep.subr.mxu0 0.0
    %1228 = vmatpush1.xpose.msra.mxu0 0.0
    %1229 = vmatprep.subr.mxu0 0.0
    %1230 = vmatpush1.xpose.msra.mxu0 0.0
    %1231 = vmatprep.subr.mxu0 0.0
    %1232 = vmatpush1.xpose.msra.mxu0 0.0
    %1233 = vmatprep.subr.mxu0 0.0
    %1234 = vmatpush1.xpose.msra.mxu0 0.0
    %1235 = vmatprep.subr.mxu0 0.0
    %1236 = vmatpush1.xpose.msra.mxu0 0.0
    %1237 = vmatprep.subr.mxu0 0.0
    %1238 = vmatpush1.xpose.msra.mxu0 0.0
    %1239 = vmatprep.subr.mxu0 0.0
    %1240 = vmatpush1.xpose.msra.mxu0 0.0
    %1241 = vmatprep.subr.mxu0 0.0
    %1242 = vmatpush1.xpose.msra.mxu0 0.0
    %1243 = vmatprep.subr.mxu0 0.0
    %1244 = vmatpush1.xpose.msra.mxu0 0.0
    %1245 = vmatprep.subr.mxu0 0.0
    %1246 = vmatpush1.xpose.msra.mxu0 0.0
    %1247 = vmatprep.subr.mxu0 0.0
    %1248 = vmatpush1.xpose.msra.mxu0 0.0
    %1249 = vmatprep.subr.mxu0 0.0
    %1250 = vmatpush1.xpose.msra.mxu0 0.0
    %1251 = vmatprep.subr.mxu0 0.0
    %1252 = vmatpush1.xpose.msra.mxu0 0.0
    %1253 = vmatprep.subr.mxu0 0.0
    %1254 = vmatpush1.xpose.msra.mxu0 0.0
    %1255 = vmatprep.subr.mxu0 0.0
    %1256 = vmatpush1.xpose.msra.mxu0 0.0
    %1257 = vmatprep.subr.mxu0 0.0
    %1258 = vmatpush1.xpose.msra.mxu0 0.0
    %1259 = vmatprep.mubr.f32.mxu0 0.0
    %1260 = vmatmul.mubr.f32.gmra.mrb[0].mxu0 %v1166
    %v1261 = vpop.f32.mrb[0].mxu0
    %v1262 = vadd.f32 0.0, %v1261
    %v1263 = vpop.f32.mrb[0].mxu0
    %1264 = vmatprep.mubr.f32.mxu0 0.0
    %1265 = vmatmul.mubr.f32.gmra.mrb[0].mxu0 %v1169
    %v1266 = vpop.f32.mrb[0].mxu0
    %v1267 = vadd.f32 0.0, %v1266
    %v1268 = vpop.f32.mrb[0].mxu0
    %1269 = vmatprep.mubr.f32.mxu0 0.0
    %1270 = vmatmul.mubr.f32.gmra.mrb[0].mxu0 %v1172
    %v1271 = vpop.f32.mrb[0].mxu0
    %v1272 = vadd.f32 0.0, %v1271
    %v1273 = vpop.f32.mrb[0].mxu0
    %1274 = vmatprep.mubr.f32.mxu0 0.0
    %1275 = vmatmul.mubr.f32.gmra.mrb[0].mxu0 %v1175
    %v1276 = vpop.f32.mrb[0].mxu0
    %v1277 = vadd.f32 0.0, %v1276
    %v1278 = vpop.f32.mrb[0].mxu0
    %1279 = vmatprep.mubr.f32.mxu0 0.0
    %1280 = vmatmul.mubr.f32.gmra.mrb[0].mxu0 %v1178
    %v1281 = vpop.f32.mrb[0].mxu0
    %v1282 = vadd.f32 0.0, %v1281
    %v1283 = vpop.f32.mrb[0].mxu0
    %1284 = vdwg.mxu0
    %v1285 = vmul.f32 %v1262, 0.25
    %v1286 = vmul.f32 %v1267, 0.25
    %v1287 = vmul.f32 %v1272, 0.25
    %v1288 = vmul.f32 %v1277, 0.25
    %v1289 = vmul.f32 %v1282, 0.25
    %v1290 = vadd.f32 %v1285, %v187
    %v1291 = vadd.f32 %v1286, %v188
    %v1292 = vadd.f32 %v1287, %v189
    %v1293 = vadd.f32 %v1288, %v190
    %v1294 = vadd.f32 %v1289, %v191
    %v1295 = vsel %vm712, %v1290, -inf
    %1296 = vmax.xlane.f32.xlu0 %v1295
    %v1297 = vpop.xlane.xlu0 %1296
    %v1298 = vsel %vm712, %v1291, -inf
    %1299 = vmax.xlane.f32.xlu0 %v1298
    %v1300 = vpop.xlane.xlu0 %1299
    %v1301 = vsel %vm712, %v1292, -inf
    %1302 = vmax.xlane.f32.xlu0 %v1301
    %v1303 = vpop.xlane.xlu0 %1302
    %v1304 = vsel %vm712, %v1293, -inf
    %1305 = vmax.xlane.f32.xlu0 %v1304
    %v1306 = vpop.xlane.xlu0 %1305
    %v1307 = vsel %vm725, %v1294, -inf
    %1308 = vmax.xlane.f32.xlu0 %v1307
    %v1309 = vpop.xlane.xlu0 %1308
    %v1310 = vsub.f32 %v1290, %v1297
    %v1311 = vsub.f32 %v1291, %v1300
    %v1312 = vsub.f32 %v1292, %v1303
    %v1313 = vsub.f32 %v1293, %v1306
    %v1314 = vsub.f32 %v1294, %v1309
    %v1315 = vmul.f32 %v1310, 1.442695
    %v1316 = vpow.pop %v1315
    %v1317 = vmul.f32 %v1311, 1.442695
    %v1318 = vpow.pop %v1317
    %v1319 = vmul.f32 %v1312, 1.442695
    %v1320 = vpow.pop %v1319
    %v1321 = vmul.f32 %v1313, 1.442695
    %v1322 = vpow.pop %v1321
    %v1323 = vmul.f32 %v1314, 1.442695
    %v1324 = vpow.pop %v1323
    %v1325 = vsel %vm712, %v1316, 0.0
    %1326 = vadd.xlane.f32.xlu0 %v1325
    %v1327 = vpop.xlane.xlu0 %1326
    %v1328 = vsel %vm712, %v1318, 0.0
    %1329 = vadd.xlane.f32.xlu0 %v1328
    %v1330 = vpop.xlane.xlu0 %1329
    %v1331 = vsel %vm712, %v1320, 0.0
    %1332 = vadd.xlane.f32.xlu0 %v1331
    %v1333 = vpop.xlane.xlu0 %1332
    %v1334 = vsel %vm712, %v1322, 0.0
    %1335 = vadd.xlane.f32.xlu0 %v1334
    %v1336 = vpop.xlane.xlu0 %1335
    %v1337 = vsel %vm725, %v1324, 0.0
    %1338 = vadd.xlane.f32.xlu0 %v1337
    %v1339 = vpop.xlane.xlu0 %1338
    %v1340 = vrcp.pop %v1327
    %v1341 = vrcp.pop %v1330
    %v1342 = vrcp.pop %v1333
    %v1343 = vrcp.pop %v1336
    %v1344 = vrcp.pop %v1339
    %v1345 = vmul.f32 %v1316, %v1340
    %v1346 = vmul.f32 %v1318, %v1341
    %v1347 = vmul.f32 %v1320, %v1342
    %v1348 = vmul.f32 %v1322, %v1343
    %v1349 = vmul.f32 %v1324, %v1344
    %v1351 = vsel %vm712, %v1345, 0
    %v1354 = vsel %vm712, %v1346, 0
    %v1357 = vsel %vm712, %v1347, 0
    %v1360 = vsel %vm712, %v1348, 0
    %v1363 = vsel %vm712, %v1349, 0
    %v1366 = vsel %vm784, %v1162, 0
    %1368 = vmatprep.subr.mxu0 0.0
    %1369 = vmatpush1.msra.mxu0 %v1142
    %1370 = vmatprep.subr.mxu0 0.0
    %1371 = vmatpush1.msra.mxu0 %v1147
    %1372 = vmatprep.subr.mxu0 0.0
    %1373 = vmatpush1.msra.mxu0 %v1152
    %1374 = vmatprep.subr.mxu0 0.0
    %1375 = vmatpush1.msra.mxu0 %v1157
    %1376 = vmatprep.subr.mxu0 0.0
    %1377 = vmatpush1.msra.mxu0 %v1366
    %1378 = vmatprep.subr.mxu0 0.0
    %1379 = vmatpush1.msra.mxu0 0.0
    %1380 = vmatprep.subr.mxu0 0.0
    %1381 = vmatpush1.msra.mxu0 0.0
    %1382 = vmatprep.subr.mxu0 0.0
    %1383 = vmatpush1.msra.mxu0 0.0
    %1384 = vmatprep.subr.mxu0 0.0
    %1385 = vmatpush1.msra.mxu0 0.0
    %1386 = vmatprep.subr.mxu0 0.0
    %1387 = vmatpush1.msra.mxu0 0.0
    %1388 = vmatprep.subr.mxu0 0.0
    %1389 = vmatpush1.msra.mxu0 0.0
    %1390 = vmatprep.subr.mxu0 0.0
    %1391 = vmatpush1.msra.mxu0 0.0
    %1392 = vmatprep.subr.mxu0 0.0
    %1393 = vmatpush1.msra.mxu0 0.0
    %1394 = vmatprep.subr.mxu0 0.0
    %1395 = vmatpush1.msra.mxu0 0.0
    %1396 = vmatprep.subr.mxu0 0.0
    %1397 = vmatpush1.msra.mxu0 0.0
    %1398 = vmatprep.subr.mxu0 0.0
    %1399 = vmatpush1.msra.mxu0 0.0
    %1400 = vmatprep.subr.mxu0 0.0
    %1401 = vmatpush1.msra.mxu0 0.0
    %1402 = vmatprep.subr.mxu0 0.0
    %1403 = vmatpush1.msra.mxu0 0.0
    %1404 = vmatprep.subr.mxu0 0.0
    %1405 = vmatpush1.msra.mxu0 0.0
    %1406 = vmatprep.subr.mxu0 0.0
    %1407 = vmatpush1.msra.mxu0 0.0
    %1408 = vmatprep.subr.mxu0 0.0
    %1409 = vmatpush1.msra.mxu0 0.0
    %1410 = vmatprep.subr.mxu0 0.0
    %1411 = vmatpush1.msra.mxu0 0.0
    %1412 = vmatprep.subr.mxu0 0.0
    %1413 = vmatpush1.msra.mxu0 0.0
    %1414 = vmatprep.subr.mxu0 0.0
    %1415 = vmatpush1.msra.mxu0 0.0
    %1416 = vmatprep.subr.mxu0 0.0
    %1417 = vmatpush1.msra.mxu0 0.0
    %1418 = vmatprep.subr.mxu0 0.0
    %1419 = vmatpush1.msra.mxu0 0.0
    %1420 = vmatprep.subr.mxu0 0.0
    %1421 = vmatpush1.msra.mxu0 0.0
    %1422 = vmatprep.subr.mxu0 0.0
    %1423 = vmatpush1.msra.mxu0 0.0
    %1424 = vmatprep.subr.mxu0 0.0
    %1425 = vmatpush1.msra.mxu0 0.0
    %1426 = vmatprep.subr.mxu0 0.0
    %1427 = vmatpush1.msra.mxu0 0.0
    %1428 = vmatprep.subr.mxu0 0.0
    %1429 = vmatpush1.msra.mxu0 0.0
    %1430 = vmatprep.subr.mxu0 0.0
    %1431 = vmatpush1.msra.mxu0 0.0
    %1432 = vmatprep.mubr.f32.mxu0 0.0
    %1433 = vmatmul.mubr.f32.gmra.mrb[0].mxu0 %v1351
    %v1434 = vpop.f32.mrb[0].mxu0
    %v1435 = vadd.f32 0.0, %v1434
    %v1436 = vpop.f32.mrb[0].mxu0
    %1437 = vmatprep.mubr.f32.mxu0 0.0
    %1438 = vmatmul.mubr.f32.gmra.mrb[0].mxu0 %v1354
    %v1439 = vpop.f32.mrb[0].mxu0
    %v1440 = vadd.f32 0.0, %v1439
    %v1441 = vpop.f32.mrb[0].mxu0
    %1442 = vmatprep.mubr.f32.mxu0 0.0
    %1443 = vmatmul.mubr.f32.gmra.mrb[0].mxu0 %v1357
    %v1444 = vpop.f32.mrb[0].mxu0
    %v1445 = vadd.f32 0.0, %v1444
    %v1446 = vpop.f32.mrb[0].mxu0
    %1447 = vmatprep.mubr.f32.mxu0 0.0
    %1448 = vmatmul.mubr.f32.gmra.mrb[0].mxu0 %v1360
    %v1449 = vpop.f32.mrb[0].mxu0
    %v1450 = vadd.f32 0.0, %v1449
    %v1451 = vpop.f32.mrb[0].mxu0
    %1452 = vmatprep.mubr.f32.mxu0 0.0
    %1453 = vmatmul.mubr.f32.gmra.mrb[0].mxu0 %v1363
    %v1454 = vpop.f32.mrb[0].mxu0
    %v1455 = vadd.f32 0.0, %v1454
    %v1456 = vpop.f32.mrb[0].mxu0
    %1457 = vdwg.mxu0
    %s1458 = scalar_lea.vmem %s9, 16
    %v1459 = vld [vmem:[%s1458] sm:$0xff]
    %v1460 = vld [vmem:[%s1458 + $0x8] sm:$0xff]
    %v1462 = vsel %vm581, %v1435, 0
    %v1465 = vsel %vm581, %v1440, 0
    %v1468 = vsel %vm581, %v1445, 0
    %v1471 = vsel %vm581, %v1450, 0
    %v1474 = vsel %vm581, %v1455, 0
    %1476 = vmatprep.subr.mxu0 0.0
    %1477 = vmatpush1.msra.mxu0 %v1459
    %1478 = vmatprep.subr.mxu0 0.0
    %1479 = vmatpush1.msra.mxu0 %v1460
    %1480 = vmatprep.subr.mxu0 0.0
    %1481 = vmatpush1.msra.mxu0 0.0
    %1482 = vmatprep.subr.mxu0 0.0
    %1483 = vmatpush1.msra.mxu0 0.0
    %1484 = vmatprep.subr.mxu0 0.0
    %1485 = vmatpush1.msra.mxu0 0.0
    %1486 = vmatprep.subr.mxu0 0.0
    %1487 = vmatpush1.msra.mxu0 0.0
    %1488 = vmatprep.subr.mxu0 0.0
    %1489 = vmatpush1.msra.mxu0 0.0
    %1490 = vmatprep.subr.mxu0 0.0
    %1491 = vmatpush1.msra.mxu0 0.0
    %1492 = vmatprep.subr.mxu0 0.0
    %1493 = vmatpush1.msra.mxu0 0.0
    %1494 = vmatprep.subr.mxu0 0.0
    %1495 = vmatpush1.msra.mxu0 0.0
    %1496 = vmatprep.subr.mxu0 0.0
    %1497 = vmatpush1.msra.mxu0 0.0
    %1498 = vmatprep.subr.mxu0 0.0
    %1499 = vmatpush1.msra.mxu0 0.0
    %1500 = vmatprep.subr.mxu0 0.0
    %1501 = vmatpush1.msra.mxu0 0.0
    %1502 = vmatprep.subr.mxu0 0.0
    %1503 = vmatpush1.msra.mxu0 0.0
    %1504 = vmatprep.subr.mxu0 0.0
    %1505 = vmatpush1.msra.mxu0 0.0
    %1506 = vmatprep.subr.mxu0 0.0
    %1507 = vmatpush1.msra.mxu0 0.0
    %1508 = vmatprep.subr.mxu0 0.0
    %1509 = vmatpush1.msra.mxu0 0.0
    %1510 = vmatprep.subr.mxu0 0.0
    %1511 = vmatpush1.msra.mxu0 0.0
    %1512 = vmatprep.subr.mxu0 0.0
    %1513 = vmatpush1.msra.mxu0 0.0
    %1514 = vmatprep.subr.mxu0 0.0
    %1515 = vmatpush1.msra.mxu0 0.0
    %1516 = vmatprep.subr.mxu0 0.0
    %1517 = vmatpush1.msra.mxu0 0.0
    %1518 = vmatprep.subr.mxu0 0.0
    %1519 = vmatpush1.msra.mxu0 0.0
    %1520 = vmatprep.subr.mxu0 0.0
    %1521 = vmatpush1.msra.mxu0 0.0
    %1522 = vmatprep.subr.mxu0 0.0
    %1523 = vmatpush1.msra.mxu0 0.0
    %1524 = vmatprep.subr.mxu0 0.0
    %1525 = vmatpush1.msra.mxu0 0.0
    %1526 = vmatprep.subr.mxu0 0.0
    %1527 = vmatpush1.msra.mxu0 0.0
    %1528 = vmatprep.subr.mxu0 0.0
    %1529 = vmatpush1.msra.mxu0 0.0
    %1530 = vmatprep.subr.mxu0 0.0
    %1531 = vmatpush1.msra.mxu0 0.0
    %1532 = vmatprep.subr.mxu0 0.0
    %1533 = vmatpush1.msra.mxu0 0.0
    %1534 = vmatprep.subr.mxu0 0.0
    %1535 = vmatpush1.msra.mxu0 0.0
    %1536 = vmatprep.subr.mxu0 0.0
    %1537 = vmatpush1.msra.mxu0 0.0
    %1538 = vmatprep.subr.mxu0 0.0
    %1539 = vmatpush1.msra.mxu0 0.0
    %1540 = vmatprep.mubr.f32.mxu0 0.0
    %1541 = vmatmul.mubr.f32.gmra.mrb[0].mxu0 %v1462
    %v1542 = vpop.f32.mrb[0].mxu0
    %v1543 = vadd.f32 0.0, %v1542
    %v1544 = vpop.f32.mrb[0].mxu0
    %1545 = vmatprep.mubr.f32.mxu0 0.0
    %1546 = vmatmul.mubr.f32.gmra.mrb[0].mxu0 %v1465
    %v1547 = vpop.f32.mrb[0].mxu0
    %v1548 = vadd.f32 0.0, %v1547
    %v1549 = vpop.f32.mrb[0].mxu0
    %1550 = vmatprep.mubr.f32.mxu0 0.0
    %1551 = vmatmul.mubr.f32.gmra.mrb[0].mxu0 %v1468
    %v1552 = vpop.f32.mrb[0].mxu0
    %v1553 = vadd.f32 0.0, %v1552
    %v1554 = vpop.f32.mrb[0].mxu0
    %1555 = vmatprep.mubr.f32.mxu0 0.0
    %1556 = vmatmul.mubr.f32.gmra.mrb[0].mxu0 %v1471
    %v1557 = vpop.f32.mrb[0].mxu0
    %v1558 = vadd.f32 0.0, %v1557
    %v1559 = vpop.f32.mrb[0].mxu0
    %1560 = vmatprep.mubr.f32.mxu0 0.0
    %1561 = vmatmul.mubr.f32.gmra.mrb[0].mxu0 %v1474
    %v1562 = vpop.f32.mrb[0].mxu0
    %v1563 = vadd.f32 0.0, %v1562
    %v1564 = vpop.f32.mrb[0].mxu0
    %1565 = vdwg.mxu0
    %v1567 = vsel %vm581, %v855, 0
    %v1570 = vsel %vm581, %v860, 0
    %v1573 = vsel %vm581, %v865, 0
    %v1576 = vsel %vm581, %v870, 0
    %v1579 = vsel %vm581, %v875, 0
    %1581 = vmatprep.subr.mxu0 0.0
    %1582 = vmatpush1.msra.mxu0 %v878
    %1583 = vmatprep.subr.mxu0 0.0
    %1584 = vmatpush1.msra.mxu0 %v879
    %1585 = vmatprep.subr.mxu0 0.0
    %1586 = vmatpush1.msra.mxu0 0.0
    %1587 = vmatprep.subr.mxu0 0.0
    %1588 = vmatpush1.msra.mxu0 0.0
    %1589 = vmatprep.subr.mxu0 0.0
    %1590 = vmatpush1.msra.mxu0 0.0
    %1591 = vmatprep.subr.mxu0 0.0
    %1592 = vmatpush1.msra.mxu0 0.0
    %1593 = vmatprep.subr.mxu0 0.0
    %1594 = vmatpush1.msra.mxu0 0.0
    %1595 = vmatprep.subr.mxu0 0.0
    %1596 = vmatpush1.msra.mxu0 0.0
    %1597 = vmatprep.subr.mxu0 0.0
    %1598 = vmatpush1.msra.mxu0 0.0
    %1599 = vmatprep.subr.mxu0 0.0
    %1600 = vmatpush1.msra.mxu0 0.0
    %1601 = vmatprep.subr.mxu0 0.0
    %1602 = vmatpush1.msra.mxu0 0.0
    %1603 = vmatprep.subr.mxu0 0.0
    %1604 = vmatpush1.msra.mxu0 0.0
    %1605 = vmatprep.subr.mxu0 0.0
    %1606 = vmatpush1.msra.mxu0 0.0
    %1607 = vmatprep.subr.mxu0 0.0
    %1608 = vmatpush1.msra.mxu0 0.0
    %1609 = vmatprep.subr.mxu0 0.0
    %1610 = vmatpush1.msra.mxu0 0.0
    %1611 = vmatprep.subr.mxu0 0.0
    %1612 = vmatpush1.msra.mxu0 0.0
    %1613 = vmatprep.subr.mxu0 0.0
    %1614 = vmatpush1.msra.mxu0 0.0
    %1615 = vmatprep.subr.mxu0 0.0
    %1616 = vmatpush1.msra.mxu0 0.0
    %1617 = vmatprep.subr.mxu0 0.0
    %1618 = vmatpush1.msra.mxu0 0.0
    %1619 = vmatprep.subr.mxu0 0.0
    %1620 = vmatpush1.msra.mxu0 0.0
    %1621 = vmatprep.subr.mxu0 0.0
    %1622 = vmatpush1.msra.mxu0 0.0
    %1623 = vmatprep.subr.mxu0 0.0
    %1624 = vmatpush1.msra.mxu0 0.0
    %1625 = vmatprep.subr.mxu0 0.0
    %1626 = vmatpush1.msra.mxu0 0.0
    %1627 = vmatprep.subr.mxu0 0.0
    %1628 = vmatpush1.msra.mxu0 0.0
    %1629 = vmatprep.subr.mxu0 0.0
    %1630 = vmatpush1.msra.mxu0 0.0
    %1631 = vmatprep.subr.mxu0 0.0
    %1632 = vmatpush1.msra.mxu0 0.0
    %1633 = vmatprep.subr.mxu0 0.0
    %1634 = vmatpush1.msra.mxu0 0.0
    %1635 = vmatprep.subr.mxu0 0.0
    %1636 = vmatpush1.msra.mxu0 0.0
    %1637 = vmatprep.subr.mxu0 0.0
    %1638 = vmatpush1.msra.mxu0 0.0
    %1639 = vmatprep.subr.mxu0 0.0
    %1640 = vmatpush1.msra.mxu0 0.0
    %1641 = vmatprep.subr.mxu0 0.0
    %1642 = vmatpush1.msra.mxu0 0.0
    %1643 = vmatprep.subr.mxu0 0.0
    %1644 = vmatpush1.msra.mxu0 0.0
    %1645 = vmatprep.mubr.f32.mxu0 0.0
    %1646 = vmatmul.mubr.f32.gmra.mrb[0].mxu0 %v1567
    %v1647 = vpop.f32.mrb[0].mxu0
    %v1648 = vadd.f32 %v1543, %v1647
    %v1649 = vpop.f32.mrb[0].mxu0
    %1650 = vmatprep.mubr.f32.mxu0 0.0
    %1651 = vmatmul.mubr.f32.gmra.mrb[0].mxu0 %v1570
    %v1652 = vpop.f32.mrb[0].mxu0
    %v1653 = vadd.f32 %v1548, %v1652
    %v1654 = vpop.f32.mrb[0].mxu0
    %1655 = vmatprep.mubr.f32.mxu0 0.0
    %1656 = vmatmul.mubr.f32.gmra.mrb[0].mxu0 %v1573
    %v1657 = vpop.f32.mrb[0].mxu0
    %v1658 = vadd.f32 %v1553, %v1657
    %v1659 = vpop.f32.mrb[0].mxu0
    %1660 = vmatprep.mubr.f32.mxu0 0.0
    %1661 = vmatmul.mubr.f32.gmra.mrb[0].mxu0 %v1576
    %v1662 = vpop.f32.mrb[0].mxu0
    %v1663 = vadd.f32 %v1558, %v1662
    %v1664 = vpop.f32.mrb[0].mxu0
    %1665 = vmatprep.mubr.f32.mxu0 0.0
    %1666 = vmatmul.mubr.f32.gmra.mrb[0].mxu0 %v1579
    %v1667 = vpop.f32.mrb[0].mxu0
    %v1668 = vadd.f32 %v1563, %v1667
    %v1669 = vpop.f32.mrb[0].mxu0
    %1670 = vdwg.mxu0
    %v1671 = vadd.f32 %v164, %v1648
    %v1672 = vadd.f32 %v169, %v1653
    %v1673 = vadd.f32 %v174, %v1658
    %v1674 = vadd.f32 %v179, %v1663
    %v1675 = vadd.f32 %v184, %v1668
    %v1676 = vld [vmem:[%s10] sm:$0x1]
    %v1677 = vld [vmem:[%s11] sm:$0x1]
    %v1678 = vsel %vm194, %v1671, 0.0
    %1679 = vadd.xlane.f32.xlu0 %v1678
    %v1680 = vpop.xlane.xlu0 %1679
    %v1681 = vsel %vm194, %v1672, 0.0
    %1682 = vadd.xlane.f32.xlu0 %v1681
    %v1683 = vpop.xlane.xlu0 %1682
    %v1684 = vsel %vm194, %v1673, 0.0
    %1685 = vadd.xlane.f32.xlu0 %v1684
    %v1686 = vpop.xlane.xlu0 %1685
    %v1687 = vsel %vm194, %v1674, 0.0
    %1688 = vadd.xlane.f32.xlu0 %v1687
    %v1689 = vpop.xlane.xlu0 %1688
    %v1690 = vsel %vm207, %v1675, 0.0
    %1691 = vadd.xlane.f32.xlu0 %v1690
    %v1692 = vpop.xlane.xlu0 %1691
    %v1693 = vmul.f32 %v1680, %v211
    %v1694 = vmul.f32 %v1683, %v211
    %v1695 = vmul.f32 %v1686, %v211
    %v1696 = vmul.f32 %v1689, %v211
    %v1697 = vmul.f32 %v1692, %v211
    %v1698 = vsub.f32 %v1671, %v1693
    %v1699 = vsub.f32 %v1672, %v1694
    %v1700 = vsub.f32 %v1673, %v1695
    %v1701 = vsub.f32 %v1674, %v1696
    %v1702 = vsub.f32 %v1675, %v1697
    %v1703 = vmul.f32 %v1698, %v1698
    %v1704 = vmul.f32 %v1699, %v1699
    %v1705 = vmul.f32 %v1700, %v1700
    %v1706 = vmul.f32 %v1701, %v1701
    %v1707 = vmul.f32 %v1702, %v1702
    %v1708 = vsel %vm194, %v1703, 0.0
    %1709 = vadd.xlane.f32.xlu0 %v1708
    %v1710 = vpop.xlane.xlu0 %1709
    %v1711 = vsel %vm194, %v1704, 0.0
    %1712 = vadd.xlane.f32.xlu0 %v1711
    %v1713 = vpop.xlane.xlu0 %1712
    %v1714 = vsel %vm194, %v1705, 0.0
    %1715 = vadd.xlane.f32.xlu0 %v1714
    %v1716 = vpop.xlane.xlu0 %1715
    %v1717 = vsel %vm194, %v1706, 0.0
    %1718 = vadd.xlane.f32.xlu0 %v1717
    %v1719 = vpop.xlane.xlu0 %1718
    %v1720 = vsel %vm207, %v1707, 0.0
    %1721 = vadd.xlane.f32.xlu0 %v1720
    %v1722 = vpop.xlane.xlu0 %1721
    %v1723 = vmul.f32 %v1710, %v211
    %v1724 = vmul.f32 %v1713, %v211
    %v1725 = vmul.f32 %v1716, %v211
    %v1726 = vmul.f32 %v1719, %v211
    %v1727 = vmul.f32 %v1722, %v211
    %v1728 = vadd.f32 %v1723, 1e-05
    %v1729 = vadd.f32 %v1724, 1e-05
    %v1730 = vadd.f32 %v1725, 1e-05
    %v1731 = vadd.f32 %v1726, 1e-05
    %v1732 = vadd.f32 %v1727, 1e-05
    %v1733 = vrsqrt.pop %v1728
    %v1734 = vrsqrt.pop %v1729
    %v1735 = vrsqrt.pop %v1730
    %v1736 = vrsqrt.pop %v1731
    %v1737 = vrsqrt.pop %v1732
    %v1738 = vmul.f32 %v1698, %v1733
    %v1739 = vmul.f32 %v1699, %v1734
    %v1740 = vmul.f32 %v1700, %v1735
    %v1741 = vmul.f32 %v1701, %v1736
    %v1742 = vmul.f32 %v1702, %v1737
    %v1744 = vlaneseq
    %v1745 = vshrl.u32 %v1744, 7
    %v1746 = vsub.s32 0, %v1745
    %v1747 = vrot.slane %v1676, %v1746
    %v1749 = vmul.f32 %v1738, %v1747
    %v1750 = vmul.f32 %v1739, %v1747
    %v1751 = vmul.f32 %v1740, %v1747
    %v1752 = vmul.f32 %v1741, %v1747
    %v1753 = vmul.f32 %v1742, %v1747
    %v1755 = vlaneseq
    %v1756 = vshrl.u32 %v1755, 7
    %v1757 = vsub.s32 0, %v1756
    %v1758 = vrot.slane %v1677, %v1757
    %v1760 = vadd.f32 %v1749, %v1758
    %v1761 = vadd.f32 %v1750, %v1758
    %v1762 = vadd.f32 %v1751, %v1758
    %v1763 = vadd.f32 %v1752, %v1758
    %v1764 = vadd.f32 %v1753, %v1758
    %v1765 = vld [vmem:[%s12] sm:$0xff]
    %v1766 = vld [vmem:[%s12 + $0x8] sm:$0xff]
    %v1767 = vld [vmem:[%s12 + $0x10] sm:$0xff]
    %v1768 = vld [vmem:[%s12 + $0x18] sm:$0xff]
    %v1769 = vld [vmem:[%s13] sm:$0x1]
    %v1771 = vlaneseq
    %v1772 = vshrl.u32 %v1771, 7
    %v1773 = vsub.s32 0, %v1772
    %v1774 = vrot.slane %v1769, %v1773
    %v1777 = vsel %vm194, %v1760, 0
    %v1780 = vsel %vm194, %v1761, 0
    %v1783 = vsel %vm194, %v1762, 0
    %v1786 = vsel %vm194, %v1763, 0
    %v1789 = vsel %vm194, %v1764, 0
    %1791 = vmatprep.subr.mxu0 0.0
    %1792 = vmatpush1.msra.mxu0 %v1765
    %1793 = vmatprep.subr.mxu0 0.0
    %1794 = vmatpush1.msra.mxu0 %v1766
    %1795 = vmatprep.subr.mxu0 0.0
    %1796 = vmatpush1.msra.mxu0 %v1767
    %1797 = vmatprep.subr.mxu0 0.0
    %1798 = vmatpush1.msra.mxu0 %v1768
    %1799 = vmatprep.subr.mxu0 0.0
    %1800 = vmatpush1.msra.mxu0 0.0
    %1801 = vmatprep.subr.mxu0 0.0
    %1802 = vmatpush1.msra.mxu0 0.0
    %1803 = vmatprep.subr.mxu0 0.0
    %1804 = vmatpush1.msra.mxu0 0.0
    %1805 = vmatprep.subr.mxu0 0.0
    %1806 = vmatpush1.msra.mxu0 0.0
    %1807 = vmatprep.subr.mxu0 0.0
    %1808 = vmatpush1.msra.mxu0 0.0
    %1809 = vmatprep.subr.mxu0 0.0
    %1810 = vmatpush1.msra.mxu0 0.0
    %1811 = vmatprep.subr.mxu0 0.0
    %1812 = vmatpush1.msra.mxu0 0.0
    %1813 = vmatprep.subr.mxu0 0.0
    %1814 = vmatpush1.msra.mxu0 0.0
    %1815 = vmatprep.subr.mxu0 0.0
    %1816 = vmatpush1.msra.mxu0 0.0
    %1817 = vmatprep.subr.mxu0 0.0
    %1818 = vmatpush1.msra.mxu0 0.0
    %1819 = vmatprep.subr.mxu0 0.0
    %1820 = vmatpush1.msra.mxu0 0.0
    %1821 = vmatprep.subr.mxu0 0.0
    %1822 = vmatpush1.msra.mxu0 0.0
    %1823 = vmatprep.subr.mxu0 0.0
    %1824 = vmatpush1.msra.mxu0 0.0
    %1825 = vmatprep.subr.mxu0 0.0
    %1826 = vmatpush1.msra.mxu0 0.0
    %1827 = vmatprep.subr.mxu0 0.0
    %1828 = vmatpush1.msra.mxu0 0.0
    %1829 = vmatprep.subr.mxu0 0.0
    %1830 = vmatpush1.msra.mxu0 0.0
    %1831 = vmatprep.subr.mxu0 0.0
    %1832 = vmatpush1.msra.mxu0 0.0
    %1833 = vmatprep.subr.mxu0 0.0
    %1834 = vmatpush1.msra.mxu0 0.0
    %1835 = vmatprep.subr.mxu0 0.0
    %1836 = vmatpush1.msra.mxu0 0.0
    %1837 = vmatprep.subr.mxu0 0.0
    %1838 = vmatpush1.msra.mxu0 0.0
    %1839 = vmatprep.subr.mxu0 0.0
    %1840 = vmatpush1.msra.mxu0 0.0
    %1841 = vmatprep.subr.mxu0 0.0
    %1842 = vmatpush1.msra.mxu0 0.0
    %1843 = vmatprep.subr.mxu0 0.0
    %1844 = vmatpush1.msra.mxu0 0.0
    %1845 = vmatprep.subr.mxu0 0.0
    %1846 = vmatpush1.msra.mxu0 0.0
    %1847 = vmatprep.subr.mxu0 0.0
    %1848 = vmatpush1.msra.mxu0 0.0
    %1849 = vmatprep.subr.mxu0 0.0
    %1850 = vmatpush1.msra.mxu0 0.0
    %1851 = vmatprep.subr.mxu0 0.0
    %1852 = vmatpush1.msra.mxu0 0.0
    %1853 = vmatprep.subr.mxu0 0.0
    %1854 = vmatpush1.msra.mxu0 0.0
    %1855 = vmatprep.mubr.f32.mxu0 0.0
    %1856 = vmatmul.mubr.f32.gmra.mrb[0].mxu0 %v1777
    %v1857 = vpop.f32.mrb[0].mxu0
    %v1858 = vadd.f32 %v1774, %v1857
    %v1859 = vpop.f32.mrb[0].mxu0
    %1860 = vmatprep.mubr.f32.mxu0 0.0
    %1861 = vmatmul.mubr.f32.gmra.mrb[0].mxu0 %v1780
    %v1862 = vpop.f32.mrb[0].mxu0
    %v1863 = vadd.f32 %v1774, %v1862
    %v1864 = vpop.f32.mrb[0].mxu0
    %1865 = vmatprep.mubr.f32.mxu0 0.0
    %1866 = vmatmul.mubr.f32.gmra.mrb[0].mxu0 %v1783
    %v1867 = vpop.f32.mrb[0].mxu0
    %v1868 = vadd.f32 %v1774, %v1867
    %v1869 = vpop.f32.mrb[0].mxu0
    %1870 = vmatprep.mubr.f32.mxu0 0.0
    %1871 = vmatmul.mubr.f32.gmra.mrb[0].mxu0 %v1786
    %v1872 = vpop.f32.mrb[0].mxu0
    %v1873 = vadd.f32 %v1774, %v1872
    %v1874 = vpop.f32.mrb[0].mxu0
    %1875 = vmatprep.mubr.f32.mxu0 0.0
    %1876 = vmatmul.mubr.f32.gmra.mrb[0].mxu0 %v1789
    %v1877 = vpop.f32.mrb[0].mxu0
    %v1878 = vadd.f32 %v1774, %v1877
    %v1879 = vpop.f32.mrb[0].mxu0
    %1880 = vdwg.mxu0
    %v1881 = vmul.f32 %v1858, 0.5
    %v1882 = vmul.f32 %v1863, 0.5
    %v1883 = vmul.f32 %v1868, 0.5
    %v1884 = vmul.f32 %v1873, 0.5
    %v1885 = vmul.f32 %v1878, 0.5
    %v1886 = vmul.f32 %v1858, 0.044715
    %v1887 = vmul.f32 %v1863, 0.044715
    %v1888 = vmul.f32 %v1868, 0.044715
    %v1889 = vmul.f32 %v1873, 0.044715
    %v1890 = vmul.f32 %v1878, 0.044715
    %v1891 = vmul.f32 %v1886, %v1858
    %v1892 = vmul.f32 %v1887, %v1863
    %v1893 = vmul.f32 %v1888, %v1868
    %v1894 = vmul.f32 %v1889, %v1873
    %v1895 = vmul.f32 %v1890, %v1878
    %v1896 = vmul.f32 %v1891, %v1858
    %v1897 = vmul.f32 %v1892, %v1863
    %v1898 = vmul.f32 %v1893, %v1868
    %v1899 = vmul.f32 %v1894, %v1873
    %v1900 = vmul.f32 %v1895, %v1878
    %v1901 = vadd.f32 %v1858, %v1896
    %v1902 = vadd.f32 %v1863, %v1897
    %v1903 = vadd.f32 %v1868, %v1898
    %v1904 = vadd.f32 %v1873, %v1899
    %v1905 = vadd.f32 %v1878, %v1900
    %v1906 = vmul.f32 %v1901, 0.7978846
    %v1907 = vmul.f32 %v1902, 0.7978846
    %v1908 = vmul.f32 %v1903, 0.7978846
    %v1909 = vmul.f32 %v1904, 0.7978846
    %v1910 = vmul.f32 %v1905, 0.7978846
    %v1911 = vtanh.pop %v1906
    %v1912 = vtanh.pop %v1907
    %v1913 = vtanh.pop %v1908
    %v1914 = vtanh.pop %v1909
    %v1915 = vtanh.pop %v1910
    %v1916 = vadd.f32 %v1911, 1.0
    %v1917 = vadd.f32 %v1912, 1.0
    %v1918 = vadd.f32 %v1913, 1.0
    %v1919 = vadd.f32 %v1914, 1.0
    %v1920 = vadd.f32 %v1915, 1.0
    %v1921 = vmul.f32 %v1881, %v1916
    %v1922 = vmul.f32 %v1882, %v1917
    %v1923 = vmul.f32 %v1883, %v1918
    %v1924 = vmul.f32 %v1884, %v1919
    %v1925 = vmul.f32 %v1885, %v1920
    %v1926 = vld [vmem:[%s14] sm:$0xff]
    %v1927 = vld [vmem:[%s14 + $0x8] sm:$0xff]
    %v1928 = vld [vmem:[%s14 + $0x10] sm:$0xff]
    %v1929 = vld [vmem:[%s14 + $0x18] sm:$0xff]
    %v1930 = vld [vmem:[%s14 + $0x20] sm:$0xff]
    %v1931 = vld [vmem:[%s14 + $0x28] sm:$0xff]
    %v1932 = vld [vmem:[%s14 + $0x30] sm:$0xff]
    %v1933 = vld [vmem:[%s14 + $0x38] sm:$0xff]
    %v1934 = vld [vmem:[%s14 + $0x40] sm:$0xff]
    %v1935 = vld [vmem:[%s14 + $0x48] sm:$0xff]
    %v1936 = vld [vmem:[%s14 + $0x50] sm:$0xff]
    %v1937 = vld [vmem:[%s14 + $0x58] sm:$0xff]
    %v1938 = vld [vmem:[%s14 + $0x60] sm:$0xff]
    %v1939 = vld [vmem:[%s14 + $0x68] sm:$0xff]
    %v1940 = vld [vmem:[%s14 + $0x70] sm:$0xff]
    %v1941 = vld [vmem:[%s14 + $0x78] sm:$0xff]
    %v1942 = vld [vmem:[%s15] sm:$0x1]
    %v1944 = vlaneseq
    %v1945 = vshrl.u32 %v1944, 7
    %v1946 = vsub.s32 0, %v1945
    %v1947 = vrot.slane %v1942, %v1946
    %1949 = vmatprep.subr.mxu0 0.0
    %1950 = vmatpush1.msra.mxu0 %v1926
    %1951 = vmatprep.subr.mxu0 0.0
    %1952 = vmatpush1.msra.mxu0 %v1927
    %1953 = vmatprep.subr.mxu0 0.0
    %1954 = vmatpush1.msra.mxu0 %v1928
    %1955 = vmatprep.subr.mxu0 0.0
    %1956 = vmatpush1.msra.mxu0 %v1929
    %1957 = vmatprep.subr.mxu0 0.0
    %1958 = vmatpush1.msra.mxu0 %v1930
    %1959 = vmatprep.subr.mxu0 0.0
    %1960 = vmatpush1.msra.mxu0 %v1931
    %1961 = vmatprep.subr.mxu0 0.0
    %1962 = vmatpush1.msra.mxu0 %v1932
    %1963 = vmatprep.subr.mxu0 0.0
    %1964 = vmatpush1.msra.mxu0 %v1933
    %1965 = vmatprep.subr.mxu0 0.0
    %1966 = vmatpush1.msra.mxu0 %v1934
    %1967 = vmatprep.subr.mxu0 0.0
    %1968 = vmatpush1.msra.mxu0 %v1935
    %1969 = vmatprep.subr.mxu0 0.0
    %1970 = vmatpush1.msra.mxu0 %v1936
    %1971 = vmatprep.subr.mxu0 0.0
    %1972 = vmatpush1.msra.mxu0 %v1937
    %1973 = vmatprep.subr.mxu0 0.0
    %1974 = vmatpush1.msra.mxu0 %v1938
    %1975 = vmatprep.subr.mxu0 0.0
    %1976 = vmatpush1.msra.mxu0 %v1939
    %1977 = vmatprep.subr.mxu0 0.0
    %1978 = vmatpush1.msra.mxu0 %v1940
    %1979 = vmatprep.subr.mxu0 0.0
    %1980 = vmatpush1.msra.mxu0 %v1941
    %1981 = vmatprep.subr.mxu0 0.0
    %1982 = vmatpush1.msra.mxu0 0.0
    %1983 = vmatprep.subr.mxu0 0.0
    %1984 = vmatpush1.msra.mxu0 0.0
    %1985 = vmatprep.subr.mxu0 0.0
    %1986 = vmatpush1.msra.mxu0 0.0
    %1987 = vmatprep.subr.mxu0 0.0
    %1988 = vmatpush1.msra.mxu0 0.0
    %1989 = vmatprep.subr.mxu0 0.0
    %1990 = vmatpush1.msra.mxu0 0.0
    %1991 = vmatprep.subr.mxu0 0.0
    %1992 = vmatpush1.msra.mxu0 0.0
    %1993 = vmatprep.subr.mxu0 0.0
    %1994 = vmatpush1.msra.mxu0 0.0
    %1995 = vmatprep.subr.mxu0 0.0
    %1996 = vmatpush1.msra.mxu0 0.0
    %1997 = vmatprep.subr.mxu0 0.0
    %1998 = vmatpush1.msra.mxu0 0.0
    %1999 = vmatprep.subr.mxu0 0.0
    %2000 = vmatpush1.msra.mxu0 0.0
    %2001 = vmatprep.subr.mxu0 0.0
    %2002 = vmatpush1.msra.mxu0 0.0
    %2003 = vmatprep.subr.mxu0 0.0
    %2004 = vmatpush1.msra.mxu0 0.0
    %2005 = vmatprep.subr.mxu0 0.0
    %2006 = vmatpush1.msra.mxu0 0.0
    %2007 = vmatprep.subr.mxu0 0.0
    %2008 = vmatpush1.msra.mxu0 0.0
    %2009 = vmatprep.subr.mxu0 0.0
    %2010 = vmatpush1.msra.mxu0 0.0
    %2011 = vmatprep.subr.mxu0 0.0
    %2012 = vmatpush1.msra.mxu0 0.0
    %2013 = vmatprep.mubr.f32.mxu0 0.0
    %2014 = vmatmul.mubr.f32.gmra.mrb[0].mxu0 %v1921
    %v2015 = vpop.f32.mrb[0].mxu0
    %v2016 = vadd.f32 %v1947, %v2015
    %v2017 = vpop.f32.mrb[0].mxu0
    %2018 = vmatprep.mubr.f32.mxu0 0.0
    %2019 = vmatmul.mubr.f32.gmra.mrb[0].mxu0 %v1922
    %v2020 = vpop.f32.mrb[0].mxu0
    %v2021 = vadd.f32 %v1947, %v2020
    %v2022 = vpop.f32.mrb[0].mxu0
    %2023 = vmatprep.mubr.f32.mxu0 0.0
    %2024 = vmatmul.mubr.f32.gmra.mrb[0].mxu0 %v1923
    %v2025 = vpop.f32.mrb[0].mxu0
    %v2026 = vadd.f32 %v1947, %v2025
    %v2027 = vpop.f32.mrb[0].mxu0
    %2028 = vmatprep.mubr.f32.mxu0 0.0
    %2029 = vmatmul.mubr.f32.gmra.mrb[0].mxu0 %v1924
    %v2030 = vpop.f32.mrb[0].mxu0
    %v2031 = vadd.f32 %v1947, %v2030
    %v2032 = vpop.f32.mrb[0].mxu0
    %2033 = vmatprep.mubr.f32.mxu0 0.0
    %2034 = vmatmul.mubr.f32.gmra.mrb[0].mxu0 %v1925
    %v2035 = vpop.f32.mrb[0].mxu0
    %v2036 = vadd.f32 %v1947, %v2035
    %v2037 = vpop.f32.mrb[0].mxu0
    %2038 = vdwg.mxu0
    %v2039 = vadd.f32 %v1671, %v2016
    %v2040 = vadd.f32 %v1672, %v2021
    %v2041 = vadd.f32 %v1673, %v2026
    %v2042 = vadd.f32 %v1674, %v2031
    %v2043 = vadd.f32 %v1675, %v2036
    %s2044 = scalar_lea.vmem %s4, 1
    %v2045 = vld [vmem:[%s2044] sm:$0x1]
    %s2046 = scalar_lea.vmem %s5, 1
    %v2047 = vld [vmem:[%s2046] sm:$0x1]
    %v2048 = vsel %vm194, %v2039, 0.0
    %2049 = vadd.xlane.f32.xlu0 %v2048
    %v2050 = vpop.xlane.xlu0 %2049
    %v2051 = vsel %vm194, %v2040, 0.0
    %2052 = vadd.xlane.f32.xlu0 %v2051
    %v2053 = vpop.xlane.xlu0 %2052
    %v2054 = vsel %vm194, %v2041, 0.0
    %2055 = vadd.xlane.f32.xlu0 %v2054
    %v2056 = vpop.xlane.xlu0 %2055
    %v2057 = vsel %vm194, %v2042, 0.0
    %2058 = vadd.xlane.f32.xlu0 %v2057
    %v2059 = vpop.xlane.xlu0 %2058
    %v2060 = vsel %vm207, %v2043, 0.0
    %2061 = vadd.xlane.f32.xlu0 %v2060
    %v2062 = vpop.xlane.xlu0 %2061
    %v2063 = vmul.f32 %v2050, %v211
    %v2064 = vmul.f32 %v2053, %v211
    %v2065 = vmul.f32 %v2056, %v211
    %v2066 = vmul.f32 %v2059, %v211
    %v2067 = vmul.f32 %v2062, %v211
    %v2068 = vsub.f32 %v2039, %v2063
    %v2069 = vsub.f32 %v2040, %v2064
    %v2070 = vsub.f32 %v2041, %v2065
    %v2071 = vsub.f32 %v2042, %v2066
    %v2072 = vsub.f32 %v2043, %v2067
    %v2073 = vmul.f32 %v2068, %v2068
    %v2074 = vmul.f32 %v2069, %v2069
    %v2075 = vmul.f32 %v2070, %v2070
    %v2076 = vmul.f32 %v2071, %v2071
    %v2077 = vmul.f32 %v2072, %v2072
    %v2078 = vsel %vm194, %v2073, 0.0
    %2079 = vadd.xlane.f32.xlu0 %v2078
    %v2080 = vpop.xlane.xlu0 %2079
    %v2081 = vsel %vm194, %v2074, 0.0
    %2082 = vadd.xlane.f32.xlu0 %v2081
    %v2083 = vpop.xlane.xlu0 %2082
    %v2084 = vsel %vm194, %v2075, 0.0
    %2085 = vadd.xlane.f32.xlu0 %v2084
    %v2086 = vpop.xlane.xlu0 %2085
    %v2087 = vsel %vm194, %v2076, 0.0
    %2088 = vadd.xlane.f32.xlu0 %v2087
    %v2089 = vpop.xlane.xlu0 %2088
    %v2090 = vsel %vm207, %v2077, 0.0
    %2091 = vadd.xlane.f32.xlu0 %v2090
    %v2092 = vpop.xlane.xlu0 %2091
    %v2093 = vmul.f32 %v2080, %v211
    %v2094 = vmul.f32 %v2083, %v211
    %v2095 = vmul.f32 %v2086, %v211
    %v2096 = vmul.f32 %v2089, %v211
    %v2097 = vmul.f32 %v2092, %v211
    %v2098 = vadd.f32 %v2093, 1e-05
    %v2099 = vadd.f32 %v2094, 1e-05
    %v2100 = vadd.f32 %v2095, 1e-05
    %v2101 = vadd.f32 %v2096, 1e-05
    %v2102 = vadd.f32 %v2097, 1e-05
    %v2103 = vrsqrt.pop %v2098
    %v2104 = vrsqrt.pop %v2099
    %v2105 = vrsqrt.pop %v2100
    %v2106 = vrsqrt.pop %v2101
    %v2107 = vrsqrt.pop %v2102
    %v2108 = vmul.f32 %v2068, %v2103
    %v2109 = vmul.f32 %v2069, %v2104
    %v2110 = vmul.f32 %v2070, %v2105
    %v2111 = vmul.f32 %v2071, %v2106
    %v2112 = vmul.f32 %v2072, %v2107
    %v2114 = vlaneseq
    %v2115 = vshrl.u32 %v2114, 7
    %v2116 = vsub.s32 0, %v2115
    %v2117 = vrot.slane %v2045, %v2116
    %v2119 = vmul.f32 %v2108, %v2117
    %v2120 = vmul.f32 %v2109, %v2117
    %v2121 = vmul.f32 %v2110, %v2117
    %v2122 = vmul.f32 %v2111, %v2117
    %v2123 = vmul.f32 %v2112, %v2117
    %v2125 = vlaneseq
    %v2126 = vshrl.u32 %v2125, 7
    %v2127 = vsub.s32 0, %v2126
    %v2128 = vrot.slane %v2047, %v2127
    %v2130 = vadd.f32 %v2119, %v2128
    %v2131 = vadd.f32 %v2120, %v2128
    %v2132 = vadd.f32 %v2121, %v2128
    %v2133 = vadd.f32 %v2122, %v2128
    %v2134 = vadd.f32 %v2123, %v2128
    %s2135 = scalar_lea.vmem %s6, 64
    %v2136 = vld [vmem:[%s2135] sm:$0xff]
    %v2137 = vld [vmem:[%s2135 + $0x8] sm:$0xff]
    %v2138 = vld [vmem:[%s2135 + $0x10] sm:$0xff]
    %v2139 = vld [vmem:[%s2135 + $0x18] sm:$0xff]
    %v2141 = vsel %vm194, %v2130, 0
    %v2144 = vsel %vm194, %v2131, 0
    %v2147 = vsel %vm194, %v2132, 0
    %v2150 = vsel %vm194, %v2133, 0
    %v2153 = vsel %vm194, %v2134, 0
    %2155 = vmatprep.subr.mxu0 0.0
    %2156 = vmatpush1.msra.mxu0 %v2136
    %2157 = vmatprep.subr.mxu0 0.0
    %2158 = vmatpush1.msra.mxu0 %v2137
    %2159 = vmatprep.subr.mxu0 0.0
    %2160 = vmatpush1.msra.mxu0 %v2138
    %2161 = vmatprep.subr.mxu0 0.0
    %2162 = vmatpush1.msra.mxu0 %v2139
    %2163 = vmatprep.subr.mxu0 0.0
    %2164 = vmatpush1.msra.mxu0 0.0
    %2165 = vmatprep.subr.mxu0 0.0
    %2166 = vmatpush1.msra.mxu0 0.0
    %2167 = vmatprep.subr.mxu0 0.0
    %2168 = vmatpush1.msra.mxu0 0.0
    %2169 = vmatprep.subr.mxu0 0.0
    %2170 = vmatpush1.msra.mxu0 0.0
    %2171 = vmatprep.subr.mxu0 0.0
    %2172 = vmatpush1.msra.mxu0 0.0
    %2173 = vmatprep.subr.mxu0 0.0
    %2174 = vmatpush1.msra.mxu0 0.0
    %2175 = vmatprep.subr.mxu0 0.0
    %2176 = vmatpush1.msra.mxu0 0.0
    %2177 = vmatprep.subr.mxu0 0.0
    %2178 = vmatpush1.msra.mxu0 0.0
    %2179 = vmatprep.subr.mxu0 0.0
    %2180 = vmatpush1.msra.mxu0 0.0
    %2181 = vmatprep.subr.mxu0 0.0
    %2182 = vmatpush1.msra.mxu0 0.0
    %2183 = vmatprep.subr.mxu0 0.0
    %2184 = vmatpush1.msra.mxu0 0.0
    %2185 = vmatprep.subr.mxu0 0.0
    %2186 = vmatpush1.msra.mxu0 0.0
    %2187 = vmatprep.subr.mxu0 0.0
    %2188 = vmatpush1.msra.mxu0 0.0
    %2189 = vmatprep.subr.mxu0 0.0
    %2190 = vmatpush1.msra.mxu0 0.0
    %2191 = vmatprep.subr.mxu0 0.0
    %2192 = vmatpush1.msra.mxu0 0.0
    %2193 = vmatprep.subr.mxu0 0.0
    %2194 = vmatpush1.msra.mxu0 0.0
    %2195 = vmatprep.subr.mxu0 0.0
    %2196 = vmatpush1.msra.mxu0 0.0
    %2197 = vmatprep.subr.mxu0 0.0
    %2198 = vmatpush1.msra.mxu0 0.0
    %2199 = vmatprep.subr.mxu0 0.0
    %2200 = vmatpush1.msra.mxu0 0.0
    %2201 = vmatprep.subr.mxu0 0.0
    %2202 = vmatpush1.msra.mxu0 0.0
    %2203 = vmatprep.subr.mxu0 0.0
    %2204 = vmatpush1.msra.mxu0 0.0
    %2205 = vmatprep.subr.mxu0 0.0
    %2206 = vmatpush1.msra.mxu0 0.0
    %2207 = vmatprep.subr.mxu0 0.0
    %2208 = vmatpush1.msra.mxu0 0.0
    %2209 = vmatprep.subr.mxu0 0.0
    %2210 = vmatpush1.msra.mxu0 0.0
    %2211 = vmatprep.subr.mxu0 0.0
    %2212 = vmatpush1.msra.mxu0 0.0
    %2213 = vmatprep.subr.mxu0 0.0
    %2214 = vmatpush1.msra.mxu0 0.0
    %2215 = vmatprep.subr.mxu0 0.0
    %2216 = vmatpush1.msra.mxu0 0.0
    %2217 = vmatprep.subr.mxu0 0.0
    %2218 = vmatpush1.msra.mxu0 0.0
    %2219 = vmatprep.mubr.f32.mxu0 0.0
    %2220 = vmatmul.mubr.f32.gmra.mrb[0].mxu0 %v2141
    %v2221 = vpop.f32.mrb[0].mxu0
    %v2222 = vadd.f32 0.0, %v2221
    %v2223 = vpop.f32.mrb[0].mxu0
    %2224 = vmatprep.mubr.f32.mxu0 0.0
    %2225 = vmatmul.mubr.f32.gmra.mrb[0].mxu0 %v2144
    %v2226 = vpop.f32.mrb[0].mxu0
    %v2227 = vadd.f32 0.0, %v2226
    %v2228 = vpop.f32.mrb[0].mxu0
    %2229 = vmatprep.mubr.f32.mxu0 0.0
    %2230 = vmatmul.mubr.f32.gmra.mrb[0].mxu0 %v2147
    %v2231 = vpop.f32.mrb[0].mxu0
    %v2232 = vadd.f32 0.0, %v2231
    %v2233 = vpop.f32.mrb[0].mxu0
    %2234 = vmatprep.mubr.f32.mxu0 0.0
    %2235 = vmatmul.mubr.f32.gmra.mrb[0].mxu0 %v2150
    %v2236 = vpop.f32.mrb[0].mxu0
    %v2237 = vadd.f32 0.0, %v2236
    %v2238 = vpop.f32.mrb[0].mxu0
    %2239 = vmatprep.mubr.f32.mxu0 0.0
    %2240 = vmatmul.mubr.f32.gmra.mrb[0].mxu0 %v2153
    %v2241 = vpop.f32.mrb[0].mxu0
    %v2242 = vadd.f32 0.0, %v2241
    %v2243 = vpop.f32.mrb[0].mxu0
    %2244 = vdwg.mxu0
    %s2245 = scalar_lea.vmem %s7, 64
    %v2246 = vld [vmem:[%s2245] sm:$0xff]
    %v2247 = vld [vmem:[%s2245 + $0x8] sm:$0xff]
    %v2248 = vld [vmem:[%s2245 + $0x10] sm:$0xff]
    %v2249 = vld [vmem:[%s2245 + $0x18] sm:$0xff]
    %2250 = vmatprep.subr.mxu0 0.0
    %2251 = vmatpush1.msra.mxu0 %v2246
    %2252 = vmatprep.subr.mxu0 0.0
    %2253 = vmatpush1.msra.mxu0 %v2247
    %2254 = vmatprep.subr.mxu0 0.0
    %2255 = vmatpush1.msra.mxu0 %v2248
    %2256 = vmatprep.subr.mxu0 0.0
    %2257 = vmatpush1.msra.mxu0 %v2249
    %2258 = vmatprep.subr.mxu0 0.0
    %2259 = vmatpush1.msra.mxu0 0.0
    %2260 = vmatprep.subr.mxu0 0.0
    %2261 = vmatpush1.msra.mxu0 0.0
    %2262 = vmatprep.subr.mxu0 0.0
    %2263 = vmatpush1.msra.mxu0 0.0
    %2264 = vmatprep.subr.mxu0 0.0
    %2265 = vmatpush1.msra.mxu0 0.0
    %2266 = vmatprep.subr.mxu0 0.0
    %2267 = vmatpush1.msra.mxu0 0.0
    %2268 = vmatprep.subr.mxu0 0.0
    %2269 = vmatpush1.msra.mxu0 0.0
    %2270 = vmatprep.subr.mxu0 0.0
    %2271 = vmatpush1.msra.mxu0 0.0
    %2272 = vmatprep.subr.mxu0 0.0
    %2273 = vmatpush1.msra.mxu0 0.0
    %2274 = vmatprep.subr.mxu0 0.0
    %2275 = vmatpush1.msra.mxu0 0.0
    %2276 = vmatprep.subr.mxu0 0.0
    %2277 = vmatpush1.msra.mxu0 0.0
    %2278 = vmatprep.subr.mxu0 0.0
    %2279 = vmatpush1.msra.mxu0 0.0
    %2280 = vmatprep.subr.mxu0 0.0
    %2281 = vmatpush1.msra.mxu0 0.0
    %2282 = vmatprep.subr.mxu0 0.0
    %2283 = vmatpush1.msra.mxu0 0.0
    %2284 = vmatprep.subr.mxu0 0.0
    %2285 = vmatpush1.msra.mxu0 0.0
    %2286 = vmatprep.subr.mxu0 0.0
    %2287 = vmatpush1.msra.mxu0 0.0
    %2288 = vmatprep.subr.mxu0 0.0
    %2289 = vmatpush1.msra.mxu0 0.0
    %2290 = vmatprep.subr.mxu0 0.0
    %2291 = vmatpush1.msra.mxu0 0.0
    %2292 = vmatprep.subr.mxu0 0.0
    %2293 = vmatpush1.msra.mxu0 0.0
    %2294 = vmatprep.subr.mxu0 0.0
    %2295 = vmatpush1.msra.mxu0 0.0
    %2296 = vmatprep.subr.mxu0 0.0
    %2297 = vmatpush1.msra.mxu0 0.0
    %2298 = vmatprep.subr.mxu0 0.0
    %2299 = vmatpush1.msra.mxu0 0.0
    %2300 = vmatprep.subr.mxu0 0.0
    %2301 = vmatpush1.msra.mxu0 0.0
    %2302 = vmatprep.subr.mxu0 0.0
    %2303 = vmatpush1.msra.mxu0 0.0
    %2304 = vmatprep.subr.mxu0 0.0
    %2305 = vmatpush1.msra.mxu0 0.0
    %2306 = vmatprep.subr.mxu0 0.0
    %2307 = vmatpush1.msra.mxu0 0.0
    %2308 = vmatprep.subr.mxu0 0.0
    %2309 = vmatpush1.msra.mxu0 0.0
    %2310 = vmatprep.subr.mxu0 0.0
    %2311 = vmatpush1.msra.mxu0 0.0
    %2312 = vmatprep.subr.mxu0 0.0
    %2313 = vmatpush1.msra.mxu0 0.0
    %2314 = vmatprep.mubr.f32.mxu0 0.0
    %2315 = vmatmul.mubr.f32.gmra.mrb[0].mxu0 %v2141
    %v2316 = vpop.f32.mrb[0].mxu0
    %v2317 = vadd.f32 0.0, %v2316
    %v2318 = vpop.f32.mrb[0].mxu0
    %2319 = vmatprep.mubr.f32.mxu0 0.0
    %2320 = vmatmul.mubr.f32.gmra.mrb[0].mxu0 %v2144
    %v2321 = vpop.f32.mrb[0].mxu0
    %v2322 = vadd.f32 0.0, %v2321
    %v2323 = vpop.f32.mrb[0].mxu0
    %2324 = vmatprep.mubr.f32.mxu0 0.0
    %2325 = vmatmul.mubr.f32.gmra.mrb[0].mxu0 %v2147
    %v2326 = vpop.f32.mrb[0].mxu0
    %v2327 = vadd.f32 0.0, %v2326
    %v2328 = vpop.f32.mrb[0].mxu0
    %2329 = vmatprep.mubr.f32.mxu0 0.0
    %2330 = vmatmul.mubr.f32.gmra.mrb[0].mxu0 %v2150
    %v2331 = vpop.f32.mrb[0].mxu0
    %v2332 = vadd.f32 0.0, %v2331
    %v2333 = vpop.f32.mrb[0].mxu0
    %2334 = vmatprep.mubr.f32.mxu0 0.0
    %2335 = vmatmul.mubr.f32.gmra.mrb[0].mxu0 %v2153
    %v2336 = vpop.f32.mrb[0].mxu0
    %v2337 = vadd.f32 0.0, %v2336
    %v2338 = vpop.f32.mrb[0].mxu0
    %2339 = vdwg.mxu0
    %s2340 = scalar_lea.vmem %s8, 64
    %v2341 = vld [vmem:[%s2340] sm:$0xff]
    %v2342 = vld [vmem:[%s2340 + $0x8] sm:$0xff]
    %v2343 = vld [vmem:[%s2340 + $0x10] sm:$0xff]
    %v2344 = vld [vmem:[%s2340 + $0x18] sm:$0xff]
    %2345 = vmatprep.subr.mxu0 0.0
    %2346 = vmatpush1.msra.mxu0 %v2341
    %2347 = vmatprep.subr.mxu0 0.0
    %2348 = vmatpush1.msra.mxu0 %v2342
    %2349 = vmatprep.subr.mxu0 0.0
    %2350 = vmatpush1.msra.mxu0 %v2343
    %2351 = vmatprep.subr.mxu0 0.0
    %2352 = vmatpush1.msra.mxu0 %v2344
    %2353 = vmatprep.subr.mxu0 0.0
    %2354 = vmatpush1.msra.mxu0 0.0
    %2355 = vmatprep.subr.mxu0 0.0
    %2356 = vmatpush1.msra.mxu0 0.0
    %2357 = vmatprep.subr.mxu0 0.0
    %2358 = vmatpush1.msra.mxu0 0.0
    %2359 = vmatprep.subr.mxu0 0.0
    %2360 = vmatpush1.msra.mxu0 0.0
    %2361 = vmatprep.subr.mxu0 0.0
    %2362 = vmatpush1.msra.mxu0 0.0
    %2363 = vmatprep.subr.mxu0 0.0
    %2364 = vmatpush1.msra.mxu0 0.0
    %2365 = vmatprep.subr.mxu0 0.0
    %2366 = vmatpush1.msra.mxu0 0.0
    %2367 = vmatprep.subr.mxu0 0.0
    %2368 = vmatpush1.msra.mxu0 0.0
    %2369 = vmatprep.subr.mxu0 0.0
    %2370 = vmatpush1.msra.mxu0 0.0
    %2371 = vmatprep.subr.mxu0 0.0
    %2372 = vmatpush1.msra.mxu0 0.0
    %2373 = vmatprep.subr.mxu0 0.0
    %2374 = vmatpush1.msra.mxu0 0.0
    %2375 = vmatprep.subr.mxu0 0.0
    %2376 = vmatpush1.msra.mxu0 0.0
    %2377 = vmatprep.subr.mxu0 0.0
    %2378 = vmatpush1.msra.mxu0 0.0
    %2379 = vmatprep.subr.mxu0 0.0
    %2380 = vmatpush1.msra.mxu0 0.0
    %2381 = vmatprep.subr.mxu0 0.0
    %2382 = vmatpush1.msra.mxu0 0.0
    %2383 = vmatprep.subr.mxu0 0.0
    %2384 = vmatpush1.msra.mxu0 0.0
    %2385 = vmatprep.subr.mxu0 0.0
    %2386 = vmatpush1.msra.mxu0 0.0
    %2387 = vmatprep.subr.mxu0 0.0
    %2388 = vmatpush1.msra.mxu0 0.0
    %2389 = vmatprep.subr.mxu0 0.0
    %2390 = vmatpush1.msra.mxu0 0.0
    %2391 = vmatprep.subr.mxu0 0.0
    %2392 = vmatpush1.msra.mxu0 0.0
    %2393 = vmatprep.subr.mxu0 0.0
    %2394 = vmatpush1.msra.mxu0 0.0
    %2395 = vmatprep.subr.mxu0 0.0
    %2396 = vmatpush1.msra.mxu0 0.0
    %2397 = vmatprep.subr.mxu0 0.0
    %2398 = vmatpush1.msra.mxu0 0.0
    %2399 = vmatprep.subr.mxu0 0.0
    %2400 = vmatpush1.msra.mxu0 0.0
    %2401 = vmatprep.subr.mxu0 0.0
    %2402 = vmatpush1.msra.mxu0 0.0
    %2403 = vmatprep.subr.mxu0 0.0
    %2404 = vmatpush1.msra.mxu0 0.0
    %2405 = vmatprep.subr.mxu0 0.0
    %2406 = vmatpush1.msra.mxu0 0.0
    %2407 = vmatprep.subr.mxu0 0.0
    %2408 = vmatpush1.msra.mxu0 0.0
    %2409 = vmatprep.mubr.f32.mxu0 0.0
    %2410 = vmatmul.mubr.f32.gmra.mrb[0].mxu0 %v2141
    %v2411 = vpop.f32.mrb[0].mxu0
    %v2412 = vadd.f32 0.0, %v2411
    %v2413 = vpop.f32.mrb[0].mxu0
    %2414 = vmatprep.mubr.f32.mxu0 0.0
    %2415 = vmatmul.mubr.f32.gmra.mrb[0].mxu0 %v2144
    %v2416 = vpop.f32.mrb[0].mxu0
    %v2417 = vadd.f32 0.0, %v2416
    %v2418 = vpop.f32.mrb[0].mxu0
    %2419 = vmatprep.mubr.f32.mxu0 0.0
    %2420 = vmatmul.mubr.f32.gmra.mrb[0].mxu0 %v2147
    %v2421 = vpop.f32.mrb[0].mxu0
    %v2422 = vadd.f32 0.0, %v2421
    %v2423 = vpop.f32.mrb[0].mxu0
    %2424 = vmatprep.mubr.f32.mxu0 0.0
    %2425 = vmatmul.mubr.f32.gmra.mrb[0].mxu0 %v2150
    %v2426 = vpop.f32.mrb[0].mxu0
    %v2427 = vadd.f32 0.0, %v2426
    %v2428 = vpop.f32.mrb[0].mxu0
    %2429 = vmatprep.mubr.f32.mxu0 0.0
    %2430 = vmatmul.mubr.f32.gmra.mrb[0].mxu0 %v2153
    %v2431 = vpop.f32.mrb[0].mxu0
    %v2432 = vadd.f32 0.0, %v2431
    %v2433 = vpop.f32.mrb[0].mxu0
    %2434 = vdwg.mxu0
    %v2436 = vsel %vm581, %v2222, 0
    %v2439 = vsel %vm581, %v2227, 0
    %v2442 = vsel %vm581, %v2232, 0
    %v2445 = vsel %vm581, %v2237, 0
    %v2448 = vsel %vm581, %v2242, 0
    %v2451 = vsel %vm581, %v2317, 0
    %v2454 = vsel %vm581, %v2322, 0
    %v2457 = vsel %vm581, %v2327, 0
    %v2460 = vsel %vm581, %v2332, 0
    %v2463 = vsel %vm581, %v2337, 0
    %2465 = vmatprep.subr.mxu0 0.0
    %2466 = vmatpush1.xpose.msra.mxu0 %v2451
    %2467 = vmatprep.subr.mxu0 0.0
    %2468 = vmatpush1.xpose.msra.mxu0 %v2454
    %2469 = vmatprep.subr.mxu0 0.0
    %2470 = vmatpush1.xpose.msra.mxu0 %v2457
    %2471 = vmatprep.subr.mxu0 0.0
    %2472 = vmatpush1.xpose.msra.mxu0 %v2460
    %2473 = vmatprep.subr.mxu0 0.0
    %2474 = vmatpush1.xpose.msra.mxu0 %v2463
    %2475 = vmatprep.subr.mxu0 0.0
    %2476 = vmatpush1.xpose.msra.mxu0 0.0
    %2477 = vmatprep.subr.mxu0 0.0
    %2478 = vmatpush1.xpose.msra.mxu0 0.0
    %2479 = vmatprep.subr.mxu0 0.0
    %2480 = vmatpush1.xpose.msra.mxu0 0.0
    %2481 = vmatprep.subr.mxu0 0.0
    %2482 = vmatpush1.xpose.msra.mxu0 0.0
    %2483 = vmatprep.subr.mxu0 0.0
    %2484 = vmatpush1.xpose.msra.mxu0 0.0
    %2485 = vmatprep.subr.mxu0 0.0
    %2486 = vmatpush1.xpose.msra.mxu0 0.0
    %2487 = vmatprep.subr.mxu0 0.0
    %2488 = vmatpush1.xpose.msra.mxu0 0.0
    %2489 = vmatprep.subr.mxu0 0.0
    %2490 = vmatpush1.xpose.msra.mxu0 0.0
    %2491 = vmatprep.subr.mxu0 0.0
    %2492 = vmatpush1.xpose.msra.mxu0 0.0
    %2493 = vmatprep.subr.mxu0 0.0
    %2494 = vmatpush1.xpose.msra.mxu0 0.0
    %2495 = vmatprep.subr.mxu0 0.0
    %2496 = vmatpush1.xpose.msra.mxu0 0.0
    %2497 = vmatprep.subr.mxu0 0.0
    %2498 = vmatpush1.xpose.msra.mxu0 0.0
    %2499 = vmatprep.subr.mxu0 0.0
    %2500 = vmatpush1.xpose.msra.mxu0 0.0
    %2501 = vmatprep.subr.mxu0 0.0
    %2502 = vmatpush1.xpose.msra.mxu0 0.0
    %2503 = vmatprep.subr.mxu0 0.0
    %2504 = vmatpush1.xpose.msra.mxu0 0.0
    %2505 = vmatprep.subr.mxu0 0.0
    %2506 = vmatpush1.xpose.msra.mxu0 0.0
    %2507 = vmatprep.subr.mxu0 0.0
    %2508 = vmatpush1.xpose.msra.mxu0 0.0
    %2509 = vmatprep.subr.mxu0 0.0
    %2510 = vmatpush1.xpose.msra.mxu0 0.0
    %2511 = vmatprep.subr.mxu0 0.0
    %2512 = vmatpush1.xpose.msra.mxu0 0.0
    %2513 = vmatprep.subr.mxu0 0.0
    %2514 = vmatpush1.xpose.msra.mxu0 0.0
    %2515 = vmatprep.subr.mxu0 0.0
    %2516 = vmatpush1.xpose.msra.mxu0 0.0
    %2517 = vmatprep.subr.mxu0 0.0
    %2518 = vmatpush1.xpose.msra.mxu0 0.0
    %2519 = vmatprep.subr.mxu0 0.0
    %2520 = vmatpush1.xpose.msra.mxu0 0.0
    %2521 = vmatprep.subr.mxu0 0.0
    %2522 = vmatpush1.xpose.msra.mxu0 0.0
    %2523 = vmatprep.subr.mxu0 0.0
    %2524 = vmatpush1.xpose.msra.mxu0 0.0
    %2525 = vmatprep.subr.mxu0 0.0
    %2526 = vmatpush1.xpose.msra.mxu0 0.0
    %2527 = vmatprep.subr.mxu0 0.0
    %2528 = vmatpush1.xpose.msra.mxu0 0.0
    %2529 = vmatprep.mubr.f32.mxu0 0.0
    %2530 = vmatmul.mubr.f32.gmra.mrb[0].mxu0 %v2436
    %v2531 = vpop.f32.mrb[0].mxu0
    %v2532 = vadd.f32 0.0, %v2531
    %v2533 = vpop.f32.mrb[0].mxu0
    %2534 = vmatprep.mubr.f32.mxu0 0.0
    %2535 = vmatmul.mubr.f32.gmra.mrb[0].mxu0 %v2439
    %v2536 = vpop.f32.mrb[0].mxu0
    %v2537 = vadd.f32 0.0, %v2536
    %v2538 = vpop.f32.mrb[0].mxu0
    %2539 = vmatprep.mubr.f32.mxu0 0.0
    %2540 = vmatmul.mubr.f32.gmra.mrb[0].mxu0 %v2442
    %v2541 = vpop.f32.mrb[0].mxu0
    %v2542 = vadd.f32 0.0, %v2541
    %v2543 = vpop.f32.mrb[0].mxu0
    %2544 = vmatprep.mubr.f32.mxu0 0.0
    %2545 = vmatmul.mubr.f32.gmra.mrb[0].mxu0 %v2445
    %v2546 = vpop.f32.mrb[0].mxu0
    %v2547 = vadd.f32 0.0, %v2546
    %v2548 = vpop.f32.mrb[0].mxu0
    %2549 = vmatprep.mubr.f32.mxu0 0.0
    %2550 = vmatmul.mubr.f32.gmra.mrb[0].mxu0 %v2448
    %v2551 = vpop.f32.mrb[0].mxu0
    %v2552 = vadd.f32 0.0, %v2551
    %v2553 = vpop.f32.mrb[0].mxu0
    %2554 = vdwg.mxu0
    %v2555 = vmul.f32 %v2532, 0.25
    %v2556 = vmul.f32 %v2537, 0.25
    %v2557 = vmul.f32 %v2542, 0.25
    %v2558 = vmul.f32 %v2547, 0.25
    %v2559 = vmul.f32 %v2552, 0.25
    %v2560 = vadd.f32 %v2555, %v187
    %v2561 = vadd.f32 %v2556, %v188
    %v2562 = vadd.f32 %v2557, %v189
    %v2563 = vadd.f32 %v2558, %v190
    %v2564 = vadd.f32 %v2559, %v191
    %v2565 = vsel %vm712, %v2560, -inf
    %2566 = vmax.xlane.f32.xlu0 %v2565
    %v2567 = vpop.xlane.xlu0 %2566
    %v2568 = vsel %vm712, %v2561, -inf
    %2569 = vmax.xlane.f32.xlu0 %v2568
    %v2570 = vpop.xlane.xlu0 %2569
    %v2571 = vsel %vm712, %v2562, -inf
    %2572 = vmax.xlane.f32.xlu0 %v2571
    %v2573 = vpop.xlane.xlu0 %2572
    %v2574 = vsel %vm712, %v2563, -inf
    %2575 = vmax.xlane.f32.xlu0 %v2574
    %v2576 = vpop.xlane.xlu0 %2575
    %v2577 = vsel %vm725, %v2564, -inf
    %2578 = vmax.xlane.f32.xlu0 %v2577
    %v2579 = vpop.xlane.xlu0 %2578
    %v2580 = vsub.f32 %v2560, %v2567
    %v2581 = vsub.f32 %v2561, %v2570
    %v2582 = vsub.f32 %v2562, %v2573
    %v2583 = vsub.f32 %v2563, %v2576
    %v2584 = vsub.f32 %v2564, %v2579
    %v2585 = vmul.f32 %v2580, 1.442695
    %v2586 = vpow.pop %v2585
    %v2587 = vmul.f32 %v2581, 1.442695
    %v2588 = vpow.pop %v2587
    %v2589 = vmul.f32 %v2582, 1.442695
    %v2590 = vpow.pop %v2589
    %v2591 = vmul.f32 %v2583, 1.442695
    %v2592 = vpow.pop %v2591
    %v2593 = vmul.f32 %v2584, 1.442695
    %v2594 = vpow.pop %v2593
    %v2595 = vsel %vm712, %v2586, 0.0
    %2596 = vadd.xlane.f32.xlu0 %v2595
    %v2597 = vpop.xlane.xlu0 %2596
    %v2598 = vsel %vm712, %v2588, 0.0
    %2599 = vadd.xlane.f32.xlu0 %v2598
    %v2600 = vpop.xlane.xlu0 %2599
    %v2601 = vsel %vm712, %v2590, 0.0
    %2602 = vadd.xlane.f32.xlu0 %v2601
    %v2603 = vpop.xlane.xlu0 %2602
    %v2604 = vsel %vm712, %v2592, 0.0
    %2605 = vadd.xlane.f32.xlu0 %v2604
    %v2606 = vpop.xlane.xlu0 %2605
    %v2607 = vsel %vm725, %v2594, 0.0
    %2608 = vadd.xlane.f32.xlu0 %v2607
    %v2609 = vpop.xlane.xlu0 %2608
    %v2610 = vrcp.pop %v2597
    %v2611 = vrcp.pop %v2600
    %v2612 = vrcp.pop %v2603
    %v2613 = vrcp.pop %v2606
    %v2614 = vrcp.pop %v2609
    %v2615 = vmul.f32 %v2586, %v2610
    %v2616 = vmul.f32 %v2588, %v2611
    %v2617 = vmul.f32 %v2590, %v2612
    %v2618 = vmul.f32 %v2592, %v2613
    %v2619 = vmul.f32 %v2594, %v2614
    %v2621 = vsel %vm712, %v2615, 0
    %v2624 = vsel %vm712, %v2616, 0
    %v2627 = vsel %vm712, %v2617, 0
    %v2630 = vsel %vm712, %v2618, 0
    %v2633 = vsel %vm712, %v2619, 0
    %v2636 = vsel %vm784, %v2432, 0
    %2638 = vmatprep.subr.mxu0 0.0
    %2639 = vmatpush1.msra.mxu0 %v2412
    %2640 = vmatprep.subr.mxu0 0.0
    %2641 = vmatpush1.msra.mxu0 %v2417
    %2642 = vmatprep.subr.mxu0 0.0
    %2643 = vmatpush1.msra.mxu0 %v2422
    %2644 = vmatprep.subr.mxu0 0.0
    %2645 = vmatpush1.msra.mxu0 %v2427
    %2646 = vmatprep.subr.mxu0 0.0
    %2647 = vmatpush1.msra.mxu0 %v2636
    %2648 = vmatprep.subr.mxu0 0.0
    %2649 = vmatpush1.msra.mxu0 0.0
    %2650 = vmatprep.subr.mxu0 0.0
    %2651 = vmatpush1.msra.mxu0 0.0
    %2652 = vmatprep.subr.mxu0 0.0
    %2653 = vmatpush1.msra.mxu0 0.0
    %2654 = vmatprep.subr.mxu0 0.0
    %2655 = vmatpush1.msra.mxu0 0.0
    %2656 = vmatprep.subr.mxu0 0.0
    %2657 = vmatpush1.msra.mxu0 0.0
    %2658 = vmatprep.subr.mxu0 0.0
    %2659 = vmatpush1.msra.mxu0 0.0
    %2660 = vmatprep.subr.mxu0 0.0
    %2661 = vmatpush1.msra.mxu0 0.0
    %2662 = vmatprep.subr.mxu0 0.0
    %2663 = vmatpush1.msra.mxu0 0.0
    %2664 = vmatprep.subr.mxu0 0.0
    %2665 = vmatpush1.msra.mxu0 0.0
    %2666 = vmatprep.subr.mxu0 0.0
    %2667 = vmatpush1.msra.mxu0 0.0
    %2668 = vmatprep.subr.mxu0 0.0
    %2669 = vmatpush1.msra.mxu0 0.0
    %2670 = vmatprep.subr.mxu0 0.0
    %2671 = vmatpush1.msra.mxu0 0.0
    %2672 = vmatprep.subr.mxu0 0.0
    %2673 = vmatpush1.msra.mxu0 0.0
    %2674 = vmatprep.subr.mxu0 0.0
    %2675 = vmatpush1.msra.mxu0 0.0
    %2676 = vmatprep.subr.mxu0 0.0
    %2677 = vmatpush1.msra.mxu0 0.0
    %2678 = vmatprep.subr.mxu0 0.0
    %2679 = vmatpush1.msra.mxu0 0.0
    %2680 = vmatprep.subr.mxu0 0.0
    %2681 = vmatpush1.msra.mxu0 0.0
    %2682 = vmatprep.subr.mxu0 0.0
    %2683 = vmatpush1.msra.mxu0 0.0
    %2684 = vmatprep.subr.mxu0 0.0
    %2685 = vmatpush1.msra.mxu0 0.0
    %2686 = vmatprep.subr.mxu0 0.0
    %2687 = vmatpush1.msra.mxu0 0.0
    %2688 = vmatprep.subr.mxu0 0.0
    %2689 = vmatpush1.msra.mxu0 0.0
    %2690 = vmatprep.subr.mxu0 0.0
    %2691 = vmatpush1.msra.mxu0 0.0
    %2692 = vmatprep.subr.mxu0 0.0
    %2693 = vmatpush1.msra.mxu0 0.0
    %2694 = vmatprep.subr.mxu0 0.0
    %2695 = vmatpush1.msra.mxu0 0.0
    %2696 = vmatprep.subr.mxu0 0.0
    %2697 = vmatpush1.msra.mxu0 0.0
    %2698 = vmatprep.subr.mxu0 0.0
    %2699 = vmatpush1.msra.mxu0 0.0
    %2700 = vmatprep.subr.mxu0 0.0
    %2701 = vmatpush1.msra.mxu0 0.0
    %2702 = vmatprep.mubr.f32.mxu0 0.0
    %2703 = vmatmul.mubr.f32.gmra.mrb[0].mxu0 %v2621
    %v2704 = vpop.f32.mrb[0].mxu0
    %v2705 = vadd.f32 0.0, %v2704
    %v2706 = vpop.f32.mrb[0].mxu0
    %2707 = vmatprep.mubr.f32.mxu0 0.0
    %2708 = vmatmul.mubr.f32.gmra.mrb[0].mxu0 %v2624
    %v2709 = vpop.f32.mrb[0].mxu0
    %v2710 = vadd.f32 0.0, %v2709
    %v2711 = vpop.f32.mrb[0].mxu0
    %2712 = vmatprep.mubr.f32.mxu0 0.0
    %2713 = vmatmul.mubr.f32.gmra.mrb[0].mxu0 %v2627
    %v2714 = vpop.f32.mrb[0].mxu0
    %v2715 = vadd.f32 0.0, %v2714
    %v2716 = vpop.f32.mrb[0].mxu0
    %2717 = vmatprep.mubr.f32.mxu0 0.0
    %2718 = vmatmul.mubr.f32.gmra.mrb[0].mxu0 %v2630
    %v2719 = vpop.f32.mrb[0].mxu0
    %v2720 = vadd.f32 0.0, %v2719
    %v2721 = vpop.f32.mrb[0].mxu0
    %2722 = vmatprep.mubr.f32.mxu0 0.0
    %2723 = vmatmul.mubr.f32.gmra.mrb[0].mxu0 %v2633
    %v2724 = vpop.f32.mrb[0].mxu0
    %v2725 = vadd.f32 0.0, %v2724
    %v2726 = vpop.f32.mrb[0].mxu0
    %2727 = vdwg.mxu0
    %s2728 = scalar_lea.vmem %s9, 32
    %v2729 = vld [vmem:[%s2728] sm:$0xff]
    %v2730 = vld [vmem:[%s2728 + $0x8] sm:$0xff]
    %s2731 = scalar_lea.vmem %s6, 96
    %v2732 = vld [vmem:[%s2731] sm:$0xff]
    %v2733 = vld [vmem:[%s2731 + $0x8] sm:$0xff]
    %v2734 = vld [vmem:[%s2731 + $0x10] sm:$0xff]
    %v2735 = vld [vmem:[%s2731 + $0x18] sm:$0xff]
    %2736 = vmatprep.subr.mxu0 0.0
    %2737 = vmatpush1.msra.mxu0 %v2732
    %2738 = vmatprep.subr.mxu0 0.0
    %2739 = vmatpush1.msra.mxu0 %v2733
    %2740 = vmatprep.subr.mxu0 0.0
    %2741 = vmatpush1.msra.mxu0 %v2734
    %2742 = vmatprep.subr.mxu0 0.0
    %2743 = vmatpush1.msra.mxu0 %v2735
    %2744 = vmatprep.subr.mxu0 0.0
    %2745 = vmatpush1.msra.mxu0 0.0
    %2746 = vmatprep.subr.mxu0 0.0
    %2747 = vmatpush1.msra.mxu0 0.0
    %2748 = vmatprep.subr.mxu0 0.0
    %2749 = vmatpush1.msra.mxu0 0.0
    %2750 = vmatprep.subr.mxu0 0.0
    %2751 = vmatpush1.msra.mxu0 0.0
    %2752 = vmatprep.subr.mxu0 0.0
    %2753 = vmatpush1.msra.mxu0 0.0
    %2754 = vmatprep.subr.mxu0 0.0
    %2755 = vmatpush1.msra.mxu0 0.0
    %2756 = vmatprep.subr.mxu0 0.0
    %2757 = vmatpush1.msra.mxu0 0.0
    %2758 = vmatprep.subr.mxu0 0.0
    %2759 = vmatpush1.msra.mxu0 0.0
    %2760 = vmatprep.subr.mxu0 0.0
    %2761 = vmatpush1.msra.mxu0 0.0
    %2762 = vmatprep.subr.mxu0 0.0
    %2763 = vmatpush1.msra.mxu0 0.0
    %2764 = vmatprep.subr.mxu0 0.0
    %2765 = vmatpush1.msra.mxu0 0.0
    %2766 = vmatprep.subr.mxu0 0.0
    %2767 = vmatpush1.msra.mxu0 0.0
    %2768 = vmatprep.subr.mxu0 0.0
    %2769 = vmatpush1.msra.mxu0 0.0
    %2770 = vmatprep.subr.mxu0 0.0
    %2771 = vmatpush1.msra.mxu0 0.0
    %2772 = vmatprep.subr.mxu0 0.0
    %2773 = vmatpush1.msra.mxu0 0.0
    %2774 = vmatprep.subr.mxu0 0.0
    %2775 = vmatpush1.msra.mxu0 0.0
    %2776 = vmatprep.subr.mxu0 0.0
    %2777 = vmatpush1.msra.mxu0 0.0
    %2778 = vmatprep.subr.mxu0 0.0
    %2779 = vmatpush1.msra.mxu0 0.0
    %2780 = vmatprep.subr.mxu0 0.0
    %2781 = vmatpush1.msra.mxu0 0.0
    %2782 = vmatprep.subr.mxu0 0.0
    %2783 = vmatpush1.msra.mxu0 0.0
    %2784 = vmatprep.subr.mxu0 0.0
    %2785 = vmatpush1.msra.mxu0 0.0
    %2786 = vmatprep.subr.mxu0 0.0
    %2787 = vmatpush1.msra.mxu0 0.0
    %2788 = vmatprep.subr.mxu0 0.0
    %2789 = vmatpush1.msra.mxu0 0.0
    %2790 = vmatprep.subr.mxu0 0.0
    %2791 = vmatpush1.msra.mxu0 0.0
    %2792 = vmatprep.subr.mxu0 0.0
    %2793 = vmatpush1.msra.mxu0 0.0
    %2794 = vmatprep.subr.mxu0 0.0
    %2795 = vmatpush1.msra.mxu0 0.0
    %2796 = vmatprep.subr.mxu0 0.0
    %2797 = vmatpush1.msra.mxu0 0.0
    %2798 = vmatprep.subr.mxu0 0.0
    %2799 = vmatpush1.msra.mxu0 0.0
    %2800 = vmatprep.mubr.f32.mxu0 0.0
    %2801 = vmatmul.mubr.f32.gmra.mrb[0].mxu0 %v2141
    %v2802 = vpop.f32.mrb[0].mxu0
    %v2803 = vadd.f32 0.0, %v2802
    %v2804 = vpop.f32.mrb[0].mxu0
    %2805 = vmatprep.mubr.f32.mxu0 0.0
    %2806 = vmatmul.mubr.f32.gmra.mrb[0].mxu0 %v2144
    %v2807 = vpop.f32.mrb[0].mxu0
    %v2808 = vadd.f32 0.0, %v2807
    %v2809 = vpop.f32.mrb[0].mxu0
    %2810 = vmatprep.mubr.f32.mxu0 0.0
    %2811 = vmatmul.mubr.f32.gmra.mrb[0].mxu0 %v2147
    %v2812 = vpop.f32.mrb[0].mxu0
    %v2813 = vadd.f32 0.0, %v2812
    %v2814 = vpop.f32.mrb[0].mxu0
    %2815 = vmatprep.mubr.f32.mxu0 0.0
    %2816 = vmatmul.mubr.f32.gmra.mrb[0].mxu0 %v2150
    %v2817 = vpop.f32.mrb[0].mxu0
    %v2818 = vadd.f32 0.0, %v2817
    %v2819 = vpop.f32.mrb[0].mxu0
    %2820 = vmatprep.mubr.f32.mxu0 0.0
    %2821 = vmatmul.mubr.f32.gmra.mrb[0].mxu0 %v2153
    %v2822 = vpop.f32.mrb[0].mxu0
    %v2823 = vadd.f32 0.0, %v2822
    %v2824 = vpop.f32.mrb[0].mxu0
    %2825 = vdwg.mxu0
    %s2826 = scalar_lea.vmem %s7, 96
    %v2827 = vld [vmem:[%s2826] sm:$0xff]
    %v2828 = vld [vmem:[%s2826 + $0x8] sm:$0xff]
    %v2829 = vld [vmem:[%s2826 + $0x10] sm:$0xff]
    %v2830 = vld [vmem:[%s2826 + $0x18] sm:$0xff]
    %2831 = vmatprep.subr.mxu0 0.0
    %2832 = vmatpush1.msra.mxu0 %v2827
    %2833 = vmatprep.subr.mxu0 0.0
    %2834 = vmatpush1.msra.mxu0 %v2828
    %2835 = vmatprep.subr.mxu0 0.0
    %2836 = vmatpush1.msra.mxu0 %v2829
    %2837 = vmatprep.subr.mxu0 0.0
    %2838 = vmatpush1.msra.mxu0 %v2830
    %2839 = vmatprep.subr.mxu0 0.0
    %2840 = vmatpush1.msra.mxu0 0.0
    %2841 = vmatprep.subr.mxu0 0.0
    %2842 = vmatpush1.msra.mxu0 0.0
    %2843 = vmatprep.subr.mxu0 0.0
    %2844 = vmatpush1.msra.mxu0 0.0
    %2845 = vmatprep.subr.mxu0 0.0
    %2846 = vmatpush1.msra.mxu0 0.0
    %2847 = vmatprep.subr.mxu0 0.0
    %2848 = vmatpush1.msra.mxu0 0.0
    %2849 = vmatprep.subr.mxu0 0.0
    %2850 = vmatpush1.msra.mxu0 0.0
    %2851 = vmatprep.subr.mxu0 0.0
    %2852 = vmatpush1.msra.mxu0 0.0
    %2853 = vmatprep.subr.mxu0 0.0
    %2854 = vmatpush1.msra.mxu0 0.0
    %2855 = vmatprep.subr.mxu0 0.0
    %2856 = vmatpush1.msra.mxu0 0.0
    %2857 = vmatprep.subr.mxu0 0.0
    %2858 = vmatpush1.msra.mxu0 0.0
    %2859 = vmatprep.subr.mxu0 0.0
    %2860 = vmatpush1.msra.mxu0 0.0
    %2861 = vmatprep.subr.mxu0 0.0
    %2862 = vmatpush1.msra.mxu0 0.0
    %2863 = vmatprep.subr.mxu0 0.0
    %2864 = vmatpush1.msra.mxu0 0.0
    %2865 = vmatprep.subr.mxu0 0.0
    %2866 = vmatpush1.msra.mxu0 0.0
    %2867 = vmatprep.subr.mxu0 0.0
    %2868 = vmatpush1.msra.mxu0 0.0
    %2869 = vmatprep.subr.mxu0 0.0
    %2870 = vmatpush1.msra.mxu0 0.0
    %2871 = vmatprep.subr.mxu0 0.0
    %2872 = vmatpush1.msra.mxu0 0.0
    %2873 = vmatprep.subr.mxu0 0.0
    %2874 = vmatpush1.msra.mxu0 0.0
    %2875 = vmatprep.subr.mxu0 0.0
    %2876 = vmatpush1.msra.mxu0 0.0
    %2877 = vmatprep.subr.mxu0 0.0
    %2878 = vmatpush1.msra.mxu0 0.0
    %2879 = vmatprep.subr.mxu0 0.0
    %2880 = vmatpush1.msra.mxu0 0.0
    %2881 = vmatprep.subr.mxu0 0.0
    %2882 = vmatpush1.msra.mxu0 0.0
    %2883 = vmatprep.subr.mxu0 0.0
    %2884 = vmatpush1.msra.mxu0 0.0
    %2885 = vmatprep.subr.mxu0 0.0
    %2886 = vmatpush1.msra.mxu0 0.0
    %2887 = vmatprep.subr.mxu0 0.0
    %2888 = vmatpush1.msra.mxu0 0.0
    %2889 = vmatprep.subr.mxu0 0.0
    %2890 = vmatpush1.msra.mxu0 0.0
    %2891 = vmatprep.subr.mxu0 0.0
    %2892 = vmatpush1.msra.mxu0 0.0
    %2893 = vmatprep.subr.mxu0 0.0
    %2894 = vmatpush1.msra.mxu0 0.0
    %2895 = vmatprep.mubr.f32.mxu0 0.0
    %2896 = vmatmul.mubr.f32.gmra.mrb[0].mxu0 %v2141
    %v2897 = vpop.f32.mrb[0].mxu0
    %v2898 = vadd.f32 0.0, %v2897
    %v2899 = vpop.f32.mrb[0].mxu0
    %2900 = vmatprep.mubr.f32.mxu0 0.0
    %2901 = vmatmul.mubr.f32.gmra.mrb[0].mxu0 %v2144
    %v2902 = vpop.f32.mrb[0].mxu0
    %v2903 = vadd.f32 0.0, %v2902
    %v2904 = vpop.f32.mrb[0].mxu0
    %2905 = vmatprep.mubr.f32.mxu0 0.0
    %2906 = vmatmul.mubr.f32.gmra.mrb[0].mxu0 %v2147
    %v2907 = vpop.f32.mrb[0].mxu0
    %v2908 = vadd.f32 0.0, %v2907
    %v2909 = vpop.f32.mrb[0].mxu0
    %2910 = vmatprep.mubr.f32.mxu0 0.0
    %2911 = vmatmul.mubr.f32.gmra.mrb[0].mxu0 %v2150
    %v2912 = vpop.f32.mrb[0].mxu0
    %v2913 = vadd.f32 0.0, %v2912
    %v2914 = vpop.f32.mrb[0].mxu0
    %2915 = vmatprep.mubr.f32.mxu0 0.0
    %2916 = vmatmul.mubr.f32.gmra.mrb[0].mxu0 %v2153
    %v2917 = vpop.f32.mrb[0].mxu0
    %v2918 = vadd.f32 0.0, %v2917
    %v2919 = vpop.f32.mrb[0].mxu0
    %2920 = vdwg.mxu0
    %s2921 = scalar_lea.vmem %s8, 96
    %v2922 = vld [vmem:[%s2921] sm:$0xff]
    %v2923 = vld [vmem:[%s2921 + $0x8] sm:$0xff]
    %v2924 = vld [vmem:[%s2921 + $0x10] sm:$0xff]
    %v2925 = vld [vmem:[%s2921 + $0x18] sm:$0xff]
    %2926 = vmatprep.subr.mxu0 0.0
    %2927 = vmatpush1.msra.mxu0 %v2922
    %2928 = vmatprep.subr.mxu0 0.0
    %2929 = vmatpush1.msra.mxu0 %v2923
    %2930 = vmatprep.subr.mxu0 0.0
    %2931 = vmatpush1.msra.mxu0 %v2924
    %2932 = vmatprep.subr.mxu0 0.0
    %2933 = vmatpush1.msra.mxu0 %v2925
    %2934 = vmatprep.subr.mxu0 0.0
    %2935 = vmatpush1.msra.mxu0 0.0
    %2936 = vmatprep.subr.mxu0 0.0
    %2937 = vmatpush1.msra.mxu0 0.0
    %2938 = vmatprep.subr.mxu0 0.0
    %2939 = vmatpush1.msra.mxu0 0.0
    %2940 = vmatprep.subr.mxu0 0.0
    %2941 = vmatpush1.msra.mxu0 0.0
    %2942 = vmatprep.subr.mxu0 0.0
    %2943 = vmatpush1.msra.mxu0 0.0
    %2944 = vmatprep.subr.mxu0 0.0
    %2945 = vmatpush1.msra.mxu0 0.0
    %2946 = vmatprep.subr.mxu0 0.0
    %2947 = vmatpush1.msra.mxu0 0.0
    %2948 = vmatprep.subr.mxu0 0.0
    %2949 = vmatpush1.msra.mxu0 0.0
    %2950 = vmatprep.subr.mxu0 0.0
    %2951 = vmatpush1.msra.mxu0 0.0
    %2952 = vmatprep.subr.mxu0 0.0
    %2953 = vmatpush1.msra.mxu0 0.0
    %2954 = vmatprep.subr.mxu0 0.0
    %2955 = vmatpush1.msra.mxu0 0.0
    %2956 = vmatprep.subr.mxu0 0.0
    %2957 = vmatpush1.msra.mxu0 0.0
    %2958 = vmatprep.subr.mxu0 0.0
    %2959 = vmatpush1.msra.mxu0 0.0
    %2960 = vmatprep.subr.mxu0 0.0
    %2961 = vmatpush1.msra.mxu0 0.0
    %2962 = vmatprep.subr.mxu0 0.0
    %2963 = vmatpush1.msra.mxu0 0.0
    %2964 = vmatprep.subr.mxu0 0.0
    %2965 = vmatpush1.msra.mxu0 0.0
    %2966 = vmatprep.subr.mxu0 0.0
    %2967 = vmatpush1.msra.mxu0 0.0
    %2968 = vmatprep.subr.mxu0 0.0
    %2969 = vmatpush1.msra.mxu0 0.0
    %2970 = vmatprep.subr.mxu0 0.0
    %2971 = vmatpush1.msra.mxu0 0.0
    %2972 = vmatprep.subr.mxu0 0.0
    %2973 = vmatpush1.msra.mxu0 0.0
    %2974 = vmatprep.subr.mxu0 0.0
    %2975 = vmatpush1.msra.mxu0 0.0
    %2976 = vmatprep.subr.mxu0 0.0
    %2977 = vmatpush1.msra.mxu0 0.0
    %2978 = vmatprep.subr.mxu0 0.0
    %2979 = vmatpush1.msra.mxu0 0.0
    %2980 = vmatprep.subr.mxu0 0.0
    %2981 = vmatpush1.msra.mxu0 0.0
    %2982 = vmatprep.subr.mxu0 0.0
    %2983 = vmatpush1.msra.mxu0 0.0
    %2984 = vmatprep.subr.mxu0 0.0
    %2985 = vmatpush1.msra.mxu0 0.0
    %2986 = vmatprep.subr.mxu0 0.0
    %2987 = vmatpush1.msra.mxu0 0.0
    %2988 = vmatprep.subr.mxu0 0.0
    %2989 = vmatpush1.msra.mxu0 0.0
    %2990 = vmatprep.mubr.f32.mxu0 0.0
    %2991 = vmatmul.mubr.f32.gmra.mrb[0].mxu0 %v2141
    %v2992 = vpop.f32.mrb[0].mxu0
    %v2993 = vadd.f32 0.0, %v2992
    %v2994 = vpop.f32.mrb[0].mxu0
    %2995 = vmatprep.mubr.f32.mxu0 0.0
    %2996 = vmatmul.mubr.f32.gmra.mrb[0].mxu0 %v2144
    %v2997 = vpop.f32.mrb[0].mxu0
    %v2998 = vadd.f32 0.0, %v2997
    %v2999 = vpop.f32.mrb[0].mxu0
    %3000 = vmatprep.mubr.f32.mxu0 0.0
    %3001 = vmatmul.mubr.f32.gmra.mrb[0].mxu0 %v2147
    %v3002 = vpop.f32.mrb[0].mxu0
    %v3003 = vadd.f32 0.0, %v3002
    %v3004 = vpop.f32.mrb[0].mxu0
    %3005 = vmatprep.mubr.f32.mxu0 0.0
    %3006 = vmatmul.mubr.f32.gmra.mrb[0].mxu0 %v2150
    %v3007 = vpop.f32.mrb[0].mxu0
    %v3008 = vadd.f32 0.0, %v3007
    %v3009 = vpop.f32.mrb[0].mxu0
    %3010 = vmatprep.mubr.f32.mxu0 0.0
    %3011 = vmatmul.mubr.f32.gmra.mrb[0].mxu0 %v2153
    %v3012 = vpop.f32.mrb[0].mxu0
    %v3013 = vadd.f32 0.0, %v3012
    %v3014 = vpop.f32.mrb[0].mxu0
    %3015 = vdwg.mxu0
    %v3017 = vsel %vm581, %v2803, 0
    %v3020 = vsel %vm581, %v2808, 0
    %v3023 = vsel %vm581, %v2813, 0
    %v3026 = vsel %vm581, %v2818, 0
    %v3029 = vsel %vm581, %v2823, 0
    %v3032 = vsel %vm581, %v2898, 0
    %v3035 = vsel %vm581, %v2903, 0
    %v3038 = vsel %vm581, %v2908, 0
    %v3041 = vsel %vm581, %v2913, 0
    %v3044 = vsel %vm581, %v2918, 0
    %3046 = vmatprep.subr.mxu0 0.0
    %3047 = vmatpush1.xpose.msra.mxu0 %v3032
    %3048 = vmatprep.subr.mxu0 0.0
    %3049 = vmatpush1.xpose.msra.mxu0 %v3035
    %3050 = vmatprep.subr.mxu0 0.0
    %3051 = vmatpush1.xpose.msra.mxu0 %v3038
    %3052 = vmatprep.subr.mxu0 0.0
    %3053 = vmatpush1.xpose.msra.mxu0 %v3041
    %3054 = vmatprep.subr.mxu0 0.0
    %3055 = vmatpush1.xpose.msra.mxu0 %v3044
    %3056 = vmatprep.subr.mxu0 0.0
    %3057 = vmatpush1.xpose.msra.mxu0 0.0
    %3058 = vmatprep.subr.mxu0 0.0
    %3059 = vmatpush1.xpose.msra.mxu0 0.0
    %3060 = vmatprep.subr.mxu0 0.0
    %3061 = vmatpush1.xpose.msra.mxu0 0.0
    %3062 = vmatprep.subr.mxu0 0.0
    %3063 = vmatpush1.xpose.msra.mxu0 0.0
    %3064 = vmatprep.subr.mxu0 0.0
    %3065 = vmatpush1.xpose.msra.mxu0 0.0
    %3066 = vmatprep.subr.mxu0 0.0
    %3067 = vmatpush1.xpose.msra.mxu0 0.0
    %3068 = vmatprep.subr.mxu0 0.0
    %3069 = vmatpush1.xpose.msra.mxu0 0.0
    %3070 = vmatprep.subr.mxu0 0.0
    %3071 = vmatpush1.xpose.msra.mxu0 0.0
    %3072 = vmatprep.subr.mxu0 0.0
    %3073 = vmatpush1.xpose.msra.mxu0 0.0
    %3074 = vmatprep.subr.mxu0 0.0
    %3075 = vmatpush1.xpose.msra.mxu0 0.0
    %3076 = vmatprep.subr.mxu0 0.0
    %3077 = vmatpush1.xpose.msra.mxu0 0.0
    %3078 = vmatprep.subr.mxu0 0.0
    %3079 = vmatpush1.xpose.msra.mxu0 0.0
    %3080 = vmatprep.subr.mxu0 0.0
    %3081 = vmatpush1.xpose.msra.mxu0 0.0
    %3082 = vmatprep.subr.mxu0 0.0
    %3083 = vmatpush1.xpose.msra.mxu0 0.0
    %3084 = vmatprep.subr.mxu0 0.0
    %3085 = vmatpush1.xpose.msra.mxu0 0.0
    %3086 = vmatprep.subr.mxu0 0.0
    %3087 = vmatpush1.xpose.msra.mxu0 0.0
    %3088 = vmatprep.subr.mxu0 0.0
    %3089 = vmatpush1.xpose.msra.mxu0 0.0
    %3090 = vmatprep.subr.mxu0 0.0
    %3091 = vmatpush1.xpose.msra.mxu0 0.0
    %3092 = vmatprep.subr.mxu0 0.0
    %3093 = vmatpush1.xpose.msra.mxu0 0.0
    %3094 = vmatprep.subr.mxu0 0.0
    %3095 = vmatpush1.xpose.msra.mxu0 0.0
    %3096 = vmatprep.subr.mxu0 0.0
    %3097 = vmatpush1.xpose.msra.mxu0 0.0
    %3098 = vmatprep.subr.mxu0 0.0
    %3099 = vmatpush1.xpose.msra.mxu0 0.0
    %3100 = vmatprep.subr.mxu0 0.0
    %3101 = vmatpush1.xpose.msra.mxu0 0.0
    %3102 = vmatprep.subr.mxu0 0.0
    %3103 = vmatpush1.xpose.msra.mxu0 0.0
    %3104 = vmatprep.subr.mxu0 0.0
    %3105 = vmatpush1.xpose.msra.mxu0 0.0
    %3106 = vmatprep.subr.mxu0 0.0
    %3107 = vmatpush1.xpose.msra.mxu0 0.0
    %3108 = vmatprep.subr.mxu0 0.0
    %3109 = vmatpush1.xpose.msra.mxu0 0.0
    %3110 = vmatprep.mubr.f32.mxu0 0.0
    %3111 = vmatmul.mubr.f32.gmra.mrb[0].mxu0 %v3017
    %v3112 = vpop.f32.mrb[0].mxu0
    %v3113 = vadd.f32 0.0, %v3112
    %v3114 = vpop.f32.mrb[0].mxu0
    %3115 = vmatprep.mubr.f32.mxu0 0.0
    %3116 = vmatmul.mubr.f32.gmra.mrb[0].mxu0 %v3020
    %v3117 = vpop.f32.mrb[0].mxu0
    %v3118 = vadd.f32 0.0, %v3117
    %v3119 = vpop.f32.mrb[0].mxu0
    %3120 = vmatprep.mubr.f32.mxu0 0.0
    %3121 = vmatmul.mubr.f32.gmra.mrb[0].mxu0 %v3023
    %v3122 = vpop.f32.mrb[0].mxu0
    %v3123 = vadd.f32 0.0, %v3122
    %v3124 = vpop.f32.mrb[0].mxu0
    %3125 = vmatprep.mubr.f32.mxu0 0.0
    %3126 = vmatmul.mubr.f32.gmra.mrb[0].mxu0 %v3026
    %v3127 = vpop.f32.mrb[0].mxu0
    %v3128 = vadd.f32 0.0, %v3127
    %v3129 = vpop.f32.mrb[0].mxu0
    %3130 = vmatprep.mubr.f32.mxu0 0.0
    %3131 = vmatmul.mubr.f32.gmra.mrb[0].mxu0 %v3029
    %v3132 = vpop.f32.mrb[0].mxu0
    %v3133 = vadd.f32 0.0, %v3132
    %v3134 = vpop.f32.mrb[0].mxu0
    %3135 = vdwg.mxu0
    %v3136 = vmul.f32 %v3113, 0.25
    %v3137 = vmul.f32 %v3118, 0.25
    %v3138 = vmul.f32 %v3123, 0.25
    %v3139 = vmul.f32 %v3128, 0.25
    %v3140 = vmul.f32 %v3133, 0.25
    %v3141 = vadd.f32 %v3136, %v187
    %v3142 = vadd.f32 %v3137, %v188
    %v3143 = vadd.f32 %v3138, %v189
    %v3144 = vadd.f32 %v3139, %v190
    %v3145 = vadd.f32 %v3140, %v191
    %v3146 = vsel %vm712, %v3141, -inf
    %3147 = vmax.xlane.f32.xlu0 %v3146
    %v3148 = vpop.xlane.xlu0 %3147
    %v3149 = vsel %vm712, %v3142, -inf
    %3150 = vmax.xlane.f32.xlu0 %v3149
    %v3151 = vpop.xlane.xlu0 %3150
    %v3152 = vsel %vm712, %v3143, -inf
    %3153 = vmax.xlane.f32.xlu0 %v3152
    %v3154 = vpop.xlane.xlu0 %3153
    %v3155 = vsel %vm712, %v3144, -inf
    %3156 = vmax.xlane.f32.xlu0 %v3155
    %v3157 = vpop.xlane.xlu0 %3156
    %v3158 = vsel %vm725, %v3145, -inf
    %3159 = vmax.xlane.f32.xlu0 %v3158
    %v3160 = vpop.xlane.xlu0 %3159
    %v3161 = vsub.f32 %v3141, %v3148
    %v3162 = vsub.f32 %v3142, %v3151
    %v3163 = vsub.f32 %v3143, %v3154
    %v3164 = vsub.f32 %v3144, %v3157
    %v3165 = vsub.f32 %v3145, %v3160
    %v3166 = vmul.f32 %v3161, 1.442695
    %v3167 = vpow.pop %v3166
    %v3168 = vmul.f32 %v3162, 1.442695
    %v3169 = vpow.pop %v3168
    %v3170 = vmul.f32 %v3163, 1.442695
    %v3171 = vpow.pop %v3170
    %v3172 = vmul.f32 %v3164, 1.442695
    %v3173 = vpow.pop %v3172
    %v3174 = vmul.f32 %v3165, 1.442695
    %v3175 = vpow.pop %v3174
    %v3176 = vsel %vm712, %v3167, 0.0
    %3177 = vadd.xlane.f32.xlu0 %v3176
    %v3178 = vpop.xlane.xlu0 %3177
    %v3179 = vsel %vm712, %v3169, 0.0
    %3180 = vadd.xlane.f32.xlu0 %v3179
    %v3181 = vpop.xlane.xlu0 %3180
    %v3182 = vsel %vm712, %v3171, 0.0
    %3183 = vadd.xlane.f32.xlu0 %v3182
    %v3184 = vpop.xlane.xlu0 %3183
    %v3185 = vsel %vm712, %v3173, 0.0
    %3186 = vadd.xlane.f32.xlu0 %v3185
    %v3187 = vpop.xlane.xlu0 %3186
    %v3188 = vsel %vm725, %v3175, 0.0
    %3189 = vadd.xlane.f32.xlu0 %v3188
    %v3190 = vpop.xlane.xlu0 %3189
    %v3191 = vrcp.pop %v3178
    %v3192 = vrcp.pop %v3181
    %v3193 = vrcp.pop %v3184
    %v3194 = vrcp.pop %v3187
    %v3195 = vrcp.pop %v3190
    %v3196 = vmul.f32 %v3167, %v3191
    %v3197 = vmul.f32 %v3169, %v3192
    %v3198 = vmul.f32 %v3171, %v3193
    %v3199 = vmul.f32 %v3173, %v3194
    %v3200 = vmul.f32 %v3175, %v3195
    %v3202 = vsel %vm712, %v3196, 0
    %v3205 = vsel %vm712, %v3197, 0
    %v3208 = vsel %vm712, %v3198, 0
    %v3211 = vsel %vm712, %v3199, 0
    %v3214 = vsel %vm712, %v3200, 0
    %v3217 = vsel %vm784, %v3013, 0
    %3219 = vmatprep.subr.mxu0 0.0
    %3220 = vmatpush1.msra.mxu0 %v2993
    %3221 = vmatprep.subr.mxu0 0.0
    %3222 = vmatpush1.msra.mxu0 %v2998
    %3223 = vmatprep.subr.mxu0 0.0
    %3224 = vmatpush1.msra.mxu0 %v3003
    %3225 = vmatprep.subr.mxu0 0.0
    %3226 = vmatpush1.msra.mxu0 %v3008
    %3227 = vmatprep.subr.mxu0 0.0
    %3228 = vmatpush1.msra.mxu0 %v3217
    %3229 = vmatprep.subr.mxu0 0.0
    %3230 = vmatpush1.msra.mxu0 0.0
    %3231 = vmatprep.subr.mxu0 0.0
    %3232 = vmatpush1.msra.mxu0 0.0
    %3233 = vmatprep.subr.mxu0 0.0
    %3234 = vmatpush1.msra.mxu0 0.0
    %3235 = vmatprep.subr.mxu0 0.0
    %3236 = vmatpush1.msra.mxu0 0.0
    %3237 = vmatprep.subr.mxu0 0.0
    %3238 = vmatpush1.msra.mxu0 0.0
    %3239 = vmatprep.subr.mxu0 0.0
    %3240 = vmatpush1.msra.mxu0 0.0
    %3241 = vmatprep.subr.mxu0 0.0
    %3242 = vmatpush1.msra.mxu0 0.0
    %3243 = vmatprep.subr.mxu0 0.0
    %3244 = vmatpush1.msra.mxu0 0.0
    %3245 = vmatprep.subr.mxu0 0.0
    %3246 = vmatpush1.msra.mxu0 0.0
    %3247 = vmatprep.subr.mxu0 0.0
    %3248 = vmatpush1.msra.mxu0 0.0
    %3249 = vmatprep.subr.mxu0 0.0
    %3250 = vmatpush1.msra.mxu0 0.0
    %3251 = vmatprep.subr.mxu0 0.0
    %3252 = vmatpush1.msra.mxu0 0.0
    %3253 = vmatprep.subr.mxu0 0.0
    %3254 = vmatpush1.msra.mxu0 0.0
    %3255 = vmatprep.subr.mxu0 0.0
    %3256 = vmatpush1.msra.mxu0 0.0
    %3257 = vmatprep.subr.mxu0 0.0
    %3258 = vmatpush1.msra.mxu0 0.0
    %3259 = vmatprep.subr.mxu0 0.0
    %3260 = vmatpush1.msra.mxu0 0.0
    %3261 = vmatprep.subr.mxu0 0.0
    %3262 = vmatpush1.msra.mxu0 0.0
    %3263 = vmatprep.subr.mxu0 0.0
    %3264 = vmatpush1.msra.mxu0 0.0
    %3265 = vmatprep.subr.mxu0 0.0
    %3266 = vmatpush1.msra.mxu0 0.0
    %3267 = vmatprep.subr.mxu0 0.0
    %3268 = vmatpush1.msra.mxu0 0.0
    %3269 = vmatprep.subr.mxu0 0.0
    %3270 = vmatpush1.msra.mxu0 0.0
    %3271 = vmatprep.subr.mxu0 0.0
    %3272 = vmatpush1.msra.mxu0 0.0
    %3273 = vmatprep.subr.mxu0 0.0
    %3274 = vmatpush1.msra.mxu0 0.0
    %3275 = vmatprep.subr.mxu0 0.0
    %3276 = vmatpush1.msra.mxu0 0.0
    %3277 = vmatprep.subr.mxu0 0.0
    %3278 = vmatpush1.msra.mxu0 0.0
    %3279 = vmatprep.subr.mxu0 0.0
    %3280 = vmatpush1.msra.mxu0 0.0
    %3281 = vmatprep.subr.mxu0 0.0
    %3282 = vmatpush1.msra.mxu0 0.0
    %3283 = vmatprep.mubr.f32.mxu0 0.0
    %3284 = vmatmul.mubr.f32.gmra.mrb[0].mxu0 %v3202
    %v3285 = vpop.f32.mrb[0].mxu0
    %v3286 = vadd.f32 0.0, %v3285
    %v3287 = vpop.f32.mrb[0].mxu0
    %3288 = vmatprep.mubr.f32.mxu0 0.0
    %3289 = vmatmul.mubr.f32.gmra.mrb[0].mxu0 %v3205
    %v3290 = vpop.f32.mrb[0].mxu0
    %v3291 = vadd.f32 0.0, %v3290
    %v3292 = vpop.f32.mrb[0].mxu0
    %3293 = vmatprep.mubr.f32.mxu0 0.0
    %3294 = vmatmul.mubr.f32.gmra.mrb[0].mxu0 %v3208
    %v3295 = vpop.f32.mrb[0].mxu0
    %v3296 = vadd.f32 0.0, %v3295
    %v3297 = vpop.f32.mrb[0].mxu0
    %3298 = vmatprep.mubr.f32.mxu0 0.0
    %3299 = vmatmul.mubr.f32.gmra.mrb[0].mxu0 %v3211
    %v3300 = vpop.f32.mrb[0].mxu0
    %v3301 = vadd.f32 0.0, %v3300
    %v3302 = vpop.f32.mrb[0].mxu0
    %3303 = vmatprep.mubr.f32.mxu0 0.0
    %3304 = vmatmul.mubr.f32.gmra.mrb[0].mxu0 %v3214
    %v3305 = vpop.f32.mrb[0].mxu0
    %v3306 = vadd.f32 0.0, %v3305
    %v3307 = vpop.f32.mrb[0].mxu0
    %3308 = vdwg.mxu0
    %s3309 = scalar_lea.vmem %s9, 48
    %v3310 = vld [vmem:[%s3309] sm:$0xff]
    %v3311 = vld [vmem:[%s3309 + $0x8] sm:$0xff]
    %v3313 = vsel %vm581, %v3286, 0
    %v3316 = vsel %vm581, %v3291, 0
    %v3319 = vsel %vm581, %v3296, 0
    %v3322 = vsel %vm581, %v3301, 0
    %v3325 = vsel %vm581, %v3306, 0
    %3327 = vmatprep.subr.mxu0 0.0
    %3328 = vmatpush1.msra.mxu0 %v3310
    %3329 = vmatprep.subr.mxu0 0.0
    %3330 = vmatpush1.msra.mxu0 %v3311
    %3331 = vmatprep.subr.mxu0 0.0
    %3332 = vmatpush1.msra.mxu0 0.0
    %3333 = vmatprep.subr.mxu0 0.0
    %3334 = vmatpush1.msra.mxu0 0.0
    %3335 = vmatprep.subr.mxu0 0.0
    %3336 = vmatpush1.msra.mxu0 0.0
    %3337 = vmatprep.subr.mxu0 0.0
    %3338 = vmatpush1.msra.mxu0 0.0
    %3339 = vmatprep.subr.mxu0 0.0
    %3340 = vmatpush1.msra.mxu0 0.0
    %3341 = vmatprep.subr.mxu0 0.0
    %3342 = vmatpush1.msra.mxu0 0.0
    %3343 = vmatprep.subr.mxu0 0.0
    %3344 = vmatpush1.msra.mxu0 0.0
    %3345 = vmatprep.subr.mxu0 0.0
    %3346 = vmatpush1.msra.mxu0 0.0
    %3347 = vmatprep.subr.mxu0 0.0
    %3348 = vmatpush1.msra.mxu0 0.0
    %3349 = vmatprep.subr.mxu0 0.0
    %3350 = vmatpush1.msra.mxu0 0.0
    %3351 = vmatprep.subr.mxu0 0.0
    %3352 = vmatpush1.msra.mxu0 0.0
    %3353 = vmatprep.subr.mxu0 0.0
    %3354 = vmatpush1.msra.mxu0 0.0
    %3355 = vmatprep.subr.mxu0 0.0
    %3356 = vmatpush1.msra.mxu0 0.0
    %3357 = vmatprep.subr.mxu0 0.0
    %3358 = vmatpush1.msra.mxu0 0.0
    %3359 = vmatprep.subr.mxu0 0.0
    %3360 = vmatpush1.msra.mxu0 0.0
    %3361 = vmatprep.subr.mxu0 0.0
    %3362 = vmatpush1.msra.mxu0 0.0
    %3363 = vmatprep.subr.mxu0 0.0
    %3364 = vmatpush1.msra.mxu0 0.0
    %3365 = vmatprep.subr.mxu0 0.0
    %3366 = vmatpush1.msra.mxu0 0.0
    %3367 = vmatprep.subr.mxu0 0.0
    %3368 = vmatpush1.msra.mxu0 0.0
    %3369 = vmatprep.subr.mxu0 0.0
    %3370 = vmatpush1.msra.mxu0 0.0
    %3371 = vmatprep.subr.mxu0 0.0
    %3372 = vmatpush1.msra.mxu0 0.0
    %3373 = vmatprep.subr.mxu0 0.0
    %3374 = vmatpush1.msra.mxu0 0.0
    %3375 = vmatprep.subr.mxu0 0.0
    %3376 = vmatpush1.msra.mxu0 0.0
    %3377 = vmatprep.subr.mxu0 0.0
    %3378 = vmatpush1.msra.mxu0 0.0
    %3379 = vmatprep.subr.mxu0 0.0
    %3380 = vmatpush1.msra.mxu0 0.0
    %3381 = vmatprep.subr.mxu0 0.0
    %3382 = vmatpush1.msra.mxu0 0.0
    %3383 = vmatprep.subr.mxu0 0.0
    %3384 = vmatpush1.msra.mxu0 0.0
    %3385 = vmatprep.subr.mxu0 0.0
    %3386 = vmatpush1.msra.mxu0 0.0
    %3387 = vmatprep.subr.mxu0 0.0
    %3388 = vmatpush1.msra.mxu0 0.0
    %3389 = vmatprep.subr.mxu0 0.0
    %3390 = vmatpush1.msra.mxu0 0.0
    %3391 = vmatprep.mubr.f32.mxu0 0.0
    %3392 = vmatmul.mubr.f32.gmra.mrb[0].mxu0 %v3313
    %v3393 = vpop.f32.mrb[0].mxu0
    %v3394 = vadd.f32 0.0, %v3393
    %v3395 = vpop.f32.mrb[0].mxu0
    %3396 = vmatprep.mubr.f32.mxu0 0.0
    %3397 = vmatmul.mubr.f32.gmra.mrb[0].mxu0 %v3316
    %v3398 = vpop.f32.mrb[0].mxu0
    %v3399 = vadd.f32 0.0, %v3398
    %v3400 = vpop.f32.mrb[0].mxu0
    %3401 = vmatprep.mubr.f32.mxu0 0.0
    %3402 = vmatmul.mubr.f32.gmra.mrb[0].mxu0 %v3319
    %v3403 = vpop.f32.mrb[0].mxu0
    %v3404 = vadd.f32 0.0, %v3403
    %v3405 = vpop.f32.mrb[0].mxu0
    %3406 = vmatprep.mubr.f32.mxu0 0.0
    %3407 = vmatmul.mubr.f32.gmra.mrb[0].mxu0 %v3322
    %v3408 = vpop.f32.mrb[0].mxu0
    %v3409 = vadd.f32 0.0, %v3408
    %v3410 = vpop.f32.mrb[0].mxu0
    %3411 = vmatprep.mubr.f32.mxu0 0.0
    %3412 = vmatmul.mubr.f32.gmra.mrb[0].mxu0 %v3325
    %v3413 = vpop.f32.mrb[0].mxu0
    %v3414 = vadd.f32 0.0, %v3413
    %v3415 = vpop.f32.mrb[0].mxu0
    %3416 = vdwg.mxu0
    %v3418 = vsel %vm581, %v2705, 0
    %v3421 = vsel %vm581, %v2710, 0
    %v3424 = vsel %vm581, %v2715, 0
    %v3427 = vsel %vm581, %v2720, 0
    %v3430 = vsel %vm581, %v2725, 0
    %3432 = vmatprep.subr.mxu0 0.0
    %3433 = vmatpush1.msra.mxu0 %v2729
    %3434 = vmatprep.subr.mxu0 0.0
    %3435 = vmatpush1.msra.mxu0 %v2730
    %3436 = vmatprep.subr.mxu0 0.0
    %3437 = vmatpush1.msra.mxu0 0.0
    %3438 = vmatprep.subr.mxu0 0.0
    %3439 = vmatpush1.msra.mxu0 0.0
    %3440 = vmatprep.subr.mxu0 0.0
    %3441 = vmatpush1.msra.mxu0 0.0
    %3442 = vmatprep.subr.mxu0 0.0
    %3443 = vmatpush1.msra.mxu0 0.0
    %3444 = vmatprep.subr.mxu0 0.0
    %3445 = vmatpush1.msra.mxu0 0.0
    %3446 = vmatprep.subr.mxu0 0.0
    %3447 = vmatpush1.msra.mxu0 0.0
    %3448 = vmatprep.subr.mxu0 0.0
    %3449 = vmatpush1.msra.mxu0 0.0
    %3450 = vmatprep.subr.mxu0 0.0
    %3451 = vmatpush1.msra.mxu0 0.0
    %3452 = vmatprep.subr.mxu0 0.0
    %3453 = vmatpush1.msra.mxu0 0.0
    %3454 = vmatprep.subr.mxu0 0.0
    %3455 = vmatpush1.msra.mxu0 0.0
    %3456 = vmatprep.subr.mxu0 0.0
    %3457 = vmatpush1.msra.mxu0 0.0
    %3458 = vmatprep.subr.mxu0 0.0
    %3459 = vmatpush1.msra.mxu0 0.0
    %3460 = vmatprep.subr.mxu0 0.0
    %3461 = vmatpush1.msra.mxu0 0.0
    %3462 = vmatprep.subr.mxu0 0.0
    %3463 = vmatpush1.msra.mxu0 0.0
    %3464 = vmatprep.subr.mxu0 0.0
    %3465 = vmatpush1.msra.mxu0 0.0
    %3466 = vmatprep.subr.mxu0 0.0
    %3467 = vmatpush1.msra.mxu0 0.0
    %3468 = vmatprep.subr.mxu0 0.0
    %3469 = vmatpush1.msra.mxu0 0.0
    %3470 = vmatprep.subr.mxu0 0.0
    %3471 = vmatpush1.msra.mxu0 0.0
    %3472 = vmatprep.subr.mxu0 0.0
    %3473 = vmatpush1.msra.mxu0 0.0
    %3474 = vmatprep.subr.mxu0 0.0
    %3475 = vmatpush1.msra.mxu0 0.0
    %3476 = vmatprep.subr.mxu0 0.0
    %3477 = vmatpush1.msra.mxu0 0.0
    %3478 = vmatprep.subr.mxu0 0.0
    %3479 = vmatpush1.msra.mxu0 0.0
    %3480 = vmatprep.subr.mxu0 0.0
    %3481 = vmatpush1.msra.mxu0 0.0
    %3482 = vmatprep.subr.mxu0 0.0
    %3483 = vmatpush1.msra.mxu0 0.0
    %3484 = vmatprep.subr.mxu0 0.0
    %3485 = vmatpush1.msra.mxu0 0.0
    %3486 = vmatprep.subr.mxu0 0.0
    %3487 = vmatpush1.msra.mxu0 0.0
    %3488 = vmatprep.subr.mxu0 0.0
    %3489 = vmatpush1.msra.mxu0 0.0
    %3490 = vmatprep.subr.mxu0 0.0
    %3491 = vmatpush1.msra.mxu0 0.0
    %3492 = vmatprep.subr.mxu0 0.0
    %3493 = vmatpush1.msra.mxu0 0.0
    %3494 = vmatprep.subr.mxu0 0.0
    %3495 = vmatpush1.msra.mxu0 0.0
    %3496 = vmatprep.mubr.f32.mxu0 0.0
    %3497 = vmatmul.mubr.f32.gmra.mrb[0].mxu0 %v3418
    %v3498 = vpop.f32.mrb[0].mxu0
    %v3499 = vadd.f32 %v3394, %v3498
    %v3500 = vpop.f32.mrb[0].mxu0
    %3501 = vmatprep.mubr.f32.mxu0 0.0
    %3502 = vmatmul.mubr.f32.gmra.mrb[0].mxu0 %v3421
    %v3503 = vpop.f32.mrb[0].mxu0
    %v3504 = vadd.f32 %v3399, %v3503
    %v3505 = vpop.f32.mrb[0].mxu0
    %3506 = vmatprep.mubr.f32.mxu0 0.0
    %3507 = vmatmul.mubr.f32.gmra.mrb[0].mxu0 %v3424
    %v3508 = vpop.f32.mrb[0].mxu0
    %v3509 = vadd.f32 %v3404, %v3508
    %v3510 = vpop.f32.mrb[0].mxu0
    %3511 = vmatprep.mubr.f32.mxu0 0.0
    %3512 = vmatmul.mubr.f32.gmra.mrb[0].mxu0 %v3427
    %v3513 = vpop.f32.mrb[0].mxu0
    %v3514 = vadd.f32 %v3409, %v3513
    %v3515 = vpop.f32.mrb[0].mxu0
    %3516 = vmatprep.mubr.f32.mxu0 0.0
    %3517 = vmatmul.mubr.f32.gmra.mrb[0].mxu0 %v3430
    %v3518 = vpop.f32.mrb[0].mxu0
    %v3519 = vadd.f32 %v3414, %v3518
    %v3520 = vpop.f32.mrb[0].mxu0
    %3521 = vdwg.mxu0
    %v3522 = vadd.f32 %v2039, %v3499
    %v3523 = vadd.f32 %v2040, %v3504
    %v3524 = vadd.f32 %v2041, %v3509
    %v3525 = vadd.f32 %v2042, %v3514
    %v3526 = vadd.f32 %v2043, %v3519
    %s3527 = scalar_lea.vmem %s10, 1
    %v3528 = vld [vmem:[%s3527] sm:$0x1]
    %s3529 = scalar_lea.vmem %s11, 1
    %v3530 = vld [vmem:[%s3529] sm:$0x1]
    %v3531 = vsel %vm194, %v3522, 0.0
    %3532 = vadd.xlane.f32.xlu0 %v3531
    %v3533 = vpop.xlane.xlu0 %3532
    %v3534 = vsel %vm194, %v3523, 0.0
    %3535 = vadd.xlane.f32.xlu0 %v3534
    %v3536 = vpop.xlane.xlu0 %3535
    %v3537 = vsel %vm194, %v3524, 0.0
    %3538 = vadd.xlane.f32.xlu0 %v3537
    %v3539 = vpop.xlane.xlu0 %3538
    %v3540 = vsel %vm194, %v3525, 0.0
    %3541 = vadd.xlane.f32.xlu0 %v3540
    %v3542 = vpop.xlane.xlu0 %3541
    %v3543 = vsel %vm207, %v3526, 0.0
    %3544 = vadd.xlane.f32.xlu0 %v3543
    %v3545 = vpop.xlane.xlu0 %3544
    %v3546 = vmul.f32 %v3533, %v211
    %v3547 = vmul.f32 %v3536, %v211
    %v3548 = vmul.f32 %v3539, %v211
    %v3549 = vmul.f32 %v3542, %v211
    %v3550 = vmul.f32 %v3545, %v211
    %v3551 = vsub.f32 %v3522, %v3546
    %v3552 = vsub.f32 %v3523, %v3547
    %v3553 = vsub.f32 %v3524, %v3548
    %v3554 = vsub.f32 %v3525, %v3549
    %v3555 = vsub.f32 %v3526, %v3550
    %v3556 = vmul.f32 %v3551, %v3551
    %v3557 = vmul.f32 %v3552, %v3552
    %v3558 = vmul.f32 %v3553, %v3553
    %v3559 = vmul.f32 %v3554, %v3554
    %v3560 = vmul.f32 %v3555, %v3555
    %v3561 = vsel %vm194, %v3556, 0.0
    %3562 = vadd.xlane.f32.xlu0 %v3561
    %v3563 = vpop.xlane.xlu0 %3562
    %v3564 = vsel %vm194, %v3557, 0.0
    %3565 = vadd.xlane.f32.xlu0 %v3564
    %v3566 = vpop.xlane.xlu0 %3565
    %v3567 = vsel %vm194, %v3558, 0.0
    %3568 = vadd.xlane.f32.xlu0 %v3567
    %v3569 = vpop.xlane.xlu0 %3568
    %v3570 = vsel %vm194, %v3559, 0.0
    %3571 = vadd.xlane.f32.xlu0 %v3570
    %v3572 = vpop.xlane.xlu0 %3571
    %v3573 = vsel %vm207, %v3560, 0.0
    %3574 = vadd.xlane.f32.xlu0 %v3573
    %v3575 = vpop.xlane.xlu0 %3574
    %v3576 = vmul.f32 %v3563, %v211
    %v3577 = vmul.f32 %v3566, %v211
    %v3578 = vmul.f32 %v3569, %v211
    %v3579 = vmul.f32 %v3572, %v211
    %v3580 = vmul.f32 %v3575, %v211
    %v3581 = vadd.f32 %v3576, 1e-05
    %v3582 = vadd.f32 %v3577, 1e-05
    %v3583 = vadd.f32 %v3578, 1e-05
    %v3584 = vadd.f32 %v3579, 1e-05
    %v3585 = vadd.f32 %v3580, 1e-05
    %v3586 = vrsqrt.pop %v3581
    %v3587 = vrsqrt.pop %v3582
    %v3588 = vrsqrt.pop %v3583
    %v3589 = vrsqrt.pop %v3584
    %v3590 = vrsqrt.pop %v3585
    %v3591 = vmul.f32 %v3551, %v3586
    %v3592 = vmul.f32 %v3552, %v3587
    %v3593 = vmul.f32 %v3553, %v3588
    %v3594 = vmul.f32 %v3554, %v3589
    %v3595 = vmul.f32 %v3555, %v3590
    %v3597 = vlaneseq
    %v3598 = vshrl.u32 %v3597, 7
    %v3599 = vsub.s32 0, %v3598
    %v3600 = vrot.slane %v3528, %v3599
    %v3602 = vmul.f32 %v3591, %v3600
    %v3603 = vmul.f32 %v3592, %v3600
    %v3604 = vmul.f32 %v3593, %v3600
    %v3605 = vmul.f32 %v3594, %v3600
    %v3606 = vmul.f32 %v3595, %v3600
    %v3608 = vlaneseq
    %v3609 = vshrl.u32 %v3608, 7
    %v3610 = vsub.s32 0, %v3609
    %v3611 = vrot.slane %v3530, %v3610
    %v3613 = vadd.f32 %v3602, %v3611
    %v3614 = vadd.f32 %v3603, %v3611
    %v3615 = vadd.f32 %v3604, %v3611
    %v3616 = vadd.f32 %v3605, %v3611
    %v3617 = vadd.f32 %v3606, %v3611
    %s3618 = scalar_lea.vmem %s12, 32
    %v3619 = vld [vmem:[%s3618] sm:$0xff]
    %v3620 = vld [vmem:[%s3618 + $0x8] sm:$0xff]
    %v3621 = vld [vmem:[%s3618 + $0x10] sm:$0xff]
    %v3622 = vld [vmem:[%s3618 + $0x18] sm:$0xff]
    %s3623 = scalar_lea.vmem %s13, 1
    %v3624 = vld [vmem:[%s3623] sm:$0x1]
    %v3626 = vlaneseq
    %v3627 = vshrl.u32 %v3626, 7
    %v3628 = vsub.s32 0, %v3627
    %v3629 = vrot.slane %v3624, %v3628
    %v3632 = vsel %vm194, %v3613, 0
    %v3635 = vsel %vm194, %v3614, 0
    %v3638 = vsel %vm194, %v3615, 0
    %v3641 = vsel %vm194, %v3616, 0
    %v3644 = vsel %vm194, %v3617, 0
    %3646 = vmatprep.subr.mxu0 0.0
    %3647 = vmatpush1.msra.mxu0 %v3619
    %3648 = vmatprep.subr.mxu0 0.0
    %3649 = vmatpush1.msra.mxu0 %v3620
    %3650 = vmatprep.subr.mxu0 0.0
    %3651 = vmatpush1.msra.mxu0 %v3621
    %3652 = vmatprep.subr.mxu0 0.0
    %3653 = vmatpush1.msra.mxu0 %v3622
    %3654 = vmatprep.subr.mxu0 0.0
    %3655 = vmatpush1.msra.mxu0 0.0
    %3656 = vmatprep.subr.mxu0 0.0
    %3657 = vmatpush1.msra.mxu0 0.0
    %3658 = vmatprep.subr.mxu0 0.0
    %3659 = vmatpush1.msra.mxu0 0.0
    %3660 = vmatprep.subr.mxu0 0.0
    %3661 = vmatpush1.msra.mxu0 0.0
    %3662 = vmatprep.subr.mxu0 0.0
    %3663 = vmatpush1.msra.mxu0 0.0
    %3664 = vmatprep.subr.mxu0 0.0
    %3665 = vmatpush1.msra.mxu0 0.0
    %3666 = vmatprep.subr.mxu0 0.0
    %3667 = vmatpush1.msra.mxu0 0.0
    %3668 = vmatprep.subr.mxu0 0.0
    %3669 = vmatpush1.msra.mxu0 0.0
    %3670 = vmatprep.subr.mxu0 0.0
    %3671 = vmatpush1.msra.mxu0 0.0
    %3672 = vmatprep.subr.mxu0 0.0
    %3673 = vmatpush1.msra.mxu0 0.0
    %3674 = vmatprep.subr.mxu0 0.0
    %3675 = vmatpush1.msra.mxu0 0.0
    %3676 = vmatprep.subr.mxu0 0.0
    %3677 = vmatpush1.msra.mxu0 0.0
    %3678 = vmatprep.subr.mxu0 0.0
    %3679 = vmatpush1.msra.mxu0 0.0
    %3680 = vmatprep.subr.mxu0 0.0
    %3681 = vmatpush1.msra.mxu0 0.0
    %3682 = vmatprep.subr.mxu0 0.0
    %3683 = vmatpush1.msra.mxu0 0.0
    %3684 = vmatprep.subr.mxu0 0.0
    %3685 = vmatpush1.msra.mxu0 0.0
    %3686 = vmatprep.subr.mxu0 0.0
    %3687 = vmatpush1.msra.mxu0 0.0
    %3688 = vmatprep.subr.mxu0 0.0
    %3689 = vmatpush1.msra.mxu0 0.0
    %3690 = vmatprep.subr.mxu0 0.0
    %3691 = vmatpush1.msra.mxu0 0.0
    %3692 = vmatprep.subr.mxu0 0.0
    %3693 = vmatpush1.msra.mxu0 0.0
    %3694 = vmatprep.subr.mxu0 0.0
    %3695 = vmatpush1.msra.mxu0 0.0
    %3696 = vmatprep.subr.mxu0 0.0
    %3697 = vmatpush1.msra.mxu0 0.0
    %3698 = vmatprep.subr.mxu0 0.0
    %3699 = vmatpush1.msra.mxu0 0.0
    %3700 = vmatprep.subr.mxu0 0.0
    %3701 = vmatpush1.msra.mxu0 0.0
    %3702 = vmatprep.subr.mxu0 0.0
    %3703 = vmatpush1.msra.mxu0 0.0
    %3704 = vmatprep.subr.mxu0 0.0
    %3705 = vmatpush1.msra.mxu0 0.0
    %3706 = vmatprep.subr.mxu0 0.0
    %3707 = vmatpush1.msra.mxu0 0.0
    %3708 = vmatprep.subr.mxu0 0.0
    %3709 = vmatpush1.msra.mxu0 0.0
    %3710 = vmatprep.mubr.f32.mxu0 0.0
    %3711 = vmatmul.mubr.f32.gmra.mrb[0].mxu0 %v3632
    %v3712 = vpop.f32.mrb[0].mxu0
    %v3713 = vadd.f32 %v3629, %v3712
    %v3714 = vpop.f32.mrb[0].mxu0
    %3715 = vmatprep.mubr.f32.mxu0 0.0
    %3716 = vmatmul.mubr.f32.gmra.mrb[0].mxu0 %v3635
    %v3717 = vpop.f32.mrb[0].mxu0
    %v3718 = vadd.f32 %v3629, %v3717
    %v3719 = vpop.f32.mrb[0].mxu0
    %3720 = vmatprep.mubr.f32.mxu0 0.0
    %3721 = vmatmul.mubr.f32.gmra.mrb[0].mxu0 %v3638
    %v3722 = vpop.f32.mrb[0].mxu0
    %v3723 = vadd.f32 %v3629, %v3722
    %v3724 = vpop.f32.mrb[0].mxu0
    %3725 = vmatprep.mubr.f32.mxu0 0.0
    %3726 = vmatmul.mubr.f32.gmra.mrb[0].mxu0 %v3641
    %v3727 = vpop.f32.mrb[0].mxu0
    %v3728 = vadd.f32 %v3629, %v3727
    %v3729 = vpop.f32.mrb[0].mxu0
    %3730 = vmatprep.mubr.f32.mxu0 0.0
    %3731 = vmatmul.mubr.f32.gmra.mrb[0].mxu0 %v3644
    %v3732 = vpop.f32.mrb[0].mxu0
    %v3733 = vadd.f32 %v3629, %v3732
    %v3734 = vpop.f32.mrb[0].mxu0
    %3735 = vdwg.mxu0
    %v3736 = vmul.f32 %v3713, 0.5
    %v3737 = vmul.f32 %v3718, 0.5
    %v3738 = vmul.f32 %v3723, 0.5
    %v3739 = vmul.f32 %v3728, 0.5
    %v3740 = vmul.f32 %v3733, 0.5
    %v3741 = vmul.f32 %v3713, 0.044715
    %v3742 = vmul.f32 %v3718, 0.044715
    %v3743 = vmul.f32 %v3723, 0.044715
    %v3744 = vmul.f32 %v3728, 0.044715
    %v3745 = vmul.f32 %v3733, 0.044715
    %v3746 = vmul.f32 %v3741, %v3713
    %v3747 = vmul.f32 %v3742, %v3718
    %v3748 = vmul.f32 %v3743, %v3723
    %v3749 = vmul.f32 %v3744, %v3728
    %v3750 = vmul.f32 %v3745, %v3733
    %v3751 = vmul.f32 %v3746, %v3713
    %v3752 = vmul.f32 %v3747, %v3718
    %v3753 = vmul.f32 %v3748, %v3723
    %v3754 = vmul.f32 %v3749, %v3728
    %v3755 = vmul.f32 %v3750, %v3733
    %v3756 = vadd.f32 %v3713, %v3751
    %v3757 = vadd.f32 %v3718, %v3752
    %v3758 = vadd.f32 %v3723, %v3753
    %v3759 = vadd.f32 %v3728, %v3754
    %v3760 = vadd.f32 %v3733, %v3755
    %v3761 = vmul.f32 %v3756, 0.7978846
    %v3762 = vmul.f32 %v3757, 0.7978846
    %v3763 = vmul.f32 %v3758, 0.7978846
    %v3764 = vmul.f32 %v3759, 0.7978846
    %v3765 = vmul.f32 %v3760, 0.7978846
    %v3766 = vtanh.pop %v3761
    %v3767 = vtanh.pop %v3762
    %v3768 = vtanh.pop %v3763
    %v3769 = vtanh.pop %v3764
    %v3770 = vtanh.pop %v3765
    %v3771 = vadd.f32 %v3766, 1.0
    %v3772 = vadd.f32 %v3767, 1.0
    %v3773 = vadd.f32 %v3768, 1.0
    %v3774 = vadd.f32 %v3769, 1.0
    %v3775 = vadd.f32 %v3770, 1.0
    %v3776 = vmul.f32 %v3736, %v3771
    %v3777 = vmul.f32 %v3737, %v3772
    %v3778 = vmul.f32 %v3738, %v3773
    %v3779 = vmul.f32 %v3739, %v3774
    %v3780 = vmul.f32 %v3740, %v3775
    %s3781 = scalar_lea.vmem %s14, 128
    %v3782 = vld [vmem:[%s3781] sm:$0xff]
    %v3783 = vld [vmem:[%s3781 + $0x8] sm:$0xff]
    %v3784 = vld [vmem:[%s3781 + $0x10] sm:$0xff]
    %v3785 = vld [vmem:[%s3781 + $0x18] sm:$0xff]
    %v3786 = vld [vmem:[%s3781 + $0x20] sm:$0xff]
    %v3787 = vld [vmem:[%s3781 + $0x28] sm:$0xff]
    %v3788 = vld [vmem:[%s3781 + $0x30] sm:$0xff]
    %v3789 = vld [vmem:[%s3781 + $0x38] sm:$0xff]
    %v3790 = vld [vmem:[%s3781 + $0x40] sm:$0xff]
    %v3791 = vld [vmem:[%s3781 + $0x48] sm:$0xff]
    %v3792 = vld [vmem:[%s3781 + $0x50] sm:$0xff]
    %v3793 = vld [vmem:[%s3781 + $0x58] sm:$0xff]
    %v3794 = vld [vmem:[%s3781 + $0x60] sm:$0xff]
    %v3795 = vld [vmem:[%s3781 + $0x68] sm:$0xff]
    %v3796 = vld [vmem:[%s3781 + $0x70] sm:$0xff]
    %v3797 = vld [vmem:[%s3781 + $0x78] sm:$0xff]
    %s3798 = scalar_lea.vmem %s15, 1
    %v3799 = vld [vmem:[%s3798] sm:$0x1]
    %v3801 = vlaneseq
    %v3802 = vshrl.u32 %v3801, 7
    %v3803 = vsub.s32 0, %v3802
    %v3804 = vrot.slane %v3799, %v3803
    %3806 = vmatprep.subr.mxu0 0.0
    %3807 = vmatpush1.msra.mxu0 %v3782
    %3808 = vmatprep.subr.mxu0 0.0
    %3809 = vmatpush1.msra.mxu0 %v3783
    %3810 = vmatprep.subr.mxu0 0.0
    %3811 = vmatpush1.msra.mxu0 %v3784
    %3812 = vmatprep.subr.mxu0 0.0
    %3813 = vmatpush1.msra.mxu0 %v3785
    %3814 = vmatprep.subr.mxu0 0.0
    %3815 = vmatpush1.msra.mxu0 %v3786
    %3816 = vmatprep.subr.mxu0 0.0
    %3817 = vmatpush1.msra.mxu0 %v3787
    %3818 = vmatprep.subr.mxu0 0.0
    %3819 = vmatpush1.msra.mxu0 %v3788
    %3820 = vmatprep.subr.mxu0 0.0
    %3821 = vmatpush1.msra.mxu0 %v3789
    %3822 = vmatprep.subr.mxu0 0.0
    %3823 = vmatpush1.msra.mxu0 %v3790
    %3824 = vmatprep.subr.mxu0 0.0
    %3825 = vmatpush1.msra.mxu0 %v3791
    %3826 = vmatprep.subr.mxu0 0.0
    %3827 = vmatpush1.msra.mxu0 %v3792
    %3828 = vmatprep.subr.mxu0 0.0
    %3829 = vmatpush1.msra.mxu0 %v3793
    %3830 = vmatprep.subr.mxu0 0.0
    %3831 = vmatpush1.msra.mxu0 %v3794
    %3832 = vmatprep.subr.mxu0 0.0
    %3833 = vmatpush1.msra.mxu0 %v3795
    %3834 = vmatprep.subr.mxu0 0.0
    %3835 = vmatpush1.msra.mxu0 %v3796
    %3836 = vmatprep.subr.mxu0 0.0
    %3837 = vmatpush1.msra.mxu0 %v3797
    %3838 = vmatprep.subr.mxu0 0.0
    %3839 = vmatpush1.msra.mxu0 0.0
    %3840 = vmatprep.subr.mxu0 0.0
    %3841 = vmatpush1.msra.mxu0 0.0
    %3842 = vmatprep.subr.mxu0 0.0
    %3843 = vmatpush1.msra.mxu0 0.0
    %3844 = vmatprep.subr.mxu0 0.0
    %3845 = vmatpush1.msra.mxu0 0.0
    %3846 = vmatprep.subr.mxu0 0.0
    %3847 = vmatpush1.msra.mxu0 0.0
    %3848 = vmatprep.subr.mxu0 0.0
    %3849 = vmatpush1.msra.mxu0 0.0
    %3850 = vmatprep.subr.mxu0 0.0
    %3851 = vmatpush1.msra.mxu0 0.0
    %3852 = vmatprep.subr.mxu0 0.0
    %3853 = vmatpush1.msra.mxu0 0.0
    %3854 = vmatprep.subr.mxu0 0.0
    %3855 = vmatpush1.msra.mxu0 0.0
    %3856 = vmatprep.subr.mxu0 0.0
    %3857 = vmatpush1.msra.mxu0 0.0
    %3858 = vmatprep.subr.mxu0 0.0
    %3859 = vmatpush1.msra.mxu0 0.0
    %3860 = vmatprep.subr.mxu0 0.0
    %3861 = vmatpush1.msra.mxu0 0.0
    %3862 = vmatprep.subr.mxu0 0.0
    %3863 = vmatpush1.msra.mxu0 0.0
    %3864 = vmatprep.subr.mxu0 0.0
    %3865 = vmatpush1.msra.mxu0 0.0
    %3866 = vmatprep.subr.mxu0 0.0
    %3867 = vmatpush1.msra.mxu0 0.0
    %3868 = vmatprep.subr.mxu0 0.0
    %3869 = vmatpush1.msra.mxu0 0.0
    %3870 = vmatprep.mubr.f32.mxu0 0.0
    %3871 = vmatmul.mubr.f32.gmra.mrb[0].mxu0 %v3776
    %v3872 = vpop.f32.mrb[0].mxu0
    %v3873 = vadd.f32 %v3804, %v3872
    %v3874 = vpop.f32.mrb[0].mxu0
    %3875 = vmatprep.mubr.f32.mxu0 0.0
    %3876 = vmatmul.mubr.f32.gmra.mrb[0].mxu0 %v3777
    %v3877 = vpop.f32.mrb[0].mxu0
    %v3878 = vadd.f32 %v3804, %v3877
    %v3879 = vpop.f32.mrb[0].mxu0
    %3880 = vmatprep.mubr.f32.mxu0 0.0
    %3881 = vmatmul.mubr.f32.gmra.mrb[0].mxu0 %v3778
    %v3882 = vpop.f32.mrb[0].mxu0
    %v3883 = vadd.f32 %v3804, %v3882
    %v3884 = vpop.f32.mrb[0].mxu0
    %3885 = vmatprep.mubr.f32.mxu0 0.0
    %3886 = vmatmul.mubr.f32.gmra.mrb[0].mxu0 %v3779
    %v3887 = vpop.f32.mrb[0].mxu0
    %v3888 = vadd.f32 %v3804, %v3887
    %v3889 = vpop.f32.mrb[0].mxu0
    %3890 = vmatprep.mubr.f32.mxu0 0.0
    %3891 = vmatmul.mubr.f32.gmra.mrb[0].mxu0 %v3780
    %v3892 = vpop.f32.mrb[0].mxu0
    %v3893 = vadd.f32 %v3804, %v3892
    %v3894 = vpop.f32.mrb[0].mxu0
    %3895 = vdwg.mxu0
    %v3896 = vadd.f32 %v3522, %v3873
    %v3897 = vadd.f32 %v3523, %v3878
    %v3898 = vadd.f32 %v3524, %v3883
    %v3899 = vadd.f32 %v3525, %v3888
    %v3900 = vadd.f32 %v3526, %v3893
    %v3901 = vld [vmem:[%s16] sm:$0x3]
    %v3903 = vsel %vm712, %v3901, 0
    %v3906 = vsel %vm784, %v3900, 0
    %3908 = vmatprep.subr.mxu0 0.0
    %3909 = vmatpush1.msra.mxu0 %v3896
    %3910 = vmatprep.subr.mxu0 0.0
    %3911 = vmatpush1.msra.mxu0 %v3897
    %3912 = vmatprep.subr.mxu0 0.0
    %3913 = vmatpush1.msra.mxu0 %v3898
    %3914 = vmatprep.subr.mxu0 0.0
    %3915 = vmatpush1.msra.mxu0 %v3899
    %3916 = vmatprep.subr.mxu0 0.0
    %3917 = vmatpush1.msra.mxu0 %v3906
    %3918 = vmatprep.subr.mxu0 0.0
    %3919 = vmatpush1.msra.mxu0 0.0
    %3920 = vmatprep.subr.mxu0 0.0
    %3921 = vmatpush1.msra.mxu0 0.0
    %3922 = vmatprep.subr.mxu0 0.0
    %3923 = vmatpush1.msra.mxu0 0.0
    %3924 = vmatprep.subr.mxu0 0.0
    %3925 = vmatpush1.msra.mxu0 0.0
    %3926 = vmatprep.subr.mxu0 0.0
    %3927 = vmatpush1.msra.mxu0 0.0
    %3928 = vmatprep.subr.mxu0 0.0
    %3929 = vmatpush1.msra.mxu0 0.0
    %3930 = vmatprep.subr.mxu0 0.0
    %3931 = vmatpush1.msra.mxu0 0.0
    %3932 = vmatprep.subr.mxu0 0.0
    %3933 = vmatpush1.msra.mxu0 0.0
    %3934 = vmatprep.subr.mxu0 0.0
    %3935 = vmatpush1.msra.mxu0 0.0
    %3936 = vmatprep.subr.mxu0 0.0
    %3937 = vmatpush1.msra.mxu0 0.0
    %3938 = vmatprep.subr.mxu0 0.0
    %3939 = vmatpush1.msra.mxu0 0.0
    %3940 = vmatprep.subr.mxu0 0.0
    %3941 = vmatpush1.msra.mxu0 0.0
    %3942 = vmatprep.subr.mxu0 0.0
    %3943 = vmatpush1.msra.mxu0 0.0
    %3944 = vmatprep.subr.mxu0 0.0
    %3945 = vmatpush1.msra.mxu0 0.0
    %3946 = vmatprep.subr.mxu0 0.0
    %3947 = vmatpush1.msra.mxu0 0.0
    %3948 = vmatprep.subr.mxu0 0.0
    %3949 = vmatpush1.msra.mxu0 0.0
    %3950 = vmatprep.subr.mxu0 0.0
    %3951 = vmatpush1.msra.mxu0 0.0
    %3952 = vmatprep.subr.mxu0 0.0
    %3953 = vmatpush1.msra.mxu0 0.0
    %3954 = vmatprep.subr.mxu0 0.0
    %3955 = vmatpush1.msra.mxu0 0.0
    %3956 = vmatprep.subr.mxu0 0.0
    %3957 = vmatpush1.msra.mxu0 0.0
    %3958 = vmatprep.subr.mxu0 0.0
    %3959 = vmatpush1.msra.mxu0 0.0
    %3960 = vmatprep.subr.mxu0 0.0
    %3961 = vmatpush1.msra.mxu0 0.0
    %3962 = vmatprep.subr.mxu0 0.0
    %3963 = vmatpush1.msra.mxu0 0.0
    %3964 = vmatprep.subr.mxu0 0.0
    %3965 = vmatpush1.msra.mxu0 0.0
    %3966 = vmatprep.subr.mxu0 0.0
    %3967 = vmatpush1.msra.mxu0 0.0
    %3968 = vmatprep.subr.mxu0 0.0
    %3969 = vmatpush1.msra.mxu0 0.0
    %3970 = vmatprep.subr.mxu0 0.0
    %3971 = vmatpush1.msra.mxu0 0.0
    %3972 = vmatprep.mubr.f32.mxu0 0.0
    %3973 = vmatmul.mubr.f32.gmra.mrb[0].mxu0 %v3903
    %v3974 = vpop.f32.mrb[0].mxu0
    %v3975 = vadd.f32 0.0, %v3974
    %v3976 = vpop.f32.mrb[0].mxu0
    %3977 = vdwg.mxu0
    %v3978 = vld [vmem:[%s17] sm:$0xff]
    %v3979 = vld [vmem:[%s17 + $0x8] sm:$0xff]
    %v3980 = vld [vmem:[%s17 + $0x10] sm:$0xff]
    %v3981 = vld [vmem:[%s17 + $0x18] sm:$0xff]
    %v3982 = vld [vmem:[%s18] sm:$0x1]
    %v3984 = vlaneseq
    %v3985 = vshrl.u32 %v3984, 7
    %v3986 = vsub.s32 0, %v3985
    %v3987 = vrot.slane %v3982, %v3986
    %v3990 = vsel %vm194, %v3975, 0
    %3992 = vmatprep.subr.mxu0 0.0
    %3993 = vmatpush1.msra.mxu0 %v3978
    %3994 = vmatprep.subr.mxu0 0.0
    %3995 = vmatpush1.msra.mxu0 %v3979
    %3996 = vmatprep.subr.mxu0 0.0
    %3997 = vmatpush1.msra.mxu0 %v3980
    %3998 = vmatprep.subr.mxu0 0.0
    %3999 = vmatpush1.msra.mxu0 %v3981
    %4000 = vmatprep.subr.mxu0 0.0
    %4001 = vmatpush1.msra.mxu0 0.0
    %4002 = vmatprep.subr.mxu0 0.0
    %4003 = vmatpush1.msra.mxu0 0.0
    %4004 = vmatprep.subr.mxu0 0.0
    %4005 = vmatpush1.msra.mxu0 0.0
    %4006 = vmatprep.subr.mxu0 0.0
    %4007 = vmatpush1.msra.mxu0 0.0
    %4008 = vmatprep.subr.mxu0 0.0
    %4009 = vmatpush1.msra.mxu0 0.0
    %4010 = vmatprep.subr.mxu0 0.0
    %4011 = vmatpush1.msra.mxu0 0.0
    %4012 = vmatprep.subr.mxu0 0.0
    %4013 = vmatpush1.msra.mxu0 0.0
    %4014 = vmatprep.subr.mxu0 0.0
    %4015 = vmatpush1.msra.mxu0 0.0
    %4016 = vmatprep.subr.mxu0 0.0
    %4017 = vmatpush1.msra.mxu0 0.0
    %4018 = vmatprep.subr.mxu0 0.0
    %4019 = vmatpush1.msra.mxu0 0.0
    %4020 = vmatprep.subr.mxu0 0.0
    %4021 = vmatpush1.msra.mxu0 0.0
    %4022 = vmatprep.subr.mxu0 0.0
    %4023 = vmatpush1.msra.mxu0 0.0
    %4024 = vmatprep.subr.mxu0 0.0
    %4025 = vmatpush1.msra.mxu0 0.0
    %4026 = vmatprep.subr.mxu0 0.0
    %4027 = vmatpush1.msra.mxu0 0.0
    %4028 = vmatprep.subr.mxu0 0.0
    %4029 = vmatpush1.msra.mxu0 0.0
    %4030 = vmatprep.subr.mxu0 0.0
    %4031 = vmatpush1.msra.mxu0 0.0
    %4032 = vmatprep.subr.mxu0 0.0
    %4033 = vmatpush1.msra.mxu0 0.0
    %4034 = vmatprep.subr.mxu0 0.0
    %4035 = vmatpush1.msra.mxu0 0.0
    %4036 = vmatprep.subr.mxu0 0.0
    %4037 = vmatpush1.msra.mxu0 0.0
    %4038 = vmatprep.subr.mxu0 0.0
    %4039 = vmatpush1.msra.mxu0 0.0
    %4040 = vmatprep.subr.mxu0 0.0
    %4041 = vmatpush1.msra.mxu0 0.0
    %4042 = vmatprep.subr.mxu0 0.0
    %4043 = vmatpush1.msra.mxu0 0.0
    %4044 = vmatprep.subr.mxu0 0.0
    %4045 = vmatpush1.msra.mxu0 0.0
    %4046 = vmatprep.subr.mxu0 0.0
    %4047 = vmatpush1.msra.mxu0 0.0
    %4048 = vmatprep.subr.mxu0 0.0
    %4049 = vmatpush1.msra.mxu0 0.0
    %4050 = vmatprep.subr.mxu0 0.0
    %4051 = vmatpush1.msra.mxu0 0.0
    %4052 = vmatprep.subr.mxu0 0.0
    %4053 = vmatpush1.msra.mxu0 0.0
    %4054 = vmatprep.subr.mxu0 0.0
    %4055 = vmatpush1.msra.mxu0 0.0
    %4056 = vmatprep.mubr.f32.mxu0 0.0
    %4057 = vmatmul.mubr.f32.gmra.mrb[0].mxu0 %v3990
    %v4058 = vpop.f32.mrb[0].mxu0
    %v4059 = vadd.f32 %v3987, %v4058
    %v4060 = vpop.f32.mrb[0].mxu0
    %4061 = vdwg.mxu0
    %v4062 = vsel %vm784, %v4059, -inf
    %4063 = vmax.xlane.f32.xlu0 %v4062
    %v4064 = vpop.xlane.xlu0 %4063
    %v4065 = vsub.f32 %v4059, %v4064
    %v4066 = vmul.f32 %v4065, 1.442695
    %v4067 = vpow.pop %v4066
    %v4068 = vsel %vm784, %v4067, 0.0
    %4069 = vadd.xlane.f32.xlu0 %v4068
    %v4070 = vpop.xlane.xlu0 %4069
    %v4071 = vrcp.pop %v4070
    %v4072 = vmul.f32 %v4067, %v4071
    %4073 = vst [vmem:[#allocation2] sm:$0x3] %v4072
    // Predicated region
    $region78: #{vit_forward.1} parent=1 // pred_check
      _
    $region79: #{vit_forward.1} parent=1 // pred_check_branch
      %4075 = sbr.rel (0) target = $region81
    $region80: #{vit_forward.1} parent=1 // pred_region
      %s4077 = ssub.s32 32, 32
      %4078 = vsyncadd [#allocation3], %s4077
      %s4080 = sshll.u32 [#allocation2], 4
      %s4081 = int_to_ptr.vmem [resolvable:$true] %s4080
      %4083 = dma.vmem_to_hbm [thread:$0]  %s4081, 32, %s19, [#allocation3]
    $region81: #{vit_forward.1} parent=1 // pred_fallthru
      _
    // Predicated region
    $region82: #{vit_forward.1} parent=1 // pred_check
      _
    $region83: #{vit_forward.1} parent=1 // pred_check_branch
      %4085 = sbr.rel (0) target = $region85
    $region84: #{vit_forward.1} parent=1 // pred_region
      %4086 = dma.done [#allocation3], 32
    $region85: #{vit_forward.1} parent=1 // pred_fallthru
      _
    %4087 = vsyncpa [#allocation3], 1

</llo_original>
